<compile_context>
chip_gen: v7x
topology: tpu7x:2x2x1
jax: 0.10.0
libtpu: 0.0.40
codegen_flags: <defaults>
</compile_context>

<pallas_src>
import functools

import jax
import jax.numpy as jnp
from jax import lax
from jax.experimental import pallas as pl
from jax.experimental.pallas import tpu as pltpu

N_MAX_PARTS = 7
IN_CHANNELS = 3
C1, C2, C3, CH = 64, 128, 128, 128          # backbone / head hidden widths
HEAD_USED = 4 * N_MAX_PARTS + 3             # 21 (nocs) + 7 (seg) + 3 (gocs) = 31
HEAD_PAD = 32                               # fused head output padded to 32 lanes
VMEM_LIMIT = 32 * 1024 * 1024


# --------------------------------------------------------------------------
# shared backbone body (traced into both kernels)
# --------------------------------------------------------------------------
def _backbone_feat(x, w1_ref, wb_ref, bias_ref):
    """x: [T, 3] f32  ->  per-point feature [T, 128] f32."""
    # layer 1 (K = 3): VPU broadcast-FMAs -- a [T,3]@[3,128] matmul would waste
    # >97% of the MXU contraction dimension.
    h = bias_ref[0:1, :]                                   # [1, 128]
    for c in range(IN_CHANNELS):
        h = h + x[:, c:c + 1] * w1_ref[c:c + 1, :]         # [T, 128]
    h = jnp.maximum(h, 0.0)

    # layers 2 / 3: bf16 MXU matmuls with f32 accumulation.
    h = jnp.dot(h.astype(jnp.bfloat16), wb_ref[0],
                preferred_element_type=jnp.float32)
    h = jnp.maximum(h + bias_ref[1:2, :], 0.0)
    h = jnp.dot(h.astype(jnp.bfloat16), wb_ref[1],
                preferred_element_type=jnp.float32)
    feat = jnp.maximum(h + bias_ref[2:3, :], 0.0)          # [T, 128]
    return feat


# --------------------------------------------------------------------------
# pass 1: backbone + running global max-pool
# --------------------------------------------------------------------------
def encode_kernel(x_ref, w1_ref, wb_ref, bias_ref, enc_ref):
    feat = _backbone_feat(x_ref[0], w1_ref, wb_ref, bias_ref)
    tile_max = jnp.max(feat, axis=0, keepdims=True)        # [1, 128]

    @pl.when(pl.program_id(1) == 0)
    def _():
        enc_ref[0] = jnp.full((1, C3), -jnp.inf, jnp.float32)

    enc_ref[0] = jnp.maximum(enc_ref[0], tile_max)


# --------------------------------------------------------------------------
# pass 2: recompute backbone per tile + fused estimation head
# --------------------------------------------------------------------------
def head_kernel(x_ref, enc_ref, w1_ref, wb_ref, wh_ref, whead_ref,
                bias_ref, bhead_ref, out_ref):
    feat = _backbone_feat(x_ref[0], w1_ref, wb_ref, bias_ref)   # [T, 128]
    enc = enc_ref[0]                                            # [1, 128]

    # concat(feat, enc) @ W  ==  feat @ W_f + enc @ W_e  (avoids in-kernel concat)
    hh = jnp.dot(feat.astype(jnp.bfloat16), wh_ref[0],
                 preferred_element_type=jnp.float32)
    hh = hh + jnp.dot(enc.astype(jnp.bfloat16), wh_ref[1],
                      preferred_element_type=jnp.float32)
    hh = jnp.maximum(hh + bias_ref[3:4, :], 0.0)                # [T, 128]

    # single fused output matmul: [nocs | seg | gocs | pad] -> 32 lanes
    raw = jnp.dot(hh.astype(jnp.bfloat16), whead_ref[...],
                  preferred_element_type=jnp.float32) + bhead_ref[...]   # [T, 32]

    col = lax.broadcasted_iota(jnp.int32, raw.shape, 1)
    is_seg = jnp.logical_and(col >= 3 * N_MAX_PARTS, col < 4 * N_MAX_PARTS)

    # masked softmax over the 7 segmentation columns (no lane slicing in-kernel).
    # Exact divide on the [T,1] denominator: approx reciprocal error broke the
    # sum-to-1 property of the softmax rows, and the divide is negligible VPU
    # work next to the MXU passes.
    seg_logits = jnp.where(is_seg, raw, jnp.float32(-1e30))
    m = jnp.max(seg_logits, axis=-1, keepdims=True)
    e = jnp.where(is_seg, jnp.exp(raw - m), 0.0)
    denom = jnp.sum(e, axis=-1, keepdims=True)
    seg = e / denom

    sig = jax.nn.sigmoid(raw)                                   # nocs / gocs cols
    out_ref[0] = jnp.where(is_seg, seg, sig)


# --------------------------------------------------------------------------
# parameters
# --------------------------------------------------------------------------
def init_params(key):
    """Deterministic Glorot-ish init for all dense layers (logical f32 params)."""
    def dense(k, cin, cout):
        kw, kb = jax.random.split(k)
        w = jax.random.normal(kw, (cin, cout), jnp.float32) * (1.0 / jnp.sqrt(cin))
        b = jax.random.normal(kb, (1, cout), jnp.float32) * 0.1
        return w, b

    ks = jax.random.split(key, 8)
    w1, b1 = dense(ks[0], IN_CHANNELS, C1)
    w2, b2 = dense(ks[1], C1, C2)
    w3, b3 = dense(ks[2], C2, C3)
    whf, bh = dense(ks[3], C3, CH)
    whe, _ = dense(ks[4], C3, CH)
    wn, bn = dense(ks[5], CH, 3 * N_MAX_PARTS)
    ws, bs = dense(ks[6], CH, N_MAX_PARTS)
    wg, bg = dense(ks[7], CH, 3)
    return (w1, b1, w2, b2, w3, b3, whf, whe, bh, wn, bn, ws, bs, wg, bg)


def pack_params(params):
    """Pack the 15 logical params into a few lane-dense blobs (bf16 MXU weights)."""
    (w1, b1, w2, b2, w3, b3, whf, whe, bh, wn, bn, ws, bs, wg, bg) = params
    f32, bf16 = jnp.float32, jnp.bfloat16

    # layer 1 padded 64 -> 128 output channels (zeros); kept f32 (VPU layer)
    w1p = jnp.zeros((IN_CHANNELS, C2), f32).at[:, :C1].set(w1)       # [3, 128]
    b1p = jnp.zeros((C2,), f32).at[:C1].set(b1[0])

    # backbone MXU weights stacked (w2 zero-padded on its 64-wide input dim)
    w2p = jnp.zeros((C2, C2), f32).at[:C1, :].set(w2)
    wb = jnp.stack([w2p, w3]).astype(bf16)                           # [2, 128, 128]

    # head fuse weights: per-point half / global half (concat-as-sum)
    wh = jnp.stack([whf, whe]).astype(bf16)                          # [2, 128, 128]

    # all 128-wide biases in one f32 blob: [b1 | b2 | b3 | bh]
    bias = jnp.stack([b1p, b2[0], b3[0], bh[0]])                     # [4, 128]

    # fused output head: [nocs | seg | gocs | pad] -> 32 lanes
    w_head = jnp.zeros((CH, HEAD_PAD), f32)
    w_head = w_head.at[:, : 3 * N_MAX_PARTS].set(wn)
    w_head = w_head.at[:, 3 * N_MAX_PARTS: 4 * N_MAX_PARTS].set(ws)
    w_head = w_head.at[:, 4 * N_MAX_PARTS: HEAD_USED].set(wg)
    b_head = jnp.zeros((1, HEAD_PAD), f32)
    b_head = b_head.at[:, : 3 * N_MAX_PARTS].set(bn)
    b_head = b_head.at[:, 3 * N_MAX_PARTS: 4 * N_MAX_PARTS].set(bs)
    b_head = b_head.at[:, 4 * N_MAX_PARTS: HEAD_USED].set(bg)
    return w1p, wb, wh, w_head.astype(bf16), bias, b_head


# --------------------------------------------------------------------------
# wrapper
# --------------------------------------------------------------------------
@functools.partial(jax.jit, static_argnames=("tile_n",))
def articulation_estimator(P, params, tile_n=2048):
    """P: [B, N, 3] point cloud (channels-last).  Returns pred_dict."""
    B, N, Cin = P.shape
    assert Cin == IN_CHANNELS
    tile_n = min(tile_n, N)
    assert N % tile_n == 0 and tile_n % 8 == 0
    nt = N // tile_n

    w1p, wb, wh, w_head, bias, b_head = pack_params(params)

    # ---- pass 1: global max-pooled feature (feat_encode) --------------------
    enc = pl.pallas_call(
        encode_kernel,
        out_shape=jax.ShapeDtypeStruct((B, 1, C3), jnp.float32),
        grid_spec=pltpu.PrefetchScalarGridSpec(
            num_scalar_prefetch=0,
            grid=(B, nt),
            in_specs=[
                pl.BlockSpec((1, tile_n, IN_CHANNELS), lambda b, n: (b, n, 0)),
                pl.BlockSpec(w1p.shape, lambda b, n: (0, 0)),
                pl.BlockSpec(wb.shape, lambda b, n: (0, 0, 0)),
                pl.BlockSpec(bias.shape, lambda b, n: (0, 0)),
            ],
            out_specs=pl.BlockSpec((1, 1, C3), lambda b, n: (b, 0, 0)),
        ),
        compiler_params=pltpu.CompilerParams(
            dimension_semantics=("parallel", "arbitrary"),
            vmem_limit_bytes=VMEM_LIMIT),
    )(P, w1p, wb, bias)

    # ---- pass 2: per-point head, single fused lane-packed output slab -------
    slab = pl.pallas_call(
        head_kernel,
        out_shape=jax.ShapeDtypeStruct((B, N, HEAD_PAD), jnp.float32),
        grid_spec=pltpu.PrefetchScalarGridSpec(
            num_scalar_prefetch=0,
            grid=(B, nt),
            in_specs=[
                pl.BlockSpec((1, tile_n, IN_CHANNELS), lambda b, n: (b, n, 0)),
                pl.BlockSpec((1, 1, C3), lambda b, n: (b, 0, 0)),
                pl.BlockSpec(w1p.shape, lambda b, n: (0, 0)),
                pl.BlockSpec(wb.shape, lambda b, n: (0, 0, 0)),
                pl.BlockSpec(wh.shape, lambda b, n: (0, 0, 0)),
                pl.BlockSpec(w_head.shape, lambda b, n: (0, 0)),
                pl.BlockSpec(bias.shape, lambda b, n: (0, 0)),
                pl.BlockSpec(b_head.shape, lambda b, n: (0, 0)),
            ],
            out_specs=pl.BlockSpec((1, tile_n, HEAD_PAD), lambda b, n: (b, n, 0)),
        ),
        compiler_params=pltpu.CompilerParams(
            dimension_semantics=("parallel", "parallel"),
            vmem_limit_bytes=VMEM_LIMIT),
    )(P, enc, w1p, wb, wh, w_head, bias, b_head)

    return {
        "nocs_per_point": slab[..., : 3 * N_MAX_PARTS],              # [B,N,21] in [0,1]
        "seg_per_point": slab[..., 3 * N_MAX_PARTS: 4 * N_MAX_PARTS],  # [B,N,7] softmax
        "gocs_per_point": slab[..., 4 * N_MAX_PARTS: HEAD_USED],     # [B,N,3] in [0,1]
        "feat_encode": enc[:, 0, :],                                 # [B,128] global feature
    }


# --------------------------------------------------------------------------
# pure-JAX reference (mirrors the kernel's bf16 matmul quantization)
# --------------------------------------------------------------------------
def reference(P, params):
    w1p, wb, wh, w_head, bias, b_head = pack_params(params)
    bf16, f32 = jnp.bfloat16, jnp.float32

    h = jax.nn.relu(P @ w1p + bias[0])
    h = jax.nn.relu(jnp.matmul(h.astype(bf16), wb[0],
                               preferred_element_type=f32) + bias[1])
    feat = jax.nn.relu(jnp.matmul(h.astype(bf16), wb[1],
                                  preferred_element_type=f32) + bias[2])
    enc = jnp.max(feat, axis=1, keepdims=True)
    hh = jax.nn.relu(
        jnp.matmul(feat.astype(bf16), wh[0], preferred_element_type=f32)
        + jnp.matmul(enc.astype(bf16), wh[1], preferred_element_type=f32)
        + bias[3])
    raw = jnp.matmul(hh.astype(bf16), w_head, preferred_element_type=f32) + b_head
    nocs = jax.nn.sigmoid(raw[..., : 3 * N_MAX_PARTS])
    seg = jax.nn.softmax(raw[..., 3 * N_MAX_PARTS: 4 * N_MAX_PARTS], axis=-1)
    gocs = jax.nn.sigmoid(raw[..., 4 * N_MAX_PARTS: HEAD_USED])
    return nocs, seg, gocs, enc[:, 0, :]


if __name__ == "__main__":
    key = jax.random.PRNGKey(0)
    kp, kx = jax.random.split(key)

    params = init_params(kp)

    B, N = 2, 1024                                # small synthetic point cloud
    P = jax.random.uniform(kx, (B, N, IN_CHANNELS), jnp.float32)   # 'pts' input

    pred = articulation_estimator(P, params, tile_n=256)   # grid = (2, 4)
    jax.block_until_ready(pred)

    ref_nocs, ref_seg, ref_gocs, ref_enc = reference(P, params)
    assert jnp.allclose(pred["nocs_per_point"], ref_nocs, rtol=1e-2, atol=1e-2)
    assert jnp.allclose(pred["seg_per_point"], ref_seg, rtol=1e-2, atol=1e-2)
    assert jnp.allclose(pred["gocs_per_point"], ref_gocs, rtol=1e-2, atol=1e-2)
    assert jnp.allclose(pred["feat_encode"], ref_enc, rtol=1e-2, atol=1e-2)
    # segmentation rows form a proper distribution (exact divide in-kernel)
    assert jnp.allclose(pred["seg_per_point"].sum(-1), 1.0, atol=1e-3)

    print("KERNEL_OK")
</pallas_src>

<mosaic_0001>
module attributes {stable_mosaic.version = 11 : i64} {
  func.func @encode_kernel(%arg0: i32, %arg1: i32, %arg2: memref<1x256x3xf32, #tpu.memory_space<vmem>>, %arg3: memref<3x128xf32, #tpu.memory_space<vmem>>, %arg4: memref<2x128x128xbf16, #tpu.memory_space<vmem>>, %arg5: memref<4x128xf32, #tpu.memory_space<vmem>>, %arg6: memref<1x1x128xf32, #tpu.memory_space<vmem>>) attributes {dimension_semantics = [#tpu.dimension_semantics<parallel>, #tpu.dimension_semantics<arbitrary>], iteration_bounds = array<i64: 2, 4>, scalar_prefetch = 0 : i64, scratch_operands = 0 : i64, tpu.core_type = #tpu.core_type<tc>, window_params = [{transform_indices = @transform_0, window_bounds = array<i64: 1, 256, 3>}, {pipeline_mode = #tpu.pipeline_mode<synchronous>, transform_indices = @transform_1, window_bounds = array<i64: 3, 128>}, {pipeline_mode = #tpu.pipeline_mode<synchronous>, transform_indices = @transform_2, window_bounds = array<i64: 2, 128, 128>}, {pipeline_mode = #tpu.pipeline_mode<synchronous>, transform_indices = @transform_3, window_bounds = array<i64: 4, 128>}, {transform_indices = @transform_4, window_bounds = array<i64: 1, 1, 128>}]} {
    %c0 = arith.constant 0 : index
    %c0_0 = arith.constant 0 : index
    %c0_1 = arith.constant 0 : index
    %0 = vector.load %arg2[%c0, %c0_0, %c0_1] : memref<1x256x3xf32, #tpu.memory_space<vmem>>, vector<1x256x3xf32>
    %1 = vector.shape_cast %0 : vector<1x256x3xf32> to vector<256x3xf32>
    %c0_2 = arith.constant 0 : index
    %c0_3 = arith.constant 0 : index
    %2 = vector.load %arg5[%c0_2, %c0_3] : memref<4x128xf32, #tpu.memory_space<vmem>>, vector<1x128xf32>
    %3 = vector.extract_strided_slice %1 {offsets = [0, 0], sizes = [256, 1], strides = [1, 1]} : vector<256x3xf32> to vector<256x1xf32>
    %c0_4 = arith.constant 0 : index
    %c0_5 = arith.constant 0 : index
    %4 = vector.load %arg3[%c0_4, %c0_5] : memref<3x128xf32, #tpu.memory_space<vmem>>, vector<1x128xf32>
    %5 = vector.broadcast %3 : vector<256x1xf32> to vector<256x128xf32>
    %6 = vector.broadcast %4 : vector<1x128xf32> to vector<256x128xf32>
    %7 = arith.mulf %5, %6 : vector<256x128xf32>
    %8 = vector.broadcast %2 : vector<1x128xf32> to vector<256x128xf32>
    %9 = arith.addf %8, %7 : vector<256x128xf32>
    %10 = vector.extract_strided_slice %1 {offsets = [0, 1], sizes = [256, 1], strides = [1, 1]} : vector<256x3xf32> to vector<256x1xf32>
    %c1 = arith.constant 1 : index
    %c0_6 = arith.constant 0 : index
    %11 = vector.load %arg3[%c1, %c0_6] : memref<3x128xf32, #tpu.memory_space<vmem>>, vector<1x128xf32>
    %12 = vector.broadcast %10 : vector<256x1xf32> to vector<256x128xf32>
    %13 = vector.broadcast %11 : vector<1x128xf32> to vector<256x128xf32>
    %14 = arith.mulf %12, %13 : vector<256x128xf32>
    %15 = arith.addf %9, %14 : vector<256x128xf32>
    %16 = vector.extract_strided_slice %1 {offsets = [0, 2], sizes = [256, 1], strides = [1, 1]} : vector<256x3xf32> to vector<256x1xf32>
    %c2 = arith.constant 2 : index
    %c0_7 = arith.constant 0 : index
    %17 = vector.load %arg3[%c2, %c0_7] : memref<3x128xf32, #tpu.memory_space<vmem>>, vector<1x128xf32>
    %18 = vector.broadcast %16 : vector<256x1xf32> to vector<256x128xf32>
    %19 = vector.broadcast %17 : vector<1x128xf32> to vector<256x128xf32>
    %20 = arith.mulf %18, %19 : vector<256x128xf32>
    %21 = arith.addf %15, %20 : vector<256x128xf32>
    %cst = arith.constant 0.000000e+00 : f32
    %22 = vector.broadcast %cst : f32 to vector<256x128xf32>
    %23 = arith.maximumf %21, %22 : vector<256x128xf32>
    %24 = arith.truncf %23 : vector<256x128xf32> to vector<256x128xbf16>
    %c0_8 = arith.constant 0 : index
    %c0_9 = arith.constant 0 : index
    %c0_10 = arith.constant 0 : index
    %25 = vector.load %arg4[%c0_8, %c0_9, %c0_10] : memref<2x128x128xbf16, #tpu.memory_space<vmem>>, vector<1x128x128xbf16>
    %26 = vector.shape_cast %25 : vector<1x128x128xbf16> to vector<128x128xbf16>
    %cst_11 = arith.constant dense<0.000000e+00> : vector<256x128xf32>
    %27 = tpu.matmul %24, %26, %cst_11 {dimension_numbers = #tpu.dot_dimension_numbers<[1], [0], [0], [1], [0, 0, 1, 1], [], []>} : vector<256x128xbf16>, vector<128x128xbf16>, vector<256x128xf32> -> vector<256x128xf32>
    %c1_12 = arith.constant 1 : index
    %c0_13 = arith.constant 0 : index
    %28 = vector.load %arg5[%c1_12, %c0_13] : memref<4x128xf32, #tpu.memory_space<vmem>>, vector<1x128xf32>
    %29 = vector.broadcast %28 : vector<1x128xf32> to vector<256x128xf32>
    %30 = arith.addf %27, %29 : vector<256x128xf32>
    %cst_14 = arith.constant 0.000000e+00 : f32
    %31 = vector.broadcast %cst_14 : f32 to vector<256x128xf32>
    %32 = arith.maximumf %30, %31 : vector<256x128xf32>
    %33 = arith.truncf %32 : vector<256x128xf32> to vector<256x128xbf16>
    %c1_15 = arith.constant 1 : index
    %c0_16 = arith.constant 0 : index
    %c0_17 = arith.constant 0 : index
    %34 = vector.load %arg4[%c1_15, %c0_16, %c0_17] : memref<2x128x128xbf16, #tpu.memory_space<vmem>>, vector<1x128x128xbf16>
    %35 = vector.shape_cast %34 : vector<1x128x128xbf16> to vector<128x128xbf16>
    %cst_18 = arith.constant dense<0.000000e+00> : vector<256x128xf32>
    %36 = tpu.matmul %33, %35, %cst_18 {dimension_numbers = #tpu.dot_dimension_numbers<[1], [0], [0], [1], [0, 0, 1, 1], [], []>} : vector<256x128xbf16>, vector<128x128xbf16>, vector<256x128xf32> -> vector<256x128xf32>
    %c2_19 = arith.constant 2 : index
    %c0_20 = arith.constant 0 : index
    %37 = vector.load %arg5[%c2_19, %c0_20] : memref<4x128xf32, #tpu.memory_space<vmem>>, vector<1x128xf32>
    %38 = vector.broadcast %37 : vector<1x128xf32> to vector<256x128xf32>
    %39 = arith.addf %36, %38 : vector<256x128xf32>
    %cst_21 = arith.constant 0.000000e+00 : f32
    %40 = vector.broadcast %cst_21 : f32 to vector<256x128xf32>
    %41 = arith.maximumf %39, %40 : vector<256x128xf32>
    %cst_22 = arith.constant dense<0xFF800000> : vector<128xf32>
    %42 = vector.multi_reduction <maximumf>, %41, %cst_22 [0] : vector<256x128xf32> to vector<128xf32>
    %43 = vector.shape_cast %42 : vector<128xf32> to vector<1x128xf32>
    %c0_i32 = arith.constant 0 : i32
    %44 = arith.cmpi eq, %arg1, %c0_i32 : i32
    %45 = arith.extui %44 : i1 to i32
    %c0_i32_23 = arith.constant 0 : i32
    %46 = arith.cmpi ne, %45, %c0_i32_23 : i32
    scf.if %46 {
      %cst_30 = arith.constant 0xFF800000 : f32
      %53 = vector.broadcast %cst_30 : f32 to vector<1x128xf32>
      %c0_31 = arith.constant 0 : index
      %c0_32 = arith.constant 0 : index
      %c0_33 = arith.constant 0 : index
      %54 = vector.load %arg6[%c0_31, %c0_32, %c0_33] : memref<1x1x128xf32, #tpu.memory_space<vmem>>, vector<1x1x128xf32>
      %55 = vector.shape_cast %54 : vector<1x1x128xf32> to vector<1x128xf32>
      %56 = vector.shape_cast %53 : vector<1x128xf32> to vector<1x1x128xf32>
      tpu.vector_store %arg6[%c0_31, %c0_32, %c0_33], %56 {strides = array<i32>} : memref<1x1x128xf32, #tpu.memory_space<vmem>>, vector<1x1x128xf32>,
    } else {
    }
    %c0_24 = arith.constant 0 : index
    %c0_25 = arith.constant 0 : index
    %c0_26 = arith.constant 0 : index
    %47 = vector.load %arg6[%c0_24, %c0_25, %c0_26] : memref<1x1x128xf32, #tpu.memory_space<vmem>>, vector<1x1x128xf32>
    %48 = vector.shape_cast %47 : vector<1x1x128xf32> to vector<1x128xf32>
    %49 = arith.maximumf %48, %43 : vector<1x128xf32>
    %c0_27 = arith.constant 0 : index
    %c0_28 = arith.constant 0 : index
    %c0_29 = arith.constant 0 : index
    %50 = vector.load %arg6[%c0_27, %c0_28, %c0_29] : memref<1x1x128xf32, #tpu.memory_space<vmem>>, vector<1x1x128xf32>
    %51 = vector.shape_cast %50 : vector<1x1x128xf32> to vector<1x128xf32>
    %52 = vector.shape_cast %49 : vector<1x128xf32> to vector<1x1x128xf32>
    tpu.vector_store %arg6[%c0_27, %c0_28, %c0_29], %52 {strides = array<i32>} : memref<1x1x128xf32, #tpu.memory_space<vmem>>, vector<1x1x128xf32>,
    return
  }
  func.func @transform_0(%arg0: i32, %arg1: i32) -> (i32, i32, i32) {
    %c0_i32 = arith.constant 0 : i32
    %c0_i32_0 = arith.constant 0 : i32
    return %arg0, %arg1, %c0_i32 : i32, i32, i32
  }
  func.func @transform_1(%arg0: i32, %arg1: i32) -> (i32, i32) {
    %c0_i32 = arith.constant 0 : i32
    %c0_i32_0 = arith.constant 0 : i32
    %c0_i32_1 = arith.constant 0 : i32
    return %c0_i32, %c0_i32_0 : i32, i32
  }
  func.func @transform_2(%arg0: i32, %arg1: i32) -> (i32, i32, i32) {
    %c0_i32 = arith.constant 0 : i32
    %c0_i32_0 = arith.constant 0 : i32
    %c0_i32_1 = arith.constant 0 : i32
    %c0_i32_2 = arith.constant 0 : i32
    return %c0_i32, %c0_i32_0, %c0_i32_1 : i32, i32, i32
  }
  func.func @transform_3(%arg0: i32, %arg1: i32) -> (i32, i32) {
    %c0_i32 = arith.constant 0 : i32
    %c0_i32_0 = arith.constant 0 : i32
    %c0_i32_1 = arith.constant 0 : i32
    return %c0_i32, %c0_i32_0 : i32, i32
  }
  func.func @transform_4(%arg0: i32, %arg1: i32) -> (i32, i32, i32) {
    %c0_i32 = arith.constant 0 : i32
    %c0_i32_0 = arith.constant 0 : i32
    %c0_i32_1 = arith.constant 0 : i32
    return %arg0, %c0_i32, %c0_i32_0 : i32, i32, i32
  }
}

module attributes {stable_mosaic.version = 11 : i64} {
  func.func @head_kernel(%arg0: i32, %arg1: i32, %arg2: memref<1x256x3xf32, #tpu.memory_space<vmem>>, %arg3: memref<1x1x128xf32, #tpu.memory_space<vmem>>, %arg4: memref<3x128xf32, #tpu.memory_space<vmem>>, %arg5: memref<2x128x128xbf16, #tpu.memory_space<vmem>>, %arg6: memref<2x128x128xbf16, #tpu.memory_space<vmem>>, %arg7: memref<128x32xbf16, #tpu.memory_space<vmem>>, %arg8: memref<4x128xf32, #tpu.memory_space<vmem>>, %arg9: memref<1x32xf32, #tpu.memory_space<vmem>>, %arg10: memref<1x256x32xf32, #tpu.memory_space<vmem>>) attributes {dimension_semantics = [#tpu.dimension_semantics<parallel>, #tpu.dimension_semantics<parallel>], iteration_bounds = array<i64: 2, 4>, scalar_prefetch = 0 : i64, scratch_operands = 0 : i64, tpu.core_type = #tpu.core_type<tc>, window_params = [{transform_indices = @transform_0, window_bounds = array<i64: 1, 256, 3>}, {transform_indices = @transform_1, window_bounds = array<i64: 1, 1, 128>}, {pipeline_mode = #tpu.pipeline_mode<synchronous>, transform_indices = @transform_2, window_bounds = array<i64: 3, 128>}, {pipeline_mode = #tpu.pipeline_mode<synchronous>, transform_indices = @transform_3, window_bounds = array<i64: 2, 128, 128>}, {pipeline_mode = #tpu.pipeline_mode<synchronous>, transform_indices = @transform_4, window_bounds = array<i64: 2, 128, 128>}, {pipeline_mode = #tpu.pipeline_mode<synchronous>, transform_indices = @transform_5, window_bounds = array<i64: 128, 32>}, {pipeline_mode = #tpu.pipeline_mode<synchronous>, transform_indices = @transform_6, window_bounds = array<i64: 4, 128>}, {pipeline_mode = #tpu.pipeline_mode<synchronous>, transform_indices = @transform_7, window_bounds = array<i64: 1, 32>}, {transform_indices = @transform_8, window_bounds = array<i64: 1, 256, 32>}]} {
    %c0 = arith.constant 0 : index
    %c0_0 = arith.constant 0 : index
    %c0_1 = arith.constant 0 : index
    %0 = vector.load %arg2[%c0, %c0_0, %c0_1] : memref<1x256x3xf32, #tpu.memory_space<vmem>>, vector<1x256x3xf32>
    %1 = vector.shape_cast %0 : vector<1x256x3xf32> to vector<256x3xf32>
    %c0_2 = arith.constant 0 : index
    %c0_3 = arith.constant 0 : index
    %2 = vector.load %arg8[%c0_2, %c0_3] : memref<4x128xf32, #tpu.memory_space<vmem>>, vector<1x128xf32>
    %3 = vector.extract_strided_slice %1 {offsets = [0, 0], sizes = [256, 1], strides = [1, 1]} : vector<256x3xf32> to vector<256x1xf32>
    %c0_4 = arith.constant 0 : index
    %c0_5 = arith.constant 0 : index
    %4 = vector.load %arg4[%c0_4, %c0_5] : memref<3x128xf32, #tpu.memory_space<vmem>>, vector<1x128xf32>
    %5 = vector.broadcast %3 : vector<256x1xf32> to vector<256x128xf32>
    %6 = vector.broadcast %4 : vector<1x128xf32> to vector<256x128xf32>
    %7 = arith.mulf %5, %6 : vector<256x128xf32>
    %8 = vector.broadcast %2 : vector<1x128xf32> to vector<256x128xf32>
    %9 = arith.addf %8, %7 : vector<256x128xf32>
    %10 = vector.extract_strided_slice %1 {offsets = [0, 1], sizes = [256, 1], strides = [1, 1]} : vector<256x3xf32> to vector<256x1xf32>
    %c1 = arith.constant 1 : index
    %c0_6 = arith.constant 0 : index
    %11 = vector.load %arg4[%c1, %c0_6] : memref<3x128xf32, #tpu.memory_space<vmem>>, vector<1x128xf32>
    %12 = vector.broadcast %10 : vector<256x1xf32> to vector<256x128xf32>
    %13 = vector.broadcast %11 : vector<1x128xf32> to vector<256x128xf32>
    %14 = arith.mulf %12, %13 : vector<256x128xf32>
    %15 = arith.addf %9, %14 : vector<256x128xf32>
    %16 = vector.extract_strided_slice %1 {offsets = [0, 2], sizes = [256, 1], strides = [1, 1]} : vector<256x3xf32> to vector<256x1xf32>
    %c2 = arith.constant 2 : index
    %c0_7 = arith.constant 0 : index
    %17 = vector.load %arg4[%c2, %c0_7] : memref<3x128xf32, #tpu.memory_space<vmem>>, vector<1x128xf32>
    %18 = vector.broadcast %16 : vector<256x1xf32> to vector<256x128xf32>
    %19 = vector.broadcast %17 : vector<1x128xf32> to vector<256x128xf32>
    %20 = arith.mulf %18, %19 : vector<256x128xf32>
    %21 = arith.addf %15, %20 : vector<256x128xf32>
    %cst = arith.constant 0.000000e+00 : f32
    %22 = vector.broadcast %cst : f32 to vector<256x128xf32>
    %23 = arith.maximumf %21, %22 : vector<256x128xf32>
    %24 = arith.truncf %23 : vector<256x128xf32> to vector<256x128xbf16>
    %c0_8 = arith.constant 0 : index
    %c0_9 = arith.constant 0 : index
    %c0_10 = arith.constant 0 : index
    %25 = vector.load %arg5[%c0_8, %c0_9, %c0_10] : memref<2x128x128xbf16, #tpu.memory_space<vmem>>, vector<1x128x128xbf16>
    %26 = vector.shape_cast %25 : vector<1x128x128xbf16> to vector<128x128xbf16>
    %cst_11 = arith.constant dense<0.000000e+00> : vector<256x128xf32>
    %27 = tpu.matmul %24, %26, %cst_11 {dimension_numbers = #tpu.dot_dimension_numbers<[1], [0], [0], [1], [0, 0, 1, 1], [], []>} : vector<256x128xbf16>, vector<128x128xbf16>, vector<256x128xf32> -> vector<256x128xf32>
    %c1_12 = arith.constant 1 : index
    %c0_13 = arith.constant 0 : index
    %28 = vector.load %arg8[%c1_12, %c0_13] : memref<4x128xf32, #tpu.memory_space<vmem>>, vector<1x128xf32>
    %29 = vector.broadcast %28 : vector<1x128xf32> to vector<256x128xf32>
    %30 = arith.addf %27, %29 : vector<256x128xf32>
    %cst_14 = arith.constant 0.000000e+00 : f32
    %31 = vector.broadcast %cst_14 : f32 to vector<256x128xf32>
    %32 = arith.maximumf %30, %31 : vector<256x128xf32>
    %33 = arith.truncf %32 : vector<256x128xf32> to vector<256x128xbf16>
    %c1_15 = arith.constant 1 : index
    %c0_16 = arith.constant 0 : index
    %c0_17 = arith.constant 0 : index
    %34 = vector.load %arg5[%c1_15, %c0_16, %c0_17] : memref<2x128x128xbf16, #tpu.memory_space<vmem>>, vector<1x128x128xbf16>
    %35 = vector.shape_cast %34 : vector<1x128x128xbf16> to vector<128x128xbf16>
    %cst_18 = arith.constant dense<0.000000e+00> : vector<256x128xf32>
    %36 = tpu.matmul %33, %35, %cst_18 {dimension_numbers = #tpu.dot_dimension_numbers<[1], [0], [0], [1], [0, 0, 1, 1], [], []>} : vector<256x128xbf16>, vector<128x128xbf16>, vector<256x128xf32> -> vector<256x128xf32>
    %c2_19 = arith.constant 2 : index
    %c0_20 = arith.constant 0 : index
    %37 = vector.load %arg8[%c2_19, %c0_20] : memref<4x128xf32, #tpu.memory_space<vmem>>, vector<1x128xf32>
    %38 = vector.broadcast %37 : vector<1x128xf32> to vector<256x128xf32>
    %39 = arith.addf %36, %38 : vector<256x128xf32>
    %cst_21 = arith.constant 0.000000e+00 : f32
    %40 = vector.broadcast %cst_21 : f32 to vector<256x128xf32>
    %41 = arith.maximumf %39, %40 : vector<256x128xf32>
    %c0_22 = arith.constant 0 : index
    %c0_23 = arith.constant 0 : index
    %c0_24 = arith.constant 0 : index
    %42 = vector.load %arg3[%c0_22, %c0_23, %c0_24] : memref<1x1x128xf32, #tpu.memory_space<vmem>>, vector<1x1x128xf32>
    %43 = vector.shape_cast %42 : vector<1x1x128xf32> to vector<1x128xf32>
    %44 = arith.truncf %41 : vector<256x128xf32> to vector<256x128xbf16>
    %c0_25 = arith.constant 0 : index
    %c0_26 = arith.constant 0 : index
    %c0_27 = arith.constant 0 : index
    %45 = vector.load %arg6[%c0_25, %c0_26, %c0_27] : memref<2x128x128xbf16, #tpu.memory_space<vmem>>, vector<1x128x128xbf16>
    %46 = vector.shape_cast %45 : vector<1x128x128xbf16> to vector<128x128xbf16>
    %cst_28 = arith.constant dense<0.000000e+00> : vector<256x128xf32>
    %47 = tpu.matmul %44, %46, %cst_28 {dimension_numbers = #tpu.dot_dimension_numbers<[1], [0], [0], [1], [0, 0, 1, 1], [], []>} : vector<256x128xbf16>, vector<128x128xbf16>, vector<256x128xf32> -> vector<256x128xf32>
    %48 = arith.truncf %43 : vector<1x128xf32> to vector<1x128xbf16>
    %c1_29 = arith.constant 1 : index
    %c0_30 = arith.constant 0 : index
    %c0_31 = arith.constant 0 : index
    %49 = vector.load %arg6[%c1_29, %c0_30, %c0_31] : memref<2x128x128xbf16, #tpu.memory_space<vmem>>, vector<1x128x128xbf16>
    %50 = vector.shape_cast %49 : vector<1x128x128xbf16> to vector<128x128xbf16>
    %cst_32 = arith.constant dense<0.000000e+00> : vector<1x128xf32>
    %51 = tpu.matmul %48, %50, %cst_32 {dimension_numbers = #tpu.dot_dimension_numbers<[1], [0], [0], [1], [0, 0, 1, 1], [], []>} : vector<1x128xbf16>, vector<128x128xbf16>, vector<1x128xf32> -> vector<1x128xf32>
    %52 = vector.broadcast %51 : vector<1x128xf32> to vector<256x128xf32>
    %53 = arith.addf %47, %52 : vector<256x128xf32>
    %c3 = arith.constant 3 : index
    %c0_33 = arith.constant 0 : index
    %54 = vector.load %arg8[%c3, %c0_33] : memref<4x128xf32, #tpu.memory_space<vmem>>, vector<1x128xf32>
    %55 = vector.broadcast %54 : vector<1x128xf32> to vector<256x128xf32>
    %56 = arith.addf %53, %55 : vector<256x128xf32>
    %cst_34 = arith.constant 0.000000e+00 : f32
    %57 = vector.broadcast %cst_34 : f32 to vector<256x128xf32>
    %58 = arith.maximumf %56, %57 : vector<256x128xf32>
    %59 = arith.truncf %58 : vector<256x128xf32> to vector<256x128xbf16>
    %c0_35 = arith.constant 0 : index
    %c0_36 = arith.constant 0 : index
    %60 = vector.load %arg7[%c0_35, %c0_36] : memref<128x32xbf16, #tpu.memory_space<vmem>>, vector<128x32xbf16>
    %cst_37 = arith.constant dense<0.000000e+00> : vector<256x32xf32>
    %61 = tpu.matmul %59, %60, %cst_37 {dimension_numbers = #tpu.dot_dimension_numbers<[1], [0], [0], [1], [0, 0, 1, 1], [], []>} : vector<256x128xbf16>, vector<128x32xbf16>, vector<256x32xf32> -> vector<256x32xf32>
    %c0_38 = arith.constant 0 : index
    %c0_39 = arith.constant 0 : index
    %62 = vector.load %arg9[%c0_38, %c0_39] : memref<1x32xf32, #tpu.memory_space<vmem>>, vector<1x32xf32>
    %63 = vector.broadcast %62 : vector<1x32xf32> to vector<256x32xf32>
    %64 = arith.addf %61, %63 : vector<256x32xf32>
    %65 = tpu.iota {dimensions = array<i32: 1>} : vector<256x32xi32>
    %c21_i32 = arith.constant 21 : i32
    %66 = vector.broadcast %c21_i32 : i32 to vector<256x32xi32>
    %67 = arith.cmpi sge, %65, %66 : vector<256x32xi32>
    %c28_i32 = arith.constant 28 : i32
    %68 = vector.broadcast %c28_i32 : i32 to vector<256x32xi32>
    %69 = arith.cmpi slt, %65, %68 : vector<256x32xi32>
    %70 = arith.andi %67, %69 : vector<256x32xi1>
    %cst_40 = arith.constant -1.000000e+30 : f32
    %71 = vector.broadcast %cst_40 : f32 to vector<256x32xf32>
    %72 = arith.select %70, %64, %71 : vector<256x32xi1>, vector<256x32xf32>
    %cst_41 = arith.constant dense<0xFF800000> : vector<256xf32>
    %73 = vector.multi_reduction <maximumf>, %72, %cst_41 [1] : vector<256x32xf32> to vector<256xf32>
    %74 = vector.shape_cast %73 : vector<256xf32> to vector<256x1xf32>
    %75 = vector.broadcast %74 : vector<256x1xf32> to vector<256x32xf32>
    %76 = arith.subf %64, %75 : vector<256x32xf32>
    %77 = math.exp %76 : vector<256x32xf32>
    %cst_42 = arith.constant 0.000000e+00 : f32
    %78 = vector.broadcast %cst_42 : f32 to vector<256x32xf32>
    %79 = arith.select %70, %77, %78 : vector<256x32xi1>, vector<256x32xf32>
    %cst_43 = arith.constant dense<0.000000e+00> : vector<256xf32>
    %80 = vector.multi_reduction <add>, %79, %cst_43 [1] : vector<256x32xf32> to vector<256xf32>
    %81 = vector.shape_cast %80 : vector<256xf32> to vector<256x1xf32>
    %82 = vector.broadcast %81 : vector<256x1xf32> to vector<256x32xf32>
    %83 = arith.divf %79, %82 : vector<256x32xf32>
    %84 = arith.negf %64 : vector<256x32xf32>
    %85 = math.exp %84 : vector<256x32xf32>
    %cst_44 = arith.constant 1.000000e+00 : f32
    %86 = vector.broadcast %cst_44 : f32 to vector<256x32xf32>
    %87 = arith.addf %86, %85 : vector<256x32xf32>
    %88 = arith.divf %86, %87 : vector<256x32xf32>
    %89 = arith.select %70, %83, %88 : vector<256x32xi1>, vector<256x32xf32>
    %c0_45 = arith.constant 0 : index
    %c0_46 = arith.constant 0 : index
    %c0_47 = arith.constant 0 : index
    %90 = vector.load %arg10[%c0_45, %c0_46, %c0_47] : memref<1x256x32xf32, #tpu.memory_space<vmem>>, vector<1x256x32xf32>
    %91 = vector.shape_cast %90 : vector<1x256x32xf32> to vector<256x32xf32>
    %92 = vector.shape_cast %89 : vector<256x32xf32> to vector<1x256x32xf32>
    tpu.vector_store %arg10[%c0_45, %c0_46, %c0_47], %92 {strides = array<i32>} : memref<1x256x32xf32, #tpu.memory_space<vmem>>, vector<1x256x32xf32>,
    return
  }
  func.func @transform_0(%arg0: i32, %arg1: i32) -> (i32, i32, i32) {
    %c0_i32 = arith.constant 0 : i32
    %c0_i32_0 = arith.constant 0 : i32
    return %arg0, %arg1, %c0_i32 : i32, i32, i32
  }
  func.func @transform_1(%arg0: i32, %arg1: i32) -> (i32, i32, i32) {
    %c0_i32 = arith.constant 0 : i32
    %c0_i32_0 = arith.constant 0 : i32
    %c0_i32_1 = arith.constant 0 : i32
    return %arg0, %c0_i32, %c0_i32_0 : i32, i32, i32
  }
  func.func @transform_2(%arg0: i32, %arg1: i32) -> (i32, i32) {
    %c0_i32 = arith.constant 0 : i32
    %c0_i32_0 = arith.constant 0 : i32
    %c0_i32_1 = arith.constant 0 : i32
    return %c0_i32, %c0_i32_0 : i32, i32
  }
  func.func @transform_3(%arg0: i32, %arg1: i32) -> (i32, i32, i32) {
    %c0_i32 = arith.constant 0 : i32
    %c0_i32_0 = arith.constant 0 : i32
    %c0_i32_1 = arith.constant 0 : i32
    %c0_i32_2 = arith.constant 0 : i32
    return %c0_i32, %c0_i32_0, %c0_i32_1 : i32, i32, i32
  }
  func.func @transform_4(%arg0: i32, %arg1: i32) -> (i32, i32, i32) {
    %c0_i32 = arith.constant 0 : i32
    %c0_i32_0 = arith.constant 0 : i32
    %c0_i32_1 = arith.constant 0 : i32
    %c0_i32_2 = arith.constant 0 : i32
    return %c0_i32, %c0_i32_0, %c0_i32_1 : i32, i32, i32
  }
  func.func @transform_5(%arg0: i32, %arg1: i32) -> (i32, i32) {
    %c0_i32 = arith.constant 0 : i32
    %c0_i32_0 = arith.constant 0 : i32
    %c0_i32_1 = arith.constant 0 : i32
    return %c0_i32, %c0_i32_0 : i32, i32
  }
  func.func @transform_6(%arg0: i32, %arg1: i32) -> (i32, i32) {
    %c0_i32 = arith.constant 0 : i32
    %c0_i32_0 = arith.constant 0 : i32
    %c0_i32_1 = arith.constant 0 : i32
    return %c0_i32, %c0_i32_0 : i32, i32
  }
  func.func @transform_7(%arg0: i32, %arg1: i32) -> (i32, i32) {
    %c0_i32 = arith.constant 0 : i32
    %c0_i32_0 = arith.constant 0 : i32
    %c0_i32_1 = arith.constant 0 : i32
    return %c0_i32, %c0_i32_0 : i32, i32
  }
  func.func @transform_8(%arg0: i32, %arg1: i32) -> (i32, i32, i32) {
    %c0_i32 = arith.constant 0 : i32
    %c0_i32_0 = arith.constant 0 : i32
    return %arg0, %arg1, %c0_i32 : i32, i32, i32
  }
}

</mosaic_0001>

<llo_original>
// kernel: articulation_estimator.2
$region0: #{articulation_estimator.2}
  #allocation0 [shape = 'u32[]', space=smem, size = 0x4, offset = 0x4, fixed_abs, tag = 'smem constant byte address 0x4 - core index']
  #allocation1 [shape = 'u32[144,128]{1,0:T(1,128)}', space=vmem, size = 0x12000, scoped, tag = 'internal scratch']
  %s0 = inlined_call_operand.vmem [shape: f32[2,1024,3], index: 0, kind: input, shape index: {}]
  %s1 = inlined_call_operand.vmem [shape: f32[3,128], index: 1, kind: input, shape index: {}]
  %s2 = inlined_call_operand.vmem [shape: bf16[2,128,128], index: 2, kind: input, shape index: {}]
  %s3 = inlined_call_operand.vmem [shape: f32[4,128], index: 3, kind: input, shape index: {}]
  %s4 = inlined_call_operand.vmem [shape: f32[2,1,128], index: 4, kind: output, shape index: {}]
  %s5 = sld [smem:[#allocation0]]
  $region53: #{articulation_estimator.2} parent=0
    _
  %s7 = ssub.s32 1, %s5
  %s8 = scalar_select 0, %s7, %s5
  loop: start=0, step=1, limit=10
  $region2: #{articulation_estimator.2} parent=0 // loop_pre_header
    _
  $region3: #{articulation_estimator.2} parent=0 // loop_header
    %s10 = sphi 0, %s14
    %p11 = scmp.ge.s32.totalorder %s10, 10
    %s17 = sphi 0, %s29
    %s18 = sphi 0, %s25
    %s19 = sphi 0, %s17
    %s20 = sphi 0, %s18
    %s21 = sphi 0, %s19
    %s22 = sphi 0, %s20
    %s34 = sphi 0, %s36
    %s37 = sphi 0, %s34
    %s38 = sphi 0, %s37
    %s54 = sphi 0, %s38
    %s58 = sphi 0, %s58
    %s60 = sphi 0, %s58
    %s61 = sphi 0, %s60
    %s75 = sphi 0, %s61
    %s79 = sphi 0, %s79
    %s81 = sphi 0, %s79
    %s82 = sphi 0, %s81
    %s96 = sphi 0, %s82
    %s100 = sphi 0, %s100
    %s102 = sphi 0, %s100
    %s103 = sphi 0, %s102
    %s117 = sphi 0, %s103
    %s123 = sphi 0, %s125
    %s126 = sphi 0, %s123
    %s127 = sphi 0, %s126
    %s143 = sphi 0, %s127
  $region4: #{articulation_estimator.2} parent=0 // loop_header_branch
    %13 = sbr.rel (%p11) target = $region8
  $region5: #{articulation_estimator.2} parent=0 // loop_body
    %s15 = ssub.s32 %s10, 1
    %s16 = ssub.s32 %s10, 2
    %s23 = sadd.s32 1, %s18
    %p24 = scmp.ge.s32.totalorder %s23, 4
    %s25 = scalar_select %p24, 0, %s23
    %s26 = sadd.s32 1, %s17
    %s27 = scalar_select %p24, %s26, %s17
    %p28 = scmp.ge.s32.totalorder %s27, 2
    %s29 = scalar_select %p28, 0, %s27
    %s30 = ssub.s32 %s17, %s29
    %s31 = ssub.s32 %s18, %s25
    %s32 = sor.u32 %s30, %s31
    %p33 = scmp.eq.s32.totalorder %s32, 0
    %s35 = sadd.s32 %s34, 1
    %s36 = scalar_select %p33, %s34, %s35
    %p39 = pneg %p33
    %p40 = scmp.eq.s32.totalorder %s10, 7
    %p41 = por %p39, %p40
    %p42 = scmp.ne.s32.totalorder %s34, %s37
    %p43 = scmp.eq.s32.totalorder %s10, 0
    %p44 = por %p42, %p43
    %p45 = scmp.ne.s32.totalorder %s34, %s37
    %p46 = scmp.eq.s32.totalorder %s15, 7
    %p47 = por %p45, %p46
    %p48 = scmp.ne.s32.totalorder %s37, %s38
    %p49 = scmp.eq.s32.totalorder %s15, 0
    %p50 = por %p48, %p49
    %p51 = scmp.ne.s32.totalorder %s37, %s38
    %p52 = scmp.eq.s32.totalorder %s16, 7
    %p53 = por %p51, %p52
    %p55 = scmp.ne.s32.totalorder %s38, %s54
    %p56 = scmp.eq.s32.totalorder %s16, 0
    %p57 = por %p55, %p56
    %s59 = sadd.s32 %s58, 1
    %p62 = scmp.eq.s32.totalorder %s10, 7
    %p63 = scmp.ne.s32.totalorder %s58, %s60
    %p64 = scmp.eq.s32.totalorder %s10, 0
    %p65 = por %p63, %p64
    %p66 = scmp.ne.s32.totalorder %s58, %s60
    %p67 = scmp.eq.s32.totalorder %s15, 7
    %p68 = por %p66, %p67
    %p69 = scmp.ne.s32.totalorder %s60, %s61
    %p70 = scmp.eq.s32.totalorder %s15, 0
    %p71 = por %p69, %p70
    %p72 = scmp.ne.s32.totalorder %s60, %s61
    %p73 = scmp.eq.s32.totalorder %s16, 7
    %p74 = por %p72, %p73
    %p76 = scmp.ne.s32.totalorder %s61, %s75
    %p77 = scmp.eq.s32.totalorder %s16, 0
    %p78 = por %p76, %p77
    %s80 = sadd.s32 %s79, 1
    %p83 = scmp.eq.s32.totalorder %s10, 7
    %p84 = scmp.ne.s32.totalorder %s79, %s81
    %p85 = scmp.eq.s32.totalorder %s10, 0
    %p86 = por %p84, %p85
    %p87 = scmp.ne.s32.totalorder %s79, %s81
    %p88 = scmp.eq.s32.totalorder %s15, 7
    %p89 = por %p87, %p88
    %p90 = scmp.ne.s32.totalorder %s81, %s82
    %p91 = scmp.eq.s32.totalorder %s15, 0
    %p92 = por %p90, %p91
    %p93 = scmp.ne.s32.totalorder %s81, %s82
    %p94 = scmp.eq.s32.totalorder %s16, 7
    %p95 = por %p93, %p94
    %p97 = scmp.ne.s32.totalorder %s82, %s96
    %p98 = scmp.eq.s32.totalorder %s16, 0
    %p99 = por %p97, %p98
    %s101 = sadd.s32 %s100, 1
    %p104 = scmp.eq.s32.totalorder %s10, 7
    %p105 = scmp.ne.s32.totalorder %s100, %s102
    %p106 = scmp.eq.s32.totalorder %s10, 0
    %p107 = por %p105, %p106
    %p108 = scmp.ne.s32.totalorder %s100, %s102
    %p109 = scmp.eq.s32.totalorder %s15, 7
    %p110 = por %p108, %p109
    %p111 = scmp.ne.s32.totalorder %s102, %s103
    %p112 = scmp.eq.s32.totalorder %s15, 0
    %p113 = por %p111, %p112
    %p114 = scmp.ne.s32.totalorder %s102, %s103
    %p115 = scmp.eq.s32.totalorder %s16, 7
    %p116 = por %p114, %p115
    %p118 = scmp.ne.s32.totalorder %s103, %s117
    %p119 = scmp.eq.s32.totalorder %s16, 0
    %p120 = por %p118, %p119
    %s121 = ssub.s32 %s17, %s29
    %p122 = scmp.eq.s32.totalorder %s121, 0
    %s124 = sadd.s32 %s123, 1
    %s125 = scalar_select %p122, %s123, %s124
    %p128 = pneg %p122
    %p129 = scmp.eq.s32.totalorder %s10, 7
    %p130 = por %p128, %p129
    %p131 = scmp.ne.s32.totalorder %s123, %s126
    %p132 = scmp.eq.s32.totalorder %s10, 0
    %p133 = por %p131, %p132
    %p134 = scmp.ne.s32.totalorder %s123, %s126
    %p135 = scmp.eq.s32.totalorder %s15, 7
    %p136 = por %p134, %p135
    %p137 = scmp.ne.s32.totalorder %s126, %s127
    %p138 = scmp.eq.s32.totalorder %s15, 0
    %p139 = por %p137, %p138
    %p140 = scmp.ne.s32.totalorder %s126, %s127
    %p141 = scmp.eq.s32.totalorder %s16, 7
    %p142 = por %p140, %p141
    %p144 = scmp.ne.s32.totalorder %s127, %s143
    %p145 = scmp.eq.s32.totalorder %s16, 0
    %p146 = por %p144, %p145
    %p147 = scmp.le.s32.totalorder 1, %s10
    %p148 = scmp.lt.s32.totalorder %s10, 9
    %p149 = pnand %p147, %p148
    %p150 = pneg %p149
    // Predicated region
    $region9: #{articulation_estimator.2} parent=5 // pred_check
      _
    $region10: #{articulation_estimator.2} parent=5 // pred_check_branch
      %152 = sbr.rel (%p149) target = $region12
    $region11: #{articulation_estimator.2} parent=5 // pred_region
      %s153 = ssub.s32 %s10, 1
      // Predicated region
      $region13: #{articulation_estimator.2} parent=11 // pred_check
        %p154 = pneg %p71
      $region14: #{articulation_estimator.2} parent=11 // pred_check_branch
        %156 = sbr.rel (%p154) target = $region16
      $region15: #{articulation_estimator.2} parent=11 // pred_region
        _
      $region16: #{articulation_estimator.2} parent=11 // pred_fallthru
        _
      // Predicated region
      $region17: #{articulation_estimator.2} parent=11 // pred_check
        %p157 = pneg %p92
      $region18: #{articulation_estimator.2} parent=11 // pred_check_branch
        %159 = sbr.rel (%p157) target = $region20
      $region19: #{articulation_estimator.2} parent=11 // pred_region
        _
      $region20: #{articulation_estimator.2} parent=11 // pred_fallthru
        _
      // Predicated region
      $region21: #{articulation_estimator.2} parent=11 // pred_check
        %p160 = pneg %p113
      $region22: #{articulation_estimator.2} parent=11 // pred_check_branch
        %162 = sbr.rel (%p160) target = $region24
      $region23: #{articulation_estimator.2} parent=11 // pred_region
        _
      $region24: #{articulation_estimator.2} parent=11 // pred_fallthru
        _
    $region12: #{articulation_estimator.2} parent=5 // pred_fallthru
      _
    %p163 = scmp.lt.s32.totalorder %s10, 8
    // Predicated region
    $region25: #{articulation_estimator.2} parent=5 // pred_check
      %p164 = pneg %p163
    $region26: #{articulation_estimator.2} parent=5 // pred_check_branch
      %166 = sbr.rel (%p164) target = $region28
    $region27: #{articulation_estimator.2} parent=5 // pred_region
      // Predicated region
      $region29: #{articulation_estimator.2} parent=27 // pred_check
        %p167 = pneg %p44
      $region30: #{articulation_estimator.2} parent=27 // pred_check_branch
        %169 = sbr.rel (%p167) target = $region32
      $region31: #{articulation_estimator.2} parent=27 // pred_region
        %s170 = smul.u32 32, %s18
        %p171 = scmp.lt.s32.totalorder %s17, 1
        %s172 = scalar_select %p171, %s17, 1
        %p173 = scmp.lt.s32.totalorder %s170, 127
        %s174 = scalar_select %p173, %s170, 127
        %s175 = smul.addr %s172, 128
        %s176 = sadd.s32 %s174, %s175
        %s177 = smul.addr %s176, 8
        %s178 = scalar_lea.vmem %s0, %s177
        %s179 = smul.u32 32, %s18
      $region32: #{articulation_estimator.2} parent=27 // pred_fallthru
        _
    $region28: #{articulation_estimator.2} parent=5 // pred_fallthru
      _
    %p180 = scmp.le.s32.totalorder 1, %s10
    %p181 = scmp.lt.s32.totalorder %s10, 9
    %p182 = pnand %p180, %p181
    %p183 = pneg %p182
    // Predicated region
    $region33: #{articulation_estimator.2} parent=5 // pred_check
      _
    $region34: #{articulation_estimator.2} parent=5 // pred_check_branch
      %185 = sbr.rel (%p182) target = $region36
    $region35: #{articulation_estimator.2} parent=5 // pred_region
      %s186 = ssub.s32 %s10, 1
      %s187 = smul.u32 32, %s20
      %p188 = scmp.lt.s32.totalorder %s19, 1
      %s189 = scalar_select %p188, %s19, 1
      %p190 = scmp.lt.s32.totalorder %s187, 127
      %s191 = scalar_select %p190, %s187, 127
      %s192 = smul.addr %s189, 128
      %s193 = sadd.s32 %s191, %s192
      %s194 = smul.addr %s193, 8
      %s195 = scalar_lea.vmem %s0, %s194
      %p196 = pneg %p50
      %p197 = pneg %p47
      %p198 = pneg %p71
      %p199 = pneg %p68
      %p200 = pneg %p92
      %p201 = pneg %p89
      %p202 = pneg %p113
      %p203 = pneg %p110
      %p204 = pneg %p139
      %p205 = pneg %p136
      %p206 = scmp.lt.s32.totalorder %s19, 1
      %s207 = scalar_select %p206, %s19, 1
      %s208 = scalar_lea.vmem %s4, %s207
      %s209 = smul.u32 32, %s20
      %p210 = scmp.lt.s32.totalorder %s19, 1
      %s211 = scalar_select %p210, %s19, 1
      %p212 = scmp.lt.s32.totalorder %s209, 127
      %s213 = scalar_select %p212, %s209, 127
      %s214 = smul.addr %s211, 128
      %s215 = sadd.s32 %s213, %s214
      %s216 = smul.addr %s215, 8
      %s217 = scalar_lea.vmem %s0, %s216
      %s218 = smul.u32 32, %s20
      %p219 = scmp.lt.s32.totalorder %s19, 1
      %s220 = scalar_select %p219, %s19, 1
      %s221 = scalar_lea.vmem %s4, %s220
      %v223 = vld [vmem:[%s217] sm:$0xff]
      %v224 = vld [vmem:[%s217 + $0x8] sm:$0xff]
      %v225 = vld [vmem:[%s217 + $0x10] sm:$0xff]
      %v226 = vld [vmem:[%s217 + $0x18] sm:$0xff]
      %v227 = vld [vmem:[%s217 + $0x20] sm:$0xff]
      %v228 = vld [vmem:[%s217 + $0x28] sm:$0xff]
      %v229 = vld [vmem:[%s217 + $0x30] sm:$0xff]
      %v230 = vld [vmem:[%s217 + $0x38] sm:$0xff]
      %v231 = vld [vmem:[%s217 + $0x40] sm:$0xff]
      %v232 = vld [vmem:[%s217 + $0x48] sm:$0xff]
      %v233 = vld [vmem:[%s217 + $0x50] sm:$0xff]
      %v234 = vld [vmem:[%s217 + $0x58] sm:$0xff]
      %v235 = vld [vmem:[%s217 + $0x60] sm:$0xff]
      %v236 = vld [vmem:[%s217 + $0x68] sm:$0xff]
      %v237 = vld [vmem:[%s217 + $0x70] sm:$0xff]
      %v238 = vld [vmem:[%s217 + $0x78] sm:$0xff]
      %v239 = vld [vmem:[%s217 + $0x80] sm:$0xff]
      %v240 = vld [vmem:[%s217 + $0x88] sm:$0xff]
      %v241 = vld [vmem:[%s217 + $0x90] sm:$0xff]
      %v242 = vld [vmem:[%s217 + $0x98] sm:$0xff]
      %v243 = vld [vmem:[%s217 + $0xa0] sm:$0xff]
      %v244 = vld [vmem:[%s217 + $0xa8] sm:$0xff]
      %v245 = vld [vmem:[%s217 + $0xb0] sm:$0xff]
      %v246 = vld [vmem:[%s217 + $0xb8] sm:$0xff]
      %v247 = vld [vmem:[%s217 + $0xc0] sm:$0xff]
      %v248 = vld [vmem:[%s217 + $0xc8] sm:$0xff]
      %v249 = vld [vmem:[%s217 + $0xd0] sm:$0xff]
      %v250 = vld [vmem:[%s217 + $0xd8] sm:$0xff]
      %v251 = vld [vmem:[%s217 + $0xe0] sm:$0xff]
      %v252 = vld [vmem:[%s217 + $0xe8] sm:$0xff]
      %v253 = vld [vmem:[%s217 + $0xf0] sm:$0xff]
      %v254 = vld [vmem:[%s217 + $0xf8] sm:$0xff]
      %v255 = vld [vmem:[%s3] sm:$0x1]
      %v256 = vld [vmem:[%s1] sm:$0x1]
      %258 = vset.pattern.permute.xlu0 0
      %259 = vperm.xlu0 %258, %v223
      %v260 = vpop.permute.xlu0 %259
      %263 = vset.pattern.permute.xlu0 0
      %264 = vperm.xlu0 %263, %v224
      %v265 = vpop.permute.xlu0 %264
      %268 = vset.pattern.permute.xlu0 0
      %269 = vperm.xlu0 %268, %v225
      %v270 = vpop.permute.xlu0 %269
      %273 = vset.pattern.permute.xlu0 0
      %274 = vperm.xlu0 %273, %v226
      %v275 = vpop.permute.xlu0 %274
      %278 = vset.pattern.permute.xlu0 0
      %279 = vperm.xlu0 %278, %v227
      %v280 = vpop.permute.xlu0 %279
      %283 = vset.pattern.permute.xlu0 0
      %284 = vperm.xlu0 %283, %v228
      %v285 = vpop.permute.xlu0 %284
      %288 = vset.pattern.permute.xlu0 0
      %289 = vperm.xlu0 %288, %v229
      %v290 = vpop.permute.xlu0 %289
      %293 = vset.pattern.permute.xlu0 0
      %294 = vperm.xlu0 %293, %v230
      %v295 = vpop.permute.xlu0 %294
      %298 = vset.pattern.permute.xlu0 0
      %299 = vperm.xlu0 %298, %v231
      %v300 = vpop.permute.xlu0 %299
      %303 = vset.pattern.permute.xlu0 0
      %304 = vperm.xlu0 %303, %v232
      %v305 = vpop.permute.xlu0 %304
      %308 = vset.pattern.permute.xlu0 0
      %309 = vperm.xlu0 %308, %v233
      %v310 = vpop.permute.xlu0 %309
      %313 = vset.pattern.permute.xlu0 0
      %314 = vperm.xlu0 %313, %v234
      %v315 = vpop.permute.xlu0 %314
      %318 = vset.pattern.permute.xlu0 0
      %319 = vperm.xlu0 %318, %v235
      %v320 = vpop.permute.xlu0 %319
      %323 = vset.pattern.permute.xlu0 0
      %324 = vperm.xlu0 %323, %v236
      %v325 = vpop.permute.xlu0 %324
      %328 = vset.pattern.permute.xlu0 0
      %329 = vperm.xlu0 %328, %v237
      %v330 = vpop.permute.xlu0 %329
      %333 = vset.pattern.permute.xlu0 0
      %334 = vperm.xlu0 %333, %v238
      %v335 = vpop.permute.xlu0 %334
      %338 = vset.pattern.permute.xlu0 0
      %339 = vperm.xlu0 %338, %v239
      %v340 = vpop.permute.xlu0 %339
      %343 = vset.pattern.permute.xlu0 0
      %344 = vperm.xlu0 %343, %v240
      %v345 = vpop.permute.xlu0 %344
      %348 = vset.pattern.permute.xlu0 0
      %349 = vperm.xlu0 %348, %v241
      %v350 = vpop.permute.xlu0 %349
      %353 = vset.pattern.permute.xlu0 0
      %354 = vperm.xlu0 %353, %v242
      %v355 = vpop.permute.xlu0 %354
      %358 = vset.pattern.permute.xlu0 0
      %359 = vperm.xlu0 %358, %v243
      %v360 = vpop.permute.xlu0 %359
      %363 = vset.pattern.permute.xlu0 0
      %364 = vperm.xlu0 %363, %v244
      %v365 = vpop.permute.xlu0 %364
      %368 = vset.pattern.permute.xlu0 0
      %369 = vperm.xlu0 %368, %v245
      %v370 = vpop.permute.xlu0 %369
      %373 = vset.pattern.permute.xlu0 0
      %374 = vperm.xlu0 %373, %v246
      %v375 = vpop.permute.xlu0 %374
      %378 = vset.pattern.permute.xlu0 0
      %379 = vperm.xlu0 %378, %v247
      %v380 = vpop.permute.xlu0 %379
      %383 = vset.pattern.permute.xlu0 0
      %384 = vperm.xlu0 %383, %v248
      %v385 = vpop.permute.xlu0 %384
      %388 = vset.pattern.permute.xlu0 0
      %389 = vperm.xlu0 %388, %v249
      %v390 = vpop.permute.xlu0 %389
      %393 = vset.pattern.permute.xlu0 0
      %394 = vperm.xlu0 %393, %v250
      %v395 = vpop.permute.xlu0 %394
      %398 = vset.pattern.permute.xlu0 0
      %399 = vperm.xlu0 %398, %v251
      %v400 = vpop.permute.xlu0 %399
      %403 = vset.pattern.permute.xlu0 0
      %404 = vperm.xlu0 %403, %v252
      %v405 = vpop.permute.xlu0 %404
      %408 = vset.pattern.permute.xlu0 0
      %409 = vperm.xlu0 %408, %v253
      %v410 = vpop.permute.xlu0 %409
      %413 = vset.pattern.permute.xlu0 0
      %414 = vperm.xlu0 %413, %v254
      %v415 = vpop.permute.xlu0 %414
      %v417 = vlaneseq
      %v418 = vshrl.u32 %v417, 7
      %v419 = vsub.s32 0, %v418
      %v420 = vrot.slane %v256, %v419
      %v421 = vmul.f32 %v260, %v420
      %v422 = vmul.f32 %v265, %v420
      %v423 = vmul.f32 %v270, %v420
      %v424 = vmul.f32 %v275, %v420
      %v425 = vmul.f32 %v280, %v420
      %v426 = vmul.f32 %v285, %v420
      %v427 = vmul.f32 %v290, %v420
      %v428 = vmul.f32 %v295, %v420
      %v429 = vmul.f32 %v300, %v420
      %v430 = vmul.f32 %v305, %v420
      %v431 = vmul.f32 %v310, %v420
      %v432 = vmul.f32 %v315, %v420
      %v433 = vmul.f32 %v320, %v420
      %v434 = vmul.f32 %v325, %v420
      %v435 = vmul.f32 %v330, %v420
      %v436 = vmul.f32 %v335, %v420
      %v437 = vmul.f32 %v340, %v420
      %v438 = vmul.f32 %v345, %v420
      %v439 = vmul.f32 %v350, %v420
      %v440 = vmul.f32 %v355, %v420
      %v441 = vmul.f32 %v360, %v420
      %v442 = vmul.f32 %v365, %v420
      %v443 = vmul.f32 %v370, %v420
      %v444 = vmul.f32 %v375, %v420
      %v445 = vmul.f32 %v380, %v420
      %v446 = vmul.f32 %v385, %v420
      %v447 = vmul.f32 %v390, %v420
      %v448 = vmul.f32 %v395, %v420
      %v449 = vmul.f32 %v400, %v420
      %v450 = vmul.f32 %v405, %v420
      %v451 = vmul.f32 %v410, %v420
      %v452 = vmul.f32 %v415, %v420
      %v453 = vlaneseq
      %v454 = vshrl.u32 %v453, 7
      %v455 = vsub.s32 0, %v454
      %v456 = vrot.slane %v255, %v455
      %v457 = vadd.f32 %v456, %v421
      %v458 = vadd.f32 %v456, %v422
      %v459 = vadd.f32 %v456, %v423
      %v460 = vadd.f32 %v456, %v424
      %v461 = vadd.f32 %v456, %v425
      %v462 = vadd.f32 %v456, %v426
      %v463 = vadd.f32 %v456, %v427
      %v464 = vadd.f32 %v456, %v428
      %v465 = vadd.f32 %v456, %v429
      %v466 = vadd.f32 %v456, %v430
      %v467 = vadd.f32 %v456, %v431
      %v468 = vadd.f32 %v456, %v432
      %v469 = vadd.f32 %v456, %v433
      %v470 = vadd.f32 %v456, %v434
      %v471 = vadd.f32 %v456, %v435
      %v472 = vadd.f32 %v456, %v436
      %v473 = vadd.f32 %v456, %v437
      %v474 = vadd.f32 %v456, %v438
      %v475 = vadd.f32 %v456, %v439
      %v476 = vadd.f32 %v456, %v440
      %v477 = vadd.f32 %v456, %v441
      %v478 = vadd.f32 %v456, %v442
      %v479 = vadd.f32 %v456, %v443
      %v480 = vadd.f32 %v456, %v444
      %v481 = vadd.f32 %v456, %v445
      %v482 = vadd.f32 %v456, %v446
      %v483 = vadd.f32 %v456, %v447
      %v484 = vadd.f32 %v456, %v448
      %v485 = vadd.f32 %v456, %v449
      %v486 = vadd.f32 %v456, %v450
      %v487 = vadd.f32 %v456, %v451
      %v488 = vadd.f32 %v456, %v452
      %v489 = vld [vmem:[%s1 + $0x1] sm:$0x1]
      %490 = vset.pattern.permute.xlu0 1
      %491 = vperm.xlu0 %490, %v223
      %v492 = vpop.permute.xlu0 %491
      %494 = vset.pattern.permute.xlu0 1
      %495 = vperm.xlu0 %494, %v224
      %v496 = vpop.permute.xlu0 %495
      %498 = vset.pattern.permute.xlu0 1
      %499 = vperm.xlu0 %498, %v225
      %v500 = vpop.permute.xlu0 %499
      %502 = vset.pattern.permute.xlu0 1
      %503 = vperm.xlu0 %502, %v226
      %v504 = vpop.permute.xlu0 %503
      %506 = vset.pattern.permute.xlu0 1
      %507 = vperm.xlu0 %506, %v227
      %v508 = vpop.permute.xlu0 %507
      %510 = vset.pattern.permute.xlu0 1
      %511 = vperm.xlu0 %510, %v228
      %v512 = vpop.permute.xlu0 %511
      %514 = vset.pattern.permute.xlu0 1
      %515 = vperm.xlu0 %514, %v229
      %v516 = vpop.permute.xlu0 %515
      %518 = vset.pattern.permute.xlu0 1
      %519 = vperm.xlu0 %518, %v230
      %v520 = vpop.permute.xlu0 %519
      %522 = vset.pattern.permute.xlu0 1
      %523 = vperm.xlu0 %522, %v231
      %v524 = vpop.permute.xlu0 %523
      %526 = vset.pattern.permute.xlu0 1
      %527 = vperm.xlu0 %526, %v232
      %v528 = vpop.permute.xlu0 %527
      %530 = vset.pattern.permute.xlu0 1
      %531 = vperm.xlu0 %530, %v233
      %v532 = vpop.permute.xlu0 %531
      %534 = vset.pattern.permute.xlu0 1
      %535 = vperm.xlu0 %534, %v234
      %v536 = vpop.permute.xlu0 %535
      %538 = vset.pattern.permute.xlu0 1
      %539 = vperm.xlu0 %538, %v235
      %v540 = vpop.permute.xlu0 %539
      %542 = vset.pattern.permute.xlu0 1
      %543 = vperm.xlu0 %542, %v236
      %v544 = vpop.permute.xlu0 %543
      %546 = vset.pattern.permute.xlu0 1
      %547 = vperm.xlu0 %546, %v237
      %v548 = vpop.permute.xlu0 %547
      %550 = vset.pattern.permute.xlu0 1
      %551 = vperm.xlu0 %550, %v238
      %v552 = vpop.permute.xlu0 %551
      %554 = vset.pattern.permute.xlu0 1
      %555 = vperm.xlu0 %554, %v239
      %v556 = vpop.permute.xlu0 %555
      %558 = vset.pattern.permute.xlu0 1
      %559 = vperm.xlu0 %558, %v240
      %v560 = vpop.permute.xlu0 %559
      %562 = vset.pattern.permute.xlu0 1
      %563 = vperm.xlu0 %562, %v241
      %v564 = vpop.permute.xlu0 %563
      %566 = vset.pattern.permute.xlu0 1
      %567 = vperm.xlu0 %566, %v242
      %v568 = vpop.permute.xlu0 %567
      %570 = vset.pattern.permute.xlu0 1
      %571 = vperm.xlu0 %570, %v243
      %v572 = vpop.permute.xlu0 %571
      %574 = vset.pattern.permute.xlu0 1
      %575 = vperm.xlu0 %574, %v244
      %v576 = vpop.permute.xlu0 %575
      %578 = vset.pattern.permute.xlu0 1
      %579 = vperm.xlu0 %578, %v245
      %v580 = vpop.permute.xlu0 %579
      %582 = vset.pattern.permute.xlu0 1
      %583 = vperm.xlu0 %582, %v246
      %v584 = vpop.permute.xlu0 %583
      %586 = vset.pattern.permute.xlu0 1
      %587 = vperm.xlu0 %586, %v247
      %v588 = vpop.permute.xlu0 %587
      %590 = vset.pattern.permute.xlu0 1
      %591 = vperm.xlu0 %590, %v248
      %v592 = vpop.permute.xlu0 %591
      %594 = vset.pattern.permute.xlu0 1
      %595 = vperm.xlu0 %594, %v249
      %v596 = vpop.permute.xlu0 %595
      %598 = vset.pattern.permute.xlu0 1
      %599 = vperm.xlu0 %598, %v250
      %v600 = vpop.permute.xlu0 %599
      %602 = vset.pattern.permute.xlu0 1
      %603 = vperm.xlu0 %602, %v251
      %v604 = vpop.permute.xlu0 %603
      %606 = vset.pattern.permute.xlu0 1
      %607 = vperm.xlu0 %606, %v252
      %v608 = vpop.permute.xlu0 %607
      %610 = vset.pattern.permute.xlu0 1
      %611 = vperm.xlu0 %610, %v253
      %v612 = vpop.permute.xlu0 %611
      %614 = vset.pattern.permute.xlu0 1
      %615 = vperm.xlu0 %614, %v254
      %v616 = vpop.permute.xlu0 %615
      %v618 = vlaneseq
      %v619 = vshrl.u32 %v618, 7
      %v620 = vsub.s32 0, %v619
      %v621 = vrot.slane %v489, %v620
      %v622 = vmul.f32 %v492, %v621
      %v623 = vmul.f32 %v496, %v621
      %v624 = vmul.f32 %v500, %v621
      %v625 = vmul.f32 %v504, %v621
      %v626 = vmul.f32 %v508, %v621
      %v627 = vmul.f32 %v512, %v621
      %v628 = vmul.f32 %v516, %v621
      %v629 = vmul.f32 %v520, %v621
      %v630 = vmul.f32 %v524, %v621
      %v631 = vmul.f32 %v528, %v621
      %v632 = vmul.f32 %v532, %v621
      %v633 = vmul.f32 %v536, %v621
      %v634 = vmul.f32 %v540, %v621
      %v635 = vmul.f32 %v544, %v621
      %v636 = vmul.f32 %v548, %v621
      %v637 = vmul.f32 %v552, %v621
      %v638 = vmul.f32 %v556, %v621
      %v639 = vmul.f32 %v560, %v621
      %v640 = vmul.f32 %v564, %v621
      %v641 = vmul.f32 %v568, %v621
      %v642 = vmul.f32 %v572, %v621
      %v643 = vmul.f32 %v576, %v621
      %v644 = vmul.f32 %v580, %v621
      %v645 = vmul.f32 %v584, %v621
      %v646 = vmul.f32 %v588, %v621
      %v647 = vmul.f32 %v592, %v621
      %v648 = vmul.f32 %v596, %v621
      %v649 = vmul.f32 %v600, %v621
      %v650 = vmul.f32 %v604, %v621
      %v651 = vmul.f32 %v608, %v621
      %v652 = vmul.f32 %v612, %v621
      %v653 = vmul.f32 %v616, %v621
      %v654 = vadd.f32 %v457, %v622
      %v655 = vadd.f32 %v458, %v623
      %v656 = vadd.f32 %v459, %v624
      %v657 = vadd.f32 %v460, %v625
      %v658 = vadd.f32 %v461, %v626
      %v659 = vadd.f32 %v462, %v627
      %v660 = vadd.f32 %v463, %v628
      %v661 = vadd.f32 %v464, %v629
      %v662 = vadd.f32 %v465, %v630
      %v663 = vadd.f32 %v466, %v631
      %v664 = vadd.f32 %v467, %v632
      %v665 = vadd.f32 %v468, %v633
      %v666 = vadd.f32 %v469, %v634
      %v667 = vadd.f32 %v470, %v635
      %v668 = vadd.f32 %v471, %v636
      %v669 = vadd.f32 %v472, %v637
      %v670 = vadd.f32 %v473, %v638
      %v671 = vadd.f32 %v474, %v639
      %v672 = vadd.f32 %v475, %v640
      %v673 = vadd.f32 %v476, %v641
      %v674 = vadd.f32 %v477, %v642
      %v675 = vadd.f32 %v478, %v643
      %v676 = vadd.f32 %v479, %v644
      %v677 = vadd.f32 %v480, %v645
      %v678 = vadd.f32 %v481, %v646
      %v679 = vadd.f32 %v482, %v647
      %v680 = vadd.f32 %v483, %v648
      %v681 = vadd.f32 %v484, %v649
      %v682 = vadd.f32 %v485, %v650
      %v683 = vadd.f32 %v486, %v651
      %v684 = vadd.f32 %v487, %v652
      %v685 = vadd.f32 %v488, %v653
      %v686 = vld [vmem:[%s1 + $0x2] sm:$0x1]
      %687 = vset.pattern.permute.xlu0 2
      %688 = vperm.xlu0 %687, %v223
      %v689 = vpop.permute.xlu0 %688
      %691 = vset.pattern.permute.xlu0 2
      %692 = vperm.xlu0 %691, %v224
      %v693 = vpop.permute.xlu0 %692
      %695 = vset.pattern.permute.xlu0 2
      %696 = vperm.xlu0 %695, %v225
      %v697 = vpop.permute.xlu0 %696
      %699 = vset.pattern.permute.xlu0 2
      %700 = vperm.xlu0 %699, %v226
      %v701 = vpop.permute.xlu0 %700
      %703 = vset.pattern.permute.xlu0 2
      %704 = vperm.xlu0 %703, %v227
      %v705 = vpop.permute.xlu0 %704
      %707 = vset.pattern.permute.xlu0 2
      %708 = vperm.xlu0 %707, %v228
      %v709 = vpop.permute.xlu0 %708
      %711 = vset.pattern.permute.xlu0 2
      %712 = vperm.xlu0 %711, %v229
      %v713 = vpop.permute.xlu0 %712
      %715 = vset.pattern.permute.xlu0 2
      %716 = vperm.xlu0 %715, %v230
      %v717 = vpop.permute.xlu0 %716
      %719 = vset.pattern.permute.xlu0 2
      %720 = vperm.xlu0 %719, %v231
      %v721 = vpop.permute.xlu0 %720
      %723 = vset.pattern.permute.xlu0 2
      %724 = vperm.xlu0 %723, %v232
      %v725 = vpop.permute.xlu0 %724
      %727 = vset.pattern.permute.xlu0 2
      %728 = vperm.xlu0 %727, %v233
      %v729 = vpop.permute.xlu0 %728
      %731 = vset.pattern.permute.xlu0 2
      %732 = vperm.xlu0 %731, %v234
      %v733 = vpop.permute.xlu0 %732
      %735 = vset.pattern.permute.xlu0 2
      %736 = vperm.xlu0 %735, %v235
      %v737 = vpop.permute.xlu0 %736
      %739 = vset.pattern.permute.xlu0 2
      %740 = vperm.xlu0 %739, %v236
      %v741 = vpop.permute.xlu0 %740
      %743 = vset.pattern.permute.xlu0 2
      %744 = vperm.xlu0 %743, %v237
      %v745 = vpop.permute.xlu0 %744
      %747 = vset.pattern.permute.xlu0 2
      %748 = vperm.xlu0 %747, %v238
      %v749 = vpop.permute.xlu0 %748
      %751 = vset.pattern.permute.xlu0 2
      %752 = vperm.xlu0 %751, %v239
      %v753 = vpop.permute.xlu0 %752
      %755 = vset.pattern.permute.xlu0 2
      %756 = vperm.xlu0 %755, %v240
      %v757 = vpop.permute.xlu0 %756
      %759 = vset.pattern.permute.xlu0 2
      %760 = vperm.xlu0 %759, %v241
      %v761 = vpop.permute.xlu0 %760
      %763 = vset.pattern.permute.xlu0 2
      %764 = vperm.xlu0 %763, %v242
      %v765 = vpop.permute.xlu0 %764
      %767 = vset.pattern.permute.xlu0 2
      %768 = vperm.xlu0 %767, %v243
      %v769 = vpop.permute.xlu0 %768
      %771 = vset.pattern.permute.xlu0 2
      %772 = vperm.xlu0 %771, %v244
      %v773 = vpop.permute.xlu0 %772
      %775 = vset.pattern.permute.xlu0 2
      %776 = vperm.xlu0 %775, %v245
      %v777 = vpop.permute.xlu0 %776
      %779 = vset.pattern.permute.xlu0 2
      %780 = vperm.xlu0 %779, %v246
      %v781 = vpop.permute.xlu0 %780
      %783 = vset.pattern.permute.xlu0 2
      %784 = vperm.xlu0 %783, %v247
      %v785 = vpop.permute.xlu0 %784
      %787 = vset.pattern.permute.xlu0 2
      %788 = vperm.xlu0 %787, %v248
      %v789 = vpop.permute.xlu0 %788
      %791 = vset.pattern.permute.xlu0 2
      %792 = vperm.xlu0 %791, %v249
      %v793 = vpop.permute.xlu0 %792
      %795 = vset.pattern.permute.xlu0 2
      %796 = vperm.xlu0 %795, %v250
      %v797 = vpop.permute.xlu0 %796
      %799 = vset.pattern.permute.xlu0 2
      %800 = vperm.xlu0 %799, %v251
      %v801 = vpop.permute.xlu0 %800
      %803 = vset.pattern.permute.xlu0 2
      %804 = vperm.xlu0 %803, %v252
      %v805 = vpop.permute.xlu0 %804
      %807 = vset.pattern.permute.xlu0 2
      %808 = vperm.xlu0 %807, %v253
      %v809 = vpop.permute.xlu0 %808
      %811 = vset.pattern.permute.xlu0 2
      %812 = vperm.xlu0 %811, %v254
      %v813 = vpop.permute.xlu0 %812
      %v815 = vlaneseq
      %v816 = vshrl.u32 %v815, 7
      %v817 = vsub.s32 0, %v816
      %v818 = vrot.slane %v686, %v817
      %v819 = vmul.f32 %v689, %v818
      %v820 = vmul.f32 %v693, %v818
      %v821 = vmul.f32 %v697, %v818
      %v822 = vmul.f32 %v701, %v818
      %v823 = vmul.f32 %v705, %v818
      %v824 = vmul.f32 %v709, %v818
      %v825 = vmul.f32 %v713, %v818
      %v826 = vmul.f32 %v717, %v818
      %v827 = vmul.f32 %v721, %v818
      %v828 = vmul.f32 %v725, %v818
      %v829 = vmul.f32 %v729, %v818
      %v830 = vmul.f32 %v733, %v818
      %v831 = vmul.f32 %v737, %v818
      %v832 = vmul.f32 %v741, %v818
      %v833 = vmul.f32 %v745, %v818
      %v834 = vmul.f32 %v749, %v818
      %v835 = vmul.f32 %v753, %v818
      %v836 = vmul.f32 %v757, %v818
      %v837 = vmul.f32 %v761, %v818
      %v838 = vmul.f32 %v765, %v818
      %v839 = vmul.f32 %v769, %v818
      %v840 = vmul.f32 %v773, %v818
      %v841 = vmul.f32 %v777, %v818
      %v842 = vmul.f32 %v781, %v818
      %v843 = vmul.f32 %v785, %v818
      %v844 = vmul.f32 %v789, %v818
      %v845 = vmul.f32 %v793, %v818
      %v846 = vmul.f32 %v797, %v818
      %v847 = vmul.f32 %v801, %v818
      %v848 = vmul.f32 %v805, %v818
      %v849 = vmul.f32 %v809, %v818
      %v850 = vmul.f32 %v813, %v818
      %v851 = vadd.f32 %v654, %v819
      %v852 = vadd.f32 %v655, %v820
      %v853 = vadd.f32 %v656, %v821
      %v854 = vadd.f32 %v657, %v822
      %v855 = vadd.f32 %v658, %v823
      %v856 = vadd.f32 %v659, %v824
      %v857 = vadd.f32 %v660, %v825
      %v858 = vadd.f32 %v661, %v826
      %v859 = vadd.f32 %v662, %v827
      %v860 = vadd.f32 %v663, %v828
      %v861 = vadd.f32 %v664, %v829
      %v862 = vadd.f32 %v665, %v830
      %v863 = vadd.f32 %v666, %v831
      %v864 = vadd.f32 %v667, %v832
      %v865 = vadd.f32 %v668, %v833
      %v866 = vadd.f32 %v669, %v834
      %v867 = vadd.f32 %v670, %v835
      %v868 = vadd.f32 %v671, %v836
      %v869 = vadd.f32 %v672, %v837
      %v870 = vadd.f32 %v673, %v838
      %v871 = vadd.f32 %v674, %v839
      %v872 = vadd.f32 %v675, %v840
      %v873 = vadd.f32 %v676, %v841
      %v874 = vadd.f32 %v677, %v842
      %v875 = vadd.f32 %v678, %v843
      %v876 = vadd.f32 %v679, %v844
      %v877 = vadd.f32 %v680, %v845
      %v878 = vadd.f32 %v681, %v846
      %v879 = vadd.f32 %v682, %v847
      %v880 = vadd.f32 %v683, %v848
      %v881 = vadd.f32 %v684, %v849
      %v882 = vadd.f32 %v685, %v850
      %v883 = vmax.f32 %v851, 0.0
      %v884 = vmax.f32 %v852, 0.0
      %v885 = vmax.f32 %v853, 0.0
      %v886 = vmax.f32 %v854, 0.0
      %v887 = vmax.f32 %v855, 0.0
      %v888 = vmax.f32 %v856, 0.0
      %v889 = vmax.f32 %v857, 0.0
      %v890 = vmax.f32 %v858, 0.0
      %v891 = vmax.f32 %v859, 0.0
      %v892 = vmax.f32 %v860, 0.0
      %v893 = vmax.f32 %v861, 0.0
      %v894 = vmax.f32 %v862, 0.0
      %v895 = vmax.f32 %v863, 0.0
      %v896 = vmax.f32 %v864, 0.0
      %v897 = vmax.f32 %v865, 0.0
      %v898 = vmax.f32 %v866, 0.0
      %v899 = vmax.f32 %v867, 0.0
      %v900 = vmax.f32 %v868, 0.0
      %v901 = vmax.f32 %v869, 0.0
      %v902 = vmax.f32 %v870, 0.0
      %v903 = vmax.f32 %v871, 0.0
      %v904 = vmax.f32 %v872, 0.0
      %v905 = vmax.f32 %v873, 0.0
      %v906 = vmax.f32 %v874, 0.0
      %v907 = vmax.f32 %v875, 0.0
      %v908 = vmax.f32 %v876, 0.0
      %v909 = vmax.f32 %v877, 0.0
      %v910 = vmax.f32 %v878, 0.0
      %v911 = vmax.f32 %v879, 0.0
      %v912 = vmax.f32 %v880, 0.0
      %v913 = vmax.f32 %v881, 0.0
      %v914 = vmax.f32 %v882, 0.0
      %v915 = vpack.c.bf16 %v884, %v883
      %v916 = vpack.c.bf16 %v886, %v885
      %v917 = vpack.c.bf16 %v888, %v887
      %v918 = vpack.c.bf16 %v890, %v889
      %v919 = vpack.c.bf16 %v892, %v891
      %v920 = vpack.c.bf16 %v894, %v893
      %v921 = vpack.c.bf16 %v896, %v895
      %v922 = vpack.c.bf16 %v898, %v897
      %v923 = vpack.c.bf16 %v900, %v899
      %v924 = vpack.c.bf16 %v902, %v901
      %v925 = vpack.c.bf16 %v904, %v903
      %v926 = vpack.c.bf16 %v906, %v905
      %v927 = vpack.c.bf16 %v908, %v907
      %v928 = vpack.c.bf16 %v910, %v909
      %v929 = vpack.c.bf16 %v912, %v911
      %v930 = vpack.c.bf16 %v914, %v913
      %v931 = vld [vmem:[%s2] sm:$0xf]
      %v932 = vld [vmem:[%s2 + $0x4] sm:$0xf]
      %v933 = vld [vmem:[%s2 + $0x8] sm:$0xf]
      %v934 = vld [vmem:[%s2 + $0xc] sm:$0xf]
      %v935 = vld [vmem:[%s2 + $0x10] sm:$0xf]
      %v936 = vld [vmem:[%s2 + $0x14] sm:$0xf]
      %v937 = vld [vmem:[%s2 + $0x18] sm:$0xf]
      %v938 = vld [vmem:[%s2 + $0x1c] sm:$0xf]
      %v939 = vld [vmem:[%s2 + $0x20] sm:$0xf]
      %v940 = vld [vmem:[%s2 + $0x24] sm:$0xf]
      %v941 = vld [vmem:[%s2 + $0x28] sm:$0xf]
      %v942 = vld [vmem:[%s2 + $0x2c] sm:$0xf]
      %v943 = vld [vmem:[%s2 + $0x30] sm:$0xf]
      %v944 = vld [vmem:[%s2 + $0x34] sm:$0xf]
      %v945 = vld [vmem:[%s2 + $0x38] sm:$0xf]
      %v946 = vld [vmem:[%s2 + $0x3c] sm:$0xf]
      %v947 = vld [vmem:[%s3 + $0x1] sm:$0x1]
      %v948 = vlaneseq
      %v949 = vshrl.u32 %v948, 7
      %v950 = vsub.s32 0, %v949
      %v951 = vrot.slane %v947, %v950
      %v968 = vunpack.c.l.b16 %v931
      %v969 = vunpack.c.l.b16 %v932
      %v970 = vunpack.c.l.b16 %v933
      %v971 = vunpack.c.l.b16 %v934
      %v972 = vunpack.c.l.b16 %v935
      %v973 = vunpack.c.l.b16 %v936
      %v974 = vunpack.c.l.b16 %v937
      %v975 = vunpack.c.l.b16 %v938
      %v976 = vunpack.c.l.b16 %v939
      %v977 = vunpack.c.l.b16 %v940
      %v978 = vunpack.c.l.b16 %v941
      %v979 = vunpack.c.l.b16 %v942
      %v980 = vunpack.c.l.b16 %v943
      %v981 = vunpack.c.l.b16 %v944
      %v982 = vunpack.c.l.b16 %v945
      %v983 = vunpack.c.l.b16 %v946
      %v984 = vpack.c.b16 %v969, %v968
      %v985 = vpack.c.b16 %v971, %v970
      %v986 = vpack.c.b16 %v973, %v972
      %v987 = vpack.c.b16 %v975, %v974
      %v988 = vpack.c.b16 %v977, %v976
      %v989 = vpack.c.b16 %v979, %v978
      %v990 = vpack.c.b16 %v981, %v980
      %v991 = vpack.c.b16 %v983, %v982
      %1000 = vmatprep.subr.bf16.mxu0 0
      %1001 = vmatpush1.bf16.msra.mxu0 %v984
      %1002 = vmatprep.subr.bf16.mxu0 0
      %1003 = vmatpush1.bf16.msra.mxu0 %v985
      %1004 = vmatprep.subr.bf16.mxu0 0
      %1005 = vmatpush1.bf16.msra.mxu0 %v986
      %1006 = vmatprep.subr.bf16.mxu0 0
      %1007 = vmatpush1.bf16.msra.mxu0 %v987
      %1008 = vmatprep.subr.bf16.mxu0 0
      %1009 = vmatpush1.bf16.msra.mxu0 %v988
      %1010 = vmatprep.subr.bf16.mxu0 0
      %1011 = vmatpush1.bf16.msra.mxu0 %v989
      %1012 = vmatprep.subr.bf16.mxu0 0
      %1013 = vmatpush1.bf16.msra.mxu0 %v990
      %1014 = vmatprep.subr.bf16.mxu0 0
      %1015 = vmatpush1.bf16.msra.mxu0 %v991
      %1016 = vmatprep.subr.bf16.mxu0 0
      %1017 = vmatpush1.bf16.msra.mxu0 0
      %1018 = vmatprep.subr.bf16.mxu0 0
      %1019 = vmatpush1.bf16.msra.mxu0 0
      %1020 = vmatprep.subr.bf16.mxu0 0
      %1021 = vmatpush1.bf16.msra.mxu0 0
      %1022 = vmatprep.subr.bf16.mxu0 0
      %1023 = vmatpush1.bf16.msra.mxu0 0
      %1024 = vmatprep.subr.bf16.mxu0 0
      %1025 = vmatpush1.bf16.msra.mxu0 0
      %1026 = vmatprep.subr.bf16.mxu0 0
      %1027 = vmatpush1.bf16.msra.mxu0 0
      %1028 = vmatprep.subr.bf16.mxu0 0
      %1029 = vmatpush1.bf16.msra.mxu0 0
      %1030 = vmatprep.subr.bf16.mxu0 0
      %1031 = vmatpush1.bf16.msra.mxu0 0
      %1032 = vmatprep.mubr.bf16.mxu0 0
      %1033 = vmatmul.mubr.bf16.gmra.mrb[0].mxu0 %v915
      %v1034 = vpop.f32.mrb[0].mxu0
      %v1035 = vadd.f32 %v951, %v1034
      %v1036 = vpop.f32.mrb[0].mxu0
      %v1037 = vpop.f32.mrb[0].mxu0
      %v1038 = vadd.f32 %v951, %v1037
      %v1039 = vpop.f32.mrb[0].mxu0
      %1040 = vmatprep.mubr.bf16.mxu0 0
      %1041 = vmatmul.mubr.bf16.gmra.mrb[0].mxu0 %v916
      %v1042 = vpop.f32.mrb[0].mxu0
      %v1043 = vadd.f32 %v951, %v1042
      %v1044 = vpop.f32.mrb[0].mxu0
      %v1045 = vpop.f32.mrb[0].mxu0
      %v1046 = vadd.f32 %v951, %v1045
      %v1047 = vpop.f32.mrb[0].mxu0
      %1048 = vmatprep.mubr.bf16.mxu0 0
      %1049 = vmatmul.mubr.bf16.gmra.mrb[0].mxu0 %v917
      %v1050 = vpop.f32.mrb[0].mxu0
      %v1051 = vadd.f32 %v951, %v1050
      %v1052 = vpop.f32.mrb[0].mxu0
      %v1053 = vpop.f32.mrb[0].mxu0
      %v1054 = vadd.f32 %v951, %v1053
      %v1055 = vpop.f32.mrb[0].mxu0
      %1056 = vmatprep.mubr.bf16.mxu0 0
      %1057 = vmatmul.mubr.bf16.gmra.mrb[0].mxu0 %v918
      %v1058 = vpop.f32.mrb[0].mxu0
      %v1059 = vadd.f32 %v951, %v1058
      %v1060 = vpop.f32.mrb[0].mxu0
      %v1061 = vpop.f32.mrb[0].mxu0
      %v1062 = vadd.f32 %v951, %v1061
      %v1063 = vpop.f32.mrb[0].mxu0
      %1064 = vmatprep.mubr.bf16.mxu0 0
      %1065 = vmatmul.mubr.bf16.gmra.mrb[0].mxu0 %v919
      %v1066 = vpop.f32.mrb[0].mxu0
      %v1067 = vadd.f32 %v951, %v1066
      %v1068 = vpop.f32.mrb[0].mxu0
      %v1069 = vpop.f32.mrb[0].mxu0
      %v1070 = vadd.f32 %v951, %v1069
      %v1071 = vpop.f32.mrb[0].mxu0
      %1072 = vmatprep.mubr.bf16.mxu0 0
      %1073 = vmatmul.mubr.bf16.gmra.mrb[0].mxu0 %v920
      %v1074 = vpop.f32.mrb[0].mxu0
      %v1075 = vadd.f32 %v951, %v1074
      %v1076 = vpop.f32.mrb[0].mxu0
      %v1077 = vpop.f32.mrb[0].mxu0
      %v1078 = vadd.f32 %v951, %v1077
      %v1079 = vpop.f32.mrb[0].mxu0
      %1080 = vmatprep.mubr.bf16.mxu0 0
      %1081 = vmatmul.mubr.bf16.gmra.mrb[0].mxu0 %v921
      %v1082 = vpop.f32.mrb[0].mxu0
      %v1083 = vadd.f32 %v951, %v1082
      %v1084 = vpop.f32.mrb[0].mxu0
      %v1085 = vpop.f32.mrb[0].mxu0
      %v1086 = vadd.f32 %v951, %v1085
      %v1087 = vpop.f32.mrb[0].mxu0
      %1088 = vmatprep.mubr.bf16.mxu0 0
      %1089 = vmatmul.mubr.bf16.gmra.mrb[0].mxu0 %v922
      %v1090 = vpop.f32.mrb[0].mxu0
      %v1091 = vadd.f32 %v951, %v1090
      %v1092 = vpop.f32.mrb[0].mxu0
      %v1093 = vpop.f32.mrb[0].mxu0
      %v1094 = vadd.f32 %v951, %v1093
      %v1095 = vpop.f32.mrb[0].mxu0
      %1096 = vmatprep.mubr.bf16.mxu0 0
      %1097 = vmatmul.mubr.bf16.gmra.mrb[0].mxu0 %v923
      %v1098 = vpop.f32.mrb[0].mxu0
      %v1099 = vadd.f32 %v951, %v1098
      %v1100 = vpop.f32.mrb[0].mxu0
      %v1101 = vpop.f32.mrb[0].mxu0
      %v1102 = vadd.f32 %v951, %v1101
      %v1103 = vpop.f32.mrb[0].mxu0
      %1104 = vmatprep.mubr.bf16.mxu0 0
      %1105 = vmatmul.mubr.bf16.gmra.mrb[0].mxu0 %v924
      %v1106 = vpop.f32.mrb[0].mxu0
      %v1107 = vadd.f32 %v951, %v1106
      %v1108 = vpop.f32.mrb[0].mxu0
      %v1109 = vpop.f32.mrb[0].mxu0
      %v1110 = vadd.f32 %v951, %v1109
      %v1111 = vpop.f32.mrb[0].mxu0
      %1112 = vmatprep.mubr.bf16.mxu0 0
      %1113 = vmatmul.mubr.bf16.gmra.mrb[0].mxu0 %v925
      %v1114 = vpop.f32.mrb[0].mxu0
      %v1115 = vadd.f32 %v951, %v1114
      %v1116 = vpop.f32.mrb[0].mxu0
      %v1117 = vpop.f32.mrb[0].mxu0
      %v1118 = vadd.f32 %v951, %v1117
      %v1119 = vpop.f32.mrb[0].mxu0
      %1120 = vmatprep.mubr.bf16.mxu0 0
      %1121 = vmatmul.mubr.bf16.gmra.mrb[0].mxu0 %v926
      %v1122 = vpop.f32.mrb[0].mxu0
      %v1123 = vadd.f32 %v951, %v1122
      %v1124 = vpop.f32.mrb[0].mxu0
      %v1125 = vpop.f32.mrb[0].mxu0
      %v1126 = vadd.f32 %v951, %v1125
      %v1127 = vpop.f32.mrb[0].mxu0
      %1128 = vmatprep.mubr.bf16.mxu0 0
      %1129 = vmatmul.mubr.bf16.gmra.mrb[0].mxu0 %v927
      %v1130 = vpop.f32.mrb[0].mxu0
      %v1131 = vadd.f32 %v951, %v1130
      %v1132 = vpop.f32.mrb[0].mxu0
      %v1133 = vpop.f32.mrb[0].mxu0
      %v1134 = vadd.f32 %v951, %v1133
      %v1135 = vpop.f32.mrb[0].mxu0
      %1136 = vmatprep.mubr.bf16.mxu0 0
      %1137 = vmatmul.mubr.bf16.gmra.mrb[0].mxu0 %v928
      %v1138 = vpop.f32.mrb[0].mxu0
      %v1139 = vadd.f32 %v951, %v1138
      %v1140 = vpop.f32.mrb[0].mxu0
      %v1141 = vpop.f32.mrb[0].mxu0
      %v1142 = vadd.f32 %v951, %v1141
      %v1143 = vpop.f32.mrb[0].mxu0
      %1144 = vmatprep.mubr.bf16.mxu0 0
      %1145 = vmatmul.mubr.bf16.gmra.mrb[0].mxu0 %v929
      %v1146 = vpop.f32.mrb[0].mxu0
      %v1147 = vadd.f32 %v951, %v1146
      %v1148 = vpop.f32.mrb[0].mxu0
      %v1149 = vpop.f32.mrb[0].mxu0
      %v1150 = vadd.f32 %v951, %v1149
      %v1151 = vpop.f32.mrb[0].mxu0
      %1152 = vmatprep.mubr.bf16.mxu0 0
      %1153 = vmatmul.mubr.bf16.gmra.mrb[0].mxu0 %v930
      %v1154 = vpop.f32.mrb[0].mxu0
      %v1155 = vadd.f32 %v951, %v1154
      %v1156 = vpop.f32.mrb[0].mxu0
      %v1157 = vpop.f32.mrb[0].mxu0
      %v1158 = vadd.f32 %v951, %v1157
      %v1159 = vpop.f32.mrb[0].mxu0
      %1160 = vdwg.mxu0
      %v1161 = vmax.f32 %v1035, 0.0
      %v1162 = vmax.f32 %v1038, 0.0
      %v1163 = vmax.f32 %v1043, 0.0
      %v1164 = vmax.f32 %v1046, 0.0
      %v1165 = vmax.f32 %v1051, 0.0
      %v1166 = vmax.f32 %v1054, 0.0
      %v1167 = vmax.f32 %v1059, 0.0
      %v1168 = vmax.f32 %v1062, 0.0
      %v1169 = vmax.f32 %v1067, 0.0
      %v1170 = vmax.f32 %v1070, 0.0
      %v1171 = vmax.f32 %v1075, 0.0
      %v1172 = vmax.f32 %v1078, 0.0
      %v1173 = vmax.f32 %v1083, 0.0
      %v1174 = vmax.f32 %v1086, 0.0
      %v1175 = vmax.f32 %v1091, 0.0
      %v1176 = vmax.f32 %v1094, 0.0
      %v1177 = vmax.f32 %v1099, 0.0
      %v1178 = vmax.f32 %v1102, 0.0
      %v1179 = vmax.f32 %v1107, 0.0
      %v1180 = vmax.f32 %v1110, 0.0
      %v1181 = vmax.f32 %v1115, 0.0
      %v1182 = vmax.f32 %v1118, 0.0
      %v1183 = vmax.f32 %v1123, 0.0
      %v1184 = vmax.f32 %v1126, 0.0
      %v1185 = vmax.f32 %v1131, 0.0
      %v1186 = vmax.f32 %v1134, 0.0
      %v1187 = vmax.f32 %v1139, 0.0
      %v1188 = vmax.f32 %v1142, 0.0
      %v1189 = vmax.f32 %v1147, 0.0
      %v1190 = vmax.f32 %v1150, 0.0
      %v1191 = vmax.f32 %v1155, 0.0
      %v1192 = vmax.f32 %v1158, 0.0
      %v1193 = vpack.c.bf16 %v1162, %v1161
      %v1194 = vpack.c.bf16 %v1164, %v1163
      %v1195 = vpack.c.bf16 %v1166, %v1165
      %v1196 = vpack.c.bf16 %v1168, %v1167
      %v1197 = vpack.c.bf16 %v1170, %v1169
      %v1198 = vpack.c.bf16 %v1172, %v1171
      %v1199 = vpack.c.bf16 %v1174, %v1173
      %v1200 = vpack.c.bf16 %v1176, %v1175
      %v1201 = vpack.c.bf16 %v1178, %v1177
      %v1202 = vpack.c.bf16 %v1180, %v1179
      %v1203 = vpack.c.bf16 %v1182, %v1181
      %v1204 = vpack.c.bf16 %v1184, %v1183
      %v1205 = vpack.c.bf16 %v1186, %v1185
      %v1206 = vpack.c.bf16 %v1188, %v1187
      %v1207 = vpack.c.bf16 %v1190, %v1189
      %v1208 = vpack.c.bf16 %v1192, %v1191
      %s1209 = scalar_lea.vmem %s2, 64
      %v1210 = vld [vmem:[%s1209] sm:$0xf]
      %v1211 = vld [vmem:[%s1209 + $0x4] sm:$0xf]
      %v1212 = vld [vmem:[%s1209 + $0x8] sm:$0xf]
      %v1213 = vld [vmem:[%s1209 + $0xc] sm:$0xf]
      %v1214 = vld [vmem:[%s1209 + $0x10] sm:$0xf]
      %v1215 = vld [vmem:[%s1209 + $0x14] sm:$0xf]
      %v1216 = vld [vmem:[%s1209 + $0x18] sm:$0xf]
      %v1217 = vld [vmem:[%s1209 + $0x1c] sm:$0xf]
      %v1218 = vld [vmem:[%s1209 + $0x20] sm:$0xf]
      %v1219 = vld [vmem:[%s1209 + $0x24] sm:$0xf]
      %v1220 = vld [vmem:[%s1209 + $0x28] sm:$0xf]
      %v1221 = vld [vmem:[%s1209 + $0x2c] sm:$0xf]
      %v1222 = vld [vmem:[%s1209 + $0x30] sm:$0xf]
      %v1223 = vld [vmem:[%s1209 + $0x34] sm:$0xf]
      %v1224 = vld [vmem:[%s1209 + $0x38] sm:$0xf]
      %v1225 = vld [vmem:[%s1209 + $0x3c] sm:$0xf]
      %v1226 = vld [vmem:[%s3 + $0x2] sm:$0x1]
      %v1227 = vlaneseq
      %v1228 = vshrl.u32 %v1227, 7
      %v1229 = vsub.s32 0, %v1228
      %v1230 = vrot.slane %v1226, %v1229
      %v1247 = vunpack.c.l.b16 %v1210
      %v1248 = vunpack.c.l.b16 %v1211
      %v1249 = vunpack.c.l.b16 %v1212
      %v1250 = vunpack.c.l.b16 %v1213
      %v1251 = vunpack.c.l.b16 %v1214
      %v1252 = vunpack.c.l.b16 %v1215
      %v1253 = vunpack.c.l.b16 %v1216
      %v1254 = vunpack.c.l.b16 %v1217
      %v1255 = vunpack.c.l.b16 %v1218
      %v1256 = vunpack.c.l.b16 %v1219
      %v1257 = vunpack.c.l.b16 %v1220
      %v1258 = vunpack.c.l.b16 %v1221
      %v1259 = vunpack.c.l.b16 %v1222
      %v1260 = vunpack.c.l.b16 %v1223
      %v1261 = vunpack.c.l.b16 %v1224
      %v1262 = vunpack.c.l.b16 %v1225
      %v1263 = vpack.c.b16 %v1248, %v1247
      %v1264 = vpack.c.b16 %v1250, %v1249
      %v1265 = vpack.c.b16 %v1252, %v1251
      %v1266 = vpack.c.b16 %v1254, %v1253
      %v1267 = vpack.c.b16 %v1256, %v1255
      %v1268 = vpack.c.b16 %v1258, %v1257
      %v1269 = vpack.c.b16 %v1260, %v1259
      %v1270 = vpack.c.b16 %v1262, %v1261
      %1279 = vmatprep.subr.bf16.mxu0 0
      %1280 = vmatpush1.bf16.msra.mxu0 %v1263
      %1281 = vmatprep.subr.bf16.mxu0 0
      %1282 = vmatpush1.bf16.msra.mxu0 %v1264
      %1283 = vmatprep.subr.bf16.mxu0 0
      %1284 = vmatpush1.bf16.msra.mxu0 %v1265
      %1285 = vmatprep.subr.bf16.mxu0 0
      %1286 = vmatpush1.bf16.msra.mxu0 %v1266
      %1287 = vmatprep.subr.bf16.mxu0 0
      %1288 = vmatpush1.bf16.msra.mxu0 %v1267
      %1289 = vmatprep.subr.bf16.mxu0 0
      %1290 = vmatpush1.bf16.msra.mxu0 %v1268
      %1291 = vmatprep.subr.bf16.mxu0 0
      %1292 = vmatpush1.bf16.msra.mxu0 %v1269
      %1293 = vmatprep.subr.bf16.mxu0 0
      %1294 = vmatpush1.bf16.msra.mxu0 %v1270
      %1295 = vmatprep.subr.bf16.mxu0 0
      %1296 = vmatpush1.bf16.msra.mxu0 0
      %1297 = vmatprep.subr.bf16.mxu0 0
      %1298 = vmatpush1.bf16.msra.mxu0 0
      %1299 = vmatprep.subr.bf16.mxu0 0
      %1300 = vmatpush1.bf16.msra.mxu0 0
      %1301 = vmatprep.subr.bf16.mxu0 0
      %1302 = vmatpush1.bf16.msra.mxu0 0
      %1303 = vmatprep.subr.bf16.mxu0 0
      %1304 = vmatpush1.bf16.msra.mxu0 0
      %1305 = vmatprep.subr.bf16.mxu0 0
      %1306 = vmatpush1.bf16.msra.mxu0 0
      %1307 = vmatprep.subr.bf16.mxu0 0
      %1308 = vmatpush1.bf16.msra.mxu0 0
      %1309 = vmatprep.subr.bf16.mxu0 0
      %1310 = vmatpush1.bf16.msra.mxu0 0
      %1311 = vmatprep.mubr.bf16.mxu0 0
      %1312 = vmatmul.mubr.bf16.gmra.mrb[0].mxu0 %v1193
      %v1313 = vpop.f32.mrb[0].mxu0
      %v1314 = vadd.f32 %v1230, %v1313
      %v1315 = vpop.f32.mrb[0].mxu0
      %v1316 = vpop.f32.mrb[0].mxu0
      %v1317 = vadd.f32 %v1230, %v1316
      %v1318 = vpop.f32.mrb[0].mxu0
      %1319 = vmatprep.mubr.bf16.mxu0 0
      %1320 = vmatmul.mubr.bf16.gmra.mrb[0].mxu0 %v1194
      %v1321 = vpop.f32.mrb[0].mxu0
      %v1322 = vadd.f32 %v1230, %v1321
      %v1323 = vpop.f32.mrb[0].mxu0
      %v1324 = vpop.f32.mrb[0].mxu0
      %v1325 = vadd.f32 %v1230, %v1324
      %v1326 = vpop.f32.mrb[0].mxu0
      %1327 = vmatprep.mubr.bf16.mxu0 0
      %1328 = vmatmul.mubr.bf16.gmra.mrb[0].mxu0 %v1195
      %v1329 = vpop.f32.mrb[0].mxu0
      %v1330 = vadd.f32 %v1230, %v1329
      %v1331 = vpop.f32.mrb[0].mxu0
      %v1332 = vpop.f32.mrb[0].mxu0
      %v1333 = vadd.f32 %v1230, %v1332
      %v1334 = vpop.f32.mrb[0].mxu0
      %1335 = vmatprep.mubr.bf16.mxu0 0
      %1336 = vmatmul.mubr.bf16.gmra.mrb[0].mxu0 %v1196
      %v1337 = vpop.f32.mrb[0].mxu0
      %v1338 = vadd.f32 %v1230, %v1337
      %v1339 = vpop.f32.mrb[0].mxu0
      %v1340 = vpop.f32.mrb[0].mxu0
      %v1341 = vadd.f32 %v1230, %v1340
      %v1342 = vpop.f32.mrb[0].mxu0
      %1343 = vmatprep.mubr.bf16.mxu0 0
      %1344 = vmatmul.mubr.bf16.gmra.mrb[0].mxu0 %v1197
      %v1345 = vpop.f32.mrb[0].mxu0
      %v1346 = vadd.f32 %v1230, %v1345
      %v1347 = vpop.f32.mrb[0].mxu0
      %v1348 = vpop.f32.mrb[0].mxu0
      %v1349 = vadd.f32 %v1230, %v1348
      %v1350 = vpop.f32.mrb[0].mxu0
      %1351 = vmatprep.mubr.bf16.mxu0 0
      %1352 = vmatmul.mubr.bf16.gmra.mrb[0].mxu0 %v1198
      %v1353 = vpop.f32.mrb[0].mxu0
      %v1354 = vadd.f32 %v1230, %v1353
      %v1355 = vpop.f32.mrb[0].mxu0
      %v1356 = vpop.f32.mrb[0].mxu0
      %v1357 = vadd.f32 %v1230, %v1356
      %v1358 = vpop.f32.mrb[0].mxu0
      %1359 = vmatprep.mubr.bf16.mxu0 0
      %1360 = vmatmul.mubr.bf16.gmra.mrb[0].mxu0 %v1199
      %v1361 = vpop.f32.mrb[0].mxu0
      %v1362 = vadd.f32 %v1230, %v1361
      %v1363 = vpop.f32.mrb[0].mxu0
      %v1364 = vpop.f32.mrb[0].mxu0
      %v1365 = vadd.f32 %v1230, %v1364
      %v1366 = vpop.f32.mrb[0].mxu0
      %1367 = vmatprep.mubr.bf16.mxu0 0
      %1368 = vmatmul.mubr.bf16.gmra.mrb[0].mxu0 %v1200
      %v1369 = vpop.f32.mrb[0].mxu0
      %v1370 = vadd.f32 %v1230, %v1369
      %v1371 = vpop.f32.mrb[0].mxu0
      %v1372 = vpop.f32.mrb[0].mxu0
      %v1373 = vadd.f32 %v1230, %v1372
      %v1374 = vpop.f32.mrb[0].mxu0
      %1375 = vmatprep.mubr.bf16.mxu0 0
      %1376 = vmatmul.mubr.bf16.gmra.mrb[0].mxu0 %v1201
      %v1377 = vpop.f32.mrb[0].mxu0
      %v1378 = vadd.f32 %v1230, %v1377
      %v1379 = vpop.f32.mrb[0].mxu0
      %v1380 = vpop.f32.mrb[0].mxu0
      %v1381 = vadd.f32 %v1230, %v1380
      %v1382 = vpop.f32.mrb[0].mxu0
      %1383 = vmatprep.mubr.bf16.mxu0 0
      %1384 = vmatmul.mubr.bf16.gmra.mrb[0].mxu0 %v1202
      %v1385 = vpop.f32.mrb[0].mxu0
      %v1386 = vadd.f32 %v1230, %v1385
      %v1387 = vpop.f32.mrb[0].mxu0
      %v1388 = vpop.f32.mrb[0].mxu0
      %v1389 = vadd.f32 %v1230, %v1388
      %v1390 = vpop.f32.mrb[0].mxu0
      %1391 = vmatprep.mubr.bf16.mxu0 0
      %1392 = vmatmul.mubr.bf16.gmra.mrb[0].mxu0 %v1203
      %v1393 = vpop.f32.mrb[0].mxu0
      %v1394 = vadd.f32 %v1230, %v1393
      %v1395 = vpop.f32.mrb[0].mxu0
      %v1396 = vpop.f32.mrb[0].mxu0
      %v1397 = vadd.f32 %v1230, %v1396
      %v1398 = vpop.f32.mrb[0].mxu0
      %1399 = vmatprep.mubr.bf16.mxu0 0
      %1400 = vmatmul.mubr.bf16.gmra.mrb[0].mxu0 %v1204
      %v1401 = vpop.f32.mrb[0].mxu0
      %v1402 = vadd.f32 %v1230, %v1401
      %v1403 = vpop.f32.mrb[0].mxu0
      %v1404 = vpop.f32.mrb[0].mxu0
      %v1405 = vadd.f32 %v1230, %v1404
      %v1406 = vpop.f32.mrb[0].mxu0
      %1407 = vmatprep.mubr.bf16.mxu0 0
      %1408 = vmatmul.mubr.bf16.gmra.mrb[0].mxu0 %v1205
      %v1409 = vpop.f32.mrb[0].mxu0
      %v1410 = vadd.f32 %v1230, %v1409
      %v1411 = vpop.f32.mrb[0].mxu0
      %v1412 = vpop.f32.mrb[0].mxu0
      %v1413 = vadd.f32 %v1230, %v1412
      %v1414 = vpop.f32.mrb[0].mxu0
      %1415 = vmatprep.mubr.bf16.mxu0 0
      %1416 = vmatmul.mubr.bf16.gmra.mrb[0].mxu0 %v1206
      %v1417 = vpop.f32.mrb[0].mxu0
      %v1418 = vadd.f32 %v1230, %v1417
      %v1419 = vpop.f32.mrb[0].mxu0
      %v1420 = vpop.f32.mrb[0].mxu0
      %v1421 = vadd.f32 %v1230, %v1420
      %v1422 = vpop.f32.mrb[0].mxu0
      %1423 = vmatprep.mubr.bf16.mxu0 0
      %1424 = vmatmul.mubr.bf16.gmra.mrb[0].mxu0 %v1207
      %v1425 = vpop.f32.mrb[0].mxu0
      %v1426 = vadd.f32 %v1230, %v1425
      %v1427 = vpop.f32.mrb[0].mxu0
      %v1428 = vpop.f32.mrb[0].mxu0
      %v1429 = vadd.f32 %v1230, %v1428
      %v1430 = vpop.f32.mrb[0].mxu0
      %1431 = vmatprep.mubr.bf16.mxu0 0
      %1432 = vmatmul.mubr.bf16.gmra.mrb[0].mxu0 %v1208
      %v1433 = vpop.f32.mrb[0].mxu0
      %v1434 = vadd.f32 %v1230, %v1433
      %v1435 = vpop.f32.mrb[0].mxu0
      %v1436 = vpop.f32.mrb[0].mxu0
      %v1437 = vadd.f32 %v1230, %v1436
      %v1438 = vpop.f32.mrb[0].mxu0
      %1439 = vdwg.mxu0
      %v1440 = vmax.f32 %v1314, 0.0
      %v1441 = vmax.f32 %v1317, 0.0
      %v1442 = vmax.f32 %v1322, 0.0
      %v1443 = vmax.f32 %v1325, 0.0
      %v1444 = vmax.f32 %v1330, 0.0
      %v1445 = vmax.f32 %v1333, 0.0
      %v1446 = vmax.f32 %v1338, 0.0
      %v1447 = vmax.f32 %v1341, 0.0
      %v1448 = vmax.f32 %v1346, 0.0
      %v1449 = vmax.f32 %v1349, 0.0
      %v1450 = vmax.f32 %v1354, 0.0
      %v1451 = vmax.f32 %v1357, 0.0
      %v1452 = vmax.f32 %v1362, 0.0
      %v1453 = vmax.f32 %v1365, 0.0
      %v1454 = vmax.f32 %v1370, 0.0
      %v1455 = vmax.f32 %v1373, 0.0
      %v1456 = vmax.f32 %v1378, 0.0
      %v1457 = vmax.f32 %v1381, 0.0
      %v1458 = vmax.f32 %v1386, 0.0
      %v1459 = vmax.f32 %v1389, 0.0
      %v1460 = vmax.f32 %v1394, 0.0
      %v1461 = vmax.f32 %v1397, 0.0
      %v1462 = vmax.f32 %v1402, 0.0
      %v1463 = vmax.f32 %v1405, 0.0
      %v1464 = vmax.f32 %v1410, 0.0
      %v1465 = vmax.f32 %v1413, 0.0
      %v1466 = vmax.f32 %v1418, 0.0
      %v1467 = vmax.f32 %v1421, 0.0
      %v1468 = vmax.f32 %v1426, 0.0
      %v1469 = vmax.f32 %v1429, 0.0
      %v1470 = vmax.f32 %v1434, 0.0
      %v1471 = vmax.f32 %v1437, 0.0
      %v1472 = vmax.f32 %v1440, %v1444
      %v1473 = vmax.f32 %v1441, %v1445
      %v1474 = vmax.f32 %v1442, %v1446
      %v1475 = vmax.f32 %v1443, %v1447
      %v1476 = vmax.f32 %v1472, %v1448
      %v1477 = vmax.f32 %v1473, %v1449
      %v1478 = vmax.f32 %v1474, %v1450
      %v1479 = vmax.f32 %v1475, %v1451
      %v1480 = vmax.f32 %v1476, %v1452
      %v1481 = vmax.f32 %v1477, %v1453
      %v1482 = vmax.f32 %v1478, %v1454
      %v1483 = vmax.f32 %v1479, %v1455
      %v1484 = vmax.f32 %v1480, %v1456
      %v1485 = vmax.f32 %v1481, %v1457
      %v1486 = vmax.f32 %v1482, %v1458
      %v1487 = vmax.f32 %v1483, %v1459
      %v1488 = vmax.f32 %v1484, %v1460
      %v1489 = vmax.f32 %v1485, %v1461
      %v1490 = vmax.f32 %v1486, %v1462
      %v1491 = vmax.f32 %v1487, %v1463
      %v1492 = vmax.f32 %v1488, %v1464
      %v1493 = vmax.f32 %v1489, %v1465
      %v1494 = vmax.f32 %v1490, %v1466
      %v1495 = vmax.f32 %v1491, %v1467
      %v1496 = vmax.f32 %v1492, %v1468
      %v1497 = vmax.f32 %v1493, %v1469
      %v1498 = vmax.f32 %v1494, %v1470
      %v1499 = vmax.f32 %v1495, %v1471
      %v1500 = vmax.f32 %v1496, %v1497
      %v1501 = vmax.f32 %v1498, %v1499
      %v1502 = vmax.f32 %v1500, %v1501
      %v1503 = vrot.slane %v1502, 4
      %v1504 = vmax.f32 %v1502, %v1503
      %v1505 = vrot.slane %v1504, 2
      %v1506 = vmax.f32 %v1504, %v1505
      %v1507 = vrot.slane %v1506, 1
      %v1508 = vmax.f32 %v1506, %v1507
      %p1509 = scmp.eq.s32.totalorder %s20, 0
      // Predicated region
      $region37: #{articulation_estimator.2} parent=35 // pred_check
        %p1510 = pneg %p1509
      $region38: #{articulation_estimator.2} parent=35 // pred_check_branch
        %1512 = sbr.rel (%p1510) target = $region40
      $region39: #{articulation_estimator.2} parent=35 // pred_region
        %1513 = vst [vmem:[%s221] sm:$0x1] -inf
      $region40: #{articulation_estimator.2} parent=35 // pred_fallthru
        _
      %v1514 = vld [vmem:[%s221] sm:$0x1]
      %v1515 = vmax.f32 %v1514, %v1508
      %1516 = vst [vmem:[%s221] sm:$0x1] %v1515
      %p1517 = scmp.lt.s32.totalorder %s19, 1
      %s1518 = scalar_select %p1517, %s19, 1
      %s1519 = scalar_lea.vmem %s4, %s1518
      // Predicated region
      $region41: #{articulation_estimator.2} parent=35 // pred_check
        %p1520 = pneg %p136
      $region42: #{articulation_estimator.2} parent=35 // pred_check_branch
        %1522 = sbr.rel (%p1520) target = $region44
      $region43: #{articulation_estimator.2} parent=35 // pred_region
        _
      $region44: #{articulation_estimator.2} parent=35 // pred_fallthru
        _
    $region36: #{articulation_estimator.2} parent=5 // pred_fallthru
      _
    %p1523 = scmp.le.s32.totalorder 2, %s10
    // Predicated region
    $region45: #{articulation_estimator.2} parent=5 // pred_check
      %p1524 = pneg %p1523
    $region46: #{articulation_estimator.2} parent=5 // pred_check_branch
      %1526 = sbr.rel (%p1524) target = $region48
    $region47: #{articulation_estimator.2} parent=5 // pred_region
      %s1527 = ssub.s32 %s10, 2
      // Predicated region
      $region49: #{articulation_estimator.2} parent=47 // pred_check
        %p1528 = pneg %p142
      $region50: #{articulation_estimator.2} parent=47 // pred_check_branch
        %1530 = sbr.rel (%p1528) target = $region52
      $region51: #{articulation_estimator.2} parent=47 // pred_region
        %p1531 = scmp.lt.s32.totalorder %s21, 1
        %s1532 = scalar_select %p1531, %s21, 1
        %s1533 = scalar_lea.vmem %s4, %s1532
      $region52: #{articulation_estimator.2} parent=47 // pred_fallthru
        _
    $region48: #{articulation_estimator.2} parent=5 // pred_fallthru
      _
  $region6: #{articulation_estimator.2} parent=0 // loop_footer
    %s14 = sadd.s32 1, %s10
  $region7: #{articulation_estimator.2} parent=0 // loop_footer_branch
    %9 = sbr.rel target = $region3
  $region8: #{articulation_estimator.2} parent=0 // loop_exit
    _

// kernel: articulation_estimator.3
$region0: #{articulation_estimator.3}
  #allocation0 [shape = 'u32[]', space=smem, size = 0x4, offset = 0x4, fixed_abs, tag = 'smem constant byte address 0x4 - core index']
  #allocation1 [shape = 'u32[144,128]{1,0:T(1,128)}', space=vmem, size = 0x12000, scoped, tag = 'internal scratch']
  %s0 = inlined_call_operand.vmem [shape: f32[2,1024,3], index: 0, kind: input, shape index: {}]
  %s1 = inlined_call_operand.vmem [shape: f32[2,1,128], index: 1, kind: input, shape index: {}]
  %s2 = inlined_call_operand.vmem [shape: f32[3,128], index: 2, kind: input, shape index: {}]
  %s3 = inlined_call_operand.vmem [shape: bf16[2,128,128], index: 3, kind: input, shape index: {}]
  %s4 = inlined_call_operand.vmem [shape: bf16[2,128,128], index: 4, kind: input, shape index: {}]
  %s5 = inlined_call_operand.vmem [shape: bf16[128,32], index: 5, kind: input, shape index: {}]
  %s6 = inlined_call_operand.vmem [shape: f32[4,128], index: 6, kind: input, shape index: {}]
  %s7 = inlined_call_operand.vmem [shape: f32[1,32], index: 7, kind: input, shape index: {}]
  %s8 = inlined_call_operand.vmem [shape: f32[2,1024,32], index: 8, kind: output, shape index: {}]
  %s9 = sld [smem:[#allocation0]]
  $region65: #{articulation_estimator.3} parent=0
    _
  %s11 = ssub.s32 1, %s9
  %s12 = scalar_select 0, %s11, %s9
  loop: start=0, step=1, limit=10
  $region2: #{articulation_estimator.3} parent=0 // loop_pre_header
    _
  $region3: #{articulation_estimator.3} parent=0 // loop_header
    %s14 = sphi 0, %s18
    %p15 = scmp.ge.s32.totalorder %s14, 10
    %s21 = sphi 0, %s33
    %s22 = sphi 0, %s29
    %s23 = sphi 0, %s21
    %s24 = sphi 0, %s22
    %s25 = sphi 0, %s23
    %s26 = sphi 0, %s24
    %s38 = sphi 0, %s40
    %s41 = sphi 0, %s38
    %s42 = sphi 0, %s41
    %s58 = sphi 0, %s42
    %s64 = sphi 0, %s66
    %s67 = sphi 0, %s64
    %s68 = sphi 0, %s67
    %s84 = sphi 0, %s68
    %s88 = sphi 0, %s88
    %s90 = sphi 0, %s88
    %s91 = sphi 0, %s90
    %s105 = sphi 0, %s91
    %s109 = sphi 0, %s109
    %s111 = sphi 0, %s109
    %s112 = sphi 0, %s111
    %s126 = sphi 0, %s112
    %s130 = sphi 0, %s130
    %s132 = sphi 0, %s130
    %s133 = sphi 0, %s132
    %s147 = sphi 0, %s133
    %s151 = sphi 0, %s151
    %s153 = sphi 0, %s151
    %s154 = sphi 0, %s153
    %s168 = sphi 0, %s154
    %s172 = sphi 0, %s172
    %s174 = sphi 0, %s172
    %s175 = sphi 0, %s174
    %s189 = sphi 0, %s175
    %s193 = sphi 0, %s193
    %s195 = sphi 0, %s193
    %s196 = sphi 0, %s195
    %s210 = sphi 0, %s196
    %s218 = sphi 0, %s220
    %s221 = sphi 0, %s218
    %s222 = sphi 0, %s221
    %s238 = sphi 0, %s222
  $region4: #{articulation_estimator.3} parent=0 // loop_header_branch
    %17 = sbr.rel (%p15) target = $region8
  $region5: #{articulation_estimator.3} parent=0 // loop_body
    %s19 = ssub.s32 %s14, 1
    %s20 = ssub.s32 %s14, 2
    %s27 = sadd.s32 1, %s22
    %p28 = scmp.ge.s32.totalorder %s27, 4
    %s29 = scalar_select %p28, 0, %s27
    %s30 = sadd.s32 1, %s21
    %s31 = scalar_select %p28, %s30, %s21
    %p32 = scmp.ge.s32.totalorder %s31, 2
    %s33 = scalar_select %p32, 0, %s31
    %s34 = ssub.s32 %s21, %s33
    %s35 = ssub.s32 %s22, %s29
    %s36 = sor.u32 %s34, %s35
    %p37 = scmp.eq.s32.totalorder %s36, 0
    %s39 = sadd.s32 %s38, 1
    %s40 = scalar_select %p37, %s38, %s39
    %p43 = pneg %p37
    %p44 = scmp.eq.s32.totalorder %s14, 7
    %p45 = por %p43, %p44
    %p46 = scmp.ne.s32.totalorder %s38, %s41
    %p47 = scmp.eq.s32.totalorder %s14, 0
    %p48 = por %p46, %p47
    %p49 = scmp.ne.s32.totalorder %s38, %s41
    %p50 = scmp.eq.s32.totalorder %s19, 7
    %p51 = por %p49, %p50
    %p52 = scmp.ne.s32.totalorder %s41, %s42
    %p53 = scmp.eq.s32.totalorder %s19, 0
    %p54 = por %p52, %p53
    %p55 = scmp.ne.s32.totalorder %s41, %s42
    %p56 = scmp.eq.s32.totalorder %s20, 7
    %p57 = por %p55, %p56
    %p59 = scmp.ne.s32.totalorder %s42, %s58
    %p60 = scmp.eq.s32.totalorder %s20, 0
    %p61 = por %p59, %p60
    %s62 = ssub.s32 %s21, %s33
    %p63 = scmp.eq.s32.totalorder %s62, 0
    %s65 = sadd.s32 %s64, 1
    %s66 = scalar_select %p63, %s64, %s65
    %p69 = pneg %p63
    %p70 = scmp.eq.s32.totalorder %s14, 7
    %p71 = por %p69, %p70
    %p72 = scmp.ne.s32.totalorder %s64, %s67
    %p73 = scmp.eq.s32.totalorder %s14, 0
    %p74 = por %p72, %p73
    %p75 = scmp.ne.s32.totalorder %s64, %s67
    %p76 = scmp.eq.s32.totalorder %s19, 7
    %p77 = por %p75, %p76
    %p78 = scmp.ne.s32.totalorder %s67, %s68
    %p79 = scmp.eq.s32.totalorder %s19, 0
    %p80 = por %p78, %p79
    %p81 = scmp.ne.s32.totalorder %s67, %s68
    %p82 = scmp.eq.s32.totalorder %s20, 7
    %p83 = por %p81, %p82
    %p85 = scmp.ne.s32.totalorder %s68, %s84
    %p86 = scmp.eq.s32.totalorder %s20, 0
    %p87 = por %p85, %p86
    %s89 = sadd.s32 %s88, 1
    %p92 = scmp.eq.s32.totalorder %s14, 7
    %p93 = scmp.ne.s32.totalorder %s88, %s90
    %p94 = scmp.eq.s32.totalorder %s14, 0
    %p95 = por %p93, %p94
    %p96 = scmp.ne.s32.totalorder %s88, %s90
    %p97 = scmp.eq.s32.totalorder %s19, 7
    %p98 = por %p96, %p97
    %p99 = scmp.ne.s32.totalorder %s90, %s91
    %p100 = scmp.eq.s32.totalorder %s19, 0
    %p101 = por %p99, %p100
    %p102 = scmp.ne.s32.totalorder %s90, %s91
    %p103 = scmp.eq.s32.totalorder %s20, 7
    %p104 = por %p102, %p103
    %p106 = scmp.ne.s32.totalorder %s91, %s105
    %p107 = scmp.eq.s32.totalorder %s20, 0
    %p108 = por %p106, %p107
    %s110 = sadd.s32 %s109, 1
    %p113 = scmp.eq.s32.totalorder %s14, 7
    %p114 = scmp.ne.s32.totalorder %s109, %s111
    %p115 = scmp.eq.s32.totalorder %s14, 0
    %p116 = por %p114, %p115
    %p117 = scmp.ne.s32.totalorder %s109, %s111
    %p118 = scmp.eq.s32.totalorder %s19, 7
    %p119 = por %p117, %p118
    %p120 = scmp.ne.s32.totalorder %s111, %s112
    %p121 = scmp.eq.s32.totalorder %s19, 0
    %p122 = por %p120, %p121
    %p123 = scmp.ne.s32.totalorder %s111, %s112
    %p124 = scmp.eq.s32.totalorder %s20, 7
    %p125 = por %p123, %p124
    %p127 = scmp.ne.s32.totalorder %s112, %s126
    %p128 = scmp.eq.s32.totalorder %s20, 0
    %p129 = por %p127, %p128
    %s131 = sadd.s32 %s130, 1
    %p134 = scmp.eq.s32.totalorder %s14, 7
    %p135 = scmp.ne.s32.totalorder %s130, %s132
    %p136 = scmp.eq.s32.totalorder %s14, 0
    %p137 = por %p135, %p136
    %p138 = scmp.ne.s32.totalorder %s130, %s132
    %p139 = scmp.eq.s32.totalorder %s19, 7
    %p140 = por %p138, %p139
    %p141 = scmp.ne.s32.totalorder %s132, %s133
    %p142 = scmp.eq.s32.totalorder %s19, 0
    %p143 = por %p141, %p142
    %p144 = scmp.ne.s32.totalorder %s132, %s133
    %p145 = scmp.eq.s32.totalorder %s20, 7
    %p146 = por %p144, %p145
    %p148 = scmp.ne.s32.totalorder %s133, %s147
    %p149 = scmp.eq.s32.totalorder %s20, 0
    %p150 = por %p148, %p149
    %s152 = sadd.s32 %s151, 1
    %p155 = scmp.eq.s32.totalorder %s14, 7
    %p156 = scmp.ne.s32.totalorder %s151, %s153
    %p157 = scmp.eq.s32.totalorder %s14, 0
    %p158 = por %p156, %p157
    %p159 = scmp.ne.s32.totalorder %s151, %s153
    %p160 = scmp.eq.s32.totalorder %s19, 7
    %p161 = por %p159, %p160
    %p162 = scmp.ne.s32.totalorder %s153, %s154
    %p163 = scmp.eq.s32.totalorder %s19, 0
    %p164 = por %p162, %p163
    %p165 = scmp.ne.s32.totalorder %s153, %s154
    %p166 = scmp.eq.s32.totalorder %s20, 7
    %p167 = por %p165, %p166
    %p169 = scmp.ne.s32.totalorder %s154, %s168
    %p170 = scmp.eq.s32.totalorder %s20, 0
    %p171 = por %p169, %p170
    %s173 = sadd.s32 %s172, 1
    %p176 = scmp.eq.s32.totalorder %s14, 7
    %p177 = scmp.ne.s32.totalorder %s172, %s174
    %p178 = scmp.eq.s32.totalorder %s14, 0
    %p179 = por %p177, %p178
    %p180 = scmp.ne.s32.totalorder %s172, %s174
    %p181 = scmp.eq.s32.totalorder %s19, 7
    %p182 = por %p180, %p181
    %p183 = scmp.ne.s32.totalorder %s174, %s175
    %p184 = scmp.eq.s32.totalorder %s19, 0
    %p185 = por %p183, %p184
    %p186 = scmp.ne.s32.totalorder %s174, %s175
    %p187 = scmp.eq.s32.totalorder %s20, 7
    %p188 = por %p186, %p187
    %p190 = scmp.ne.s32.totalorder %s175, %s189
    %p191 = scmp.eq.s32.totalorder %s20, 0
    %p192 = por %p190, %p191
    %s194 = sadd.s32 %s193, 1
    %p197 = scmp.eq.s32.totalorder %s14, 7
    %p198 = scmp.ne.s32.totalorder %s193, %s195
    %p199 = scmp.eq.s32.totalorder %s14, 0
    %p200 = por %p198, %p199
    %p201 = scmp.ne.s32.totalorder %s193, %s195
    %p202 = scmp.eq.s32.totalorder %s19, 7
    %p203 = por %p201, %p202
    %p204 = scmp.ne.s32.totalorder %s195, %s196
    %p205 = scmp.eq.s32.totalorder %s19, 0
    %p206 = por %p204, %p205
    %p207 = scmp.ne.s32.totalorder %s195, %s196
    %p208 = scmp.eq.s32.totalorder %s20, 7
    %p209 = por %p207, %p208
    %p211 = scmp.ne.s32.totalorder %s196, %s210
    %p212 = scmp.eq.s32.totalorder %s20, 0
    %p213 = por %p211, %p212
    %s214 = ssub.s32 %s21, %s33
    %s215 = ssub.s32 %s22, %s29
    %s216 = sor.u32 %s214, %s215
    %p217 = scmp.eq.s32.totalorder %s216, 0
    %s219 = sadd.s32 %s218, 1
    %s220 = scalar_select %p217, %s218, %s219
    %p223 = pneg %p217
    %p224 = scmp.eq.s32.totalorder %s14, 7
    %p225 = por %p223, %p224
    %p226 = scmp.ne.s32.totalorder %s218, %s221
    %p227 = scmp.eq.s32.totalorder %s14, 0
    %p228 = por %p226, %p227
    %p229 = scmp.ne.s32.totalorder %s218, %s221
    %p230 = scmp.eq.s32.totalorder %s19, 7
    %p231 = por %p229, %p230
    %p232 = scmp.ne.s32.totalorder %s221, %s222
    %p233 = scmp.eq.s32.totalorder %s19, 0
    %p234 = por %p232, %p233
    %p235 = scmp.ne.s32.totalorder %s221, %s222
    %p236 = scmp.eq.s32.totalorder %s20, 7
    %p237 = por %p235, %p236
    %p239 = scmp.ne.s32.totalorder %s222, %s238
    %p240 = scmp.eq.s32.totalorder %s20, 0
    %p241 = por %p239, %p240
    %p242 = scmp.le.s32.totalorder 1, %s14
    %p243 = scmp.lt.s32.totalorder %s14, 9
    %p244 = pnand %p242, %p243
    %p245 = pneg %p244
    // Predicated region
    $region9: #{articulation_estimator.3} parent=5 // pred_check
      _
    $region10: #{articulation_estimator.3} parent=5 // pred_check_branch
      %247 = sbr.rel (%p244) target = $region12
    $region11: #{articulation_estimator.3} parent=5 // pred_region
      %s248 = ssub.s32 %s14, 1
      // Predicated region
      $region13: #{articulation_estimator.3} parent=11 // pred_check
        %p249 = pneg %p101
      $region14: #{articulation_estimator.3} parent=11 // pred_check_branch
        %251 = sbr.rel (%p249) target = $region16
      $region15: #{articulation_estimator.3} parent=11 // pred_region
        _
      $region16: #{articulation_estimator.3} parent=11 // pred_fallthru
        _
      // Predicated region
      $region17: #{articulation_estimator.3} parent=11 // pred_check
        %p252 = pneg %p122
      $region18: #{articulation_estimator.3} parent=11 // pred_check_branch
        %254 = sbr.rel (%p252) target = $region20
      $region19: #{articulation_estimator.3} parent=11 // pred_region
        _
      $region20: #{articulation_estimator.3} parent=11 // pred_fallthru
        _
      // Predicated region
      $region21: #{articulation_estimator.3} parent=11 // pred_check
        %p255 = pneg %p143
      $region22: #{articulation_estimator.3} parent=11 // pred_check_branch
        %257 = sbr.rel (%p255) target = $region24
      $region23: #{articulation_estimator.3} parent=11 // pred_region
        _
      $region24: #{articulation_estimator.3} parent=11 // pred_fallthru
        _
      // Predicated region
      $region25: #{articulation_estimator.3} parent=11 // pred_check
        %p258 = pneg %p164
      $region26: #{articulation_estimator.3} parent=11 // pred_check_branch
        %260 = sbr.rel (%p258) target = $region28
      $region27: #{articulation_estimator.3} parent=11 // pred_region
        _
      $region28: #{articulation_estimator.3} parent=11 // pred_fallthru
        _
      // Predicated region
      $region29: #{articulation_estimator.3} parent=11 // pred_check
        %p261 = pneg %p185
      $region30: #{articulation_estimator.3} parent=11 // pred_check_branch
        %263 = sbr.rel (%p261) target = $region32
      $region31: #{articulation_estimator.3} parent=11 // pred_region
        _
      $region32: #{articulation_estimator.3} parent=11 // pred_fallthru
        _
      // Predicated region
      $region33: #{articulation_estimator.3} parent=11 // pred_check
        %p264 = pneg %p206
      $region34: #{articulation_estimator.3} parent=11 // pred_check_branch
        %266 = sbr.rel (%p264) target = $region36
      $region35: #{articulation_estimator.3} parent=11 // pred_region
        _
      $region36: #{articulation_estimator.3} parent=11 // pred_fallthru
        _
    $region12: #{articulation_estimator.3} parent=5 // pred_fallthru
      _
    %p267 = scmp.lt.s32.totalorder %s14, 8
    // Predicated region
    $region37: #{articulation_estimator.3} parent=5 // pred_check
      %p268 = pneg %p267
    $region38: #{articulation_estimator.3} parent=5 // pred_check_branch
      %270 = sbr.rel (%p268) target = $region40
    $region39: #{articulation_estimator.3} parent=5 // pred_region
      // Predicated region
      $region41: #{articulation_estimator.3} parent=39 // pred_check
        %p271 = pneg %p48
      $region42: #{articulation_estimator.3} parent=39 // pred_check_branch
        %273 = sbr.rel (%p271) target = $region44
      $region43: #{articulation_estimator.3} parent=39 // pred_region
        %s274 = smul.u32 32, %s22
        %p275 = scmp.lt.s32.totalorder %s21, 1
        %s276 = scalar_select %p275, %s21, 1
        %p277 = scmp.lt.s32.totalorder %s274, 127
        %s278 = scalar_select %p277, %s274, 127
        %s279 = smul.addr %s276, 128
        %s280 = sadd.s32 %s278, %s279
        %s281 = smul.addr %s280, 8
        %s282 = scalar_lea.vmem %s0, %s281
        %s283 = smul.u32 32, %s22
      $region44: #{articulation_estimator.3} parent=39 // pred_fallthru
        _
      // Predicated region
      $region45: #{articulation_estimator.3} parent=39 // pred_check
        %p284 = pneg %p74
      $region46: #{articulation_estimator.3} parent=39 // pred_check_branch
        %286 = sbr.rel (%p284) target = $region48
      $region47: #{articulation_estimator.3} parent=39 // pred_region
        %p287 = scmp.lt.s32.totalorder %s21, 1
        %s288 = scalar_select %p287, %s21, 1
        %s289 = scalar_lea.vmem %s1, %s288
      $region48: #{articulation_estimator.3} parent=39 // pred_fallthru
        _
    $region40: #{articulation_estimator.3} parent=5 // pred_fallthru
      _
    %p290 = scmp.le.s32.totalorder 1, %s14
    %p291 = scmp.lt.s32.totalorder %s14, 9
    %p292 = pnand %p290, %p291
    %p293 = pneg %p292
    // Predicated region
    $region49: #{articulation_estimator.3} parent=5 // pred_check
      _
    $region50: #{articulation_estimator.3} parent=5 // pred_check_branch
      %295 = sbr.rel (%p292) target = $region52
    $region51: #{articulation_estimator.3} parent=5 // pred_region
      %s296 = ssub.s32 %s14, 1
      %s297 = smul.u32 32, %s24
      %p298 = scmp.lt.s32.totalorder %s23, 1
      %s299 = scalar_select %p298, %s23, 1
      %p300 = scmp.lt.s32.totalorder %s297, 127
      %s301 = scalar_select %p300, %s297, 127
      %s302 = smul.addr %s299, 128
      %s303 = sadd.s32 %s301, %s302
      %s304 = smul.addr %s303, 8
      %s305 = scalar_lea.vmem %s0, %s304
      %p306 = pneg %p54
      %p307 = pneg %p51
      %p308 = scmp.lt.s32.totalorder %s23, 1
      %s309 = scalar_select %p308, %s23, 1
      %s310 = scalar_lea.vmem %s1, %s309
      %p311 = pneg %p80
      %p312 = pneg %p77
      %p313 = pneg %p101
      %p314 = pneg %p98
      %p315 = pneg %p122
      %p316 = pneg %p119
      %p317 = pneg %p143
      %p318 = pneg %p140
      %p319 = pneg %p164
      %p320 = pneg %p161
      %p321 = pneg %p185
      %p322 = pneg %p182
      %p323 = pneg %p206
      %p324 = pneg %p203
      %p325 = pneg %p234
      %p326 = pneg %p231
      %s327 = smul.u32 32, %s24
      %p328 = scmp.lt.s32.totalorder %s23, 1
      %s329 = scalar_select %p328, %s23, 1
      %p330 = scmp.lt.s32.totalorder %s327, 127
      %s331 = scalar_select %p330, %s327, 127
      %s332 = smul.addr %s329, 128
      %s333 = sadd.s32 %s331, %s332
      %s334 = smul.addr %s333, 8
      %s335 = scalar_lea.vmem %s8, %s334
      %s336 = smul.u32 32, %s24
      %p337 = scmp.lt.s32.totalorder %s23, 1
      %s338 = scalar_select %p337, %s23, 1
      %p339 = scmp.lt.s32.totalorder %s336, 127
      %s340 = scalar_select %p339, %s336, 127
      %s341 = smul.addr %s338, 128
      %s342 = sadd.s32 %s340, %s341
      %s343 = smul.addr %s342, 8
      %s344 = scalar_lea.vmem %s0, %s343
      %s345 = smul.u32 32, %s24
      %p346 = scmp.lt.s32.totalorder %s23, 1
      %s347 = scalar_select %p346, %s23, 1
      %s348 = scalar_lea.vmem %s1, %s347
      %s349 = smul.u32 32, %s24
      %p350 = scmp.lt.s32.totalorder %s23, 1
      %s351 = scalar_select %p350, %s23, 1
      %p352 = scmp.lt.s32.totalorder %s349, 127
      %s353 = scalar_select %p352, %s349, 127
      %s354 = smul.addr %s351, 128
      %s355 = sadd.s32 %s353, %s354
      %s356 = smul.addr %s355, 8
      %s357 = scalar_lea.vmem %s8, %s356
      %s358 = smul.u32 32, %s24
      %v360 = vld [vmem:[%s344] sm:$0xff]
      %v361 = vld [vmem:[%s344 + $0x8] sm:$0xff]
      %v362 = vld [vmem:[%s344 + $0x10] sm:$0xff]
      %v363 = vld [vmem:[%s344 + $0x18] sm:$0xff]
      %v364 = vld [vmem:[%s344 + $0x20] sm:$0xff]
      %v365 = vld [vmem:[%s344 + $0x28] sm:$0xff]
      %v366 = vld [vmem:[%s344 + $0x30] sm:$0xff]
      %v367 = vld [vmem:[%s344 + $0x38] sm:$0xff]
      %v368 = vld [vmem:[%s344 + $0x40] sm:$0xff]
      %v369 = vld [vmem:[%s344 + $0x48] sm:$0xff]
      %v370 = vld [vmem:[%s344 + $0x50] sm:$0xff]
      %v371 = vld [vmem:[%s344 + $0x58] sm:$0xff]
      %v372 = vld [vmem:[%s344 + $0x60] sm:$0xff]
      %v373 = vld [vmem:[%s344 + $0x68] sm:$0xff]
      %v374 = vld [vmem:[%s344 + $0x70] sm:$0xff]
      %v375 = vld [vmem:[%s344 + $0x78] sm:$0xff]
      %v376 = vld [vmem:[%s344 + $0x80] sm:$0xff]
      %v377 = vld [vmem:[%s344 + $0x88] sm:$0xff]
      %v378 = vld [vmem:[%s344 + $0x90] sm:$0xff]
      %v379 = vld [vmem:[%s344 + $0x98] sm:$0xff]
      %v380 = vld [vmem:[%s344 + $0xa0] sm:$0xff]
      %v381 = vld [vmem:[%s344 + $0xa8] sm:$0xff]
      %v382 = vld [vmem:[%s344 + $0xb0] sm:$0xff]
      %v383 = vld [vmem:[%s344 + $0xb8] sm:$0xff]
      %v384 = vld [vmem:[%s344 + $0xc0] sm:$0xff]
      %v385 = vld [vmem:[%s344 + $0xc8] sm:$0xff]
      %v386 = vld [vmem:[%s344 + $0xd0] sm:$0xff]
      %v387 = vld [vmem:[%s344 + $0xd8] sm:$0xff]
      %v388 = vld [vmem:[%s344 + $0xe0] sm:$0xff]
      %v389 = vld [vmem:[%s344 + $0xe8] sm:$0xff]
      %v390 = vld [vmem:[%s344 + $0xf0] sm:$0xff]
      %v391 = vld [vmem:[%s344 + $0xf8] sm:$0xff]
      %v392 = vld [vmem:[%s6] sm:$0x1]
      %v393 = vld [vmem:[%s2] sm:$0x1]
      %395 = vset.pattern.permute.xlu0 0
      %396 = vperm.xlu0 %395, %v360
      %v397 = vpop.permute.xlu0 %396
      %400 = vset.pattern.permute.xlu0 0
      %401 = vperm.xlu0 %400, %v361
      %v402 = vpop.permute.xlu0 %401
      %405 = vset.pattern.permute.xlu0 0
      %406 = vperm.xlu0 %405, %v362
      %v407 = vpop.permute.xlu0 %406
      %410 = vset.pattern.permute.xlu0 0
      %411 = vperm.xlu0 %410, %v363
      %v412 = vpop.permute.xlu0 %411
      %415 = vset.pattern.permute.xlu0 0
      %416 = vperm.xlu0 %415, %v364
      %v417 = vpop.permute.xlu0 %416
      %420 = vset.pattern.permute.xlu0 0
      %421 = vperm.xlu0 %420, %v365
      %v422 = vpop.permute.xlu0 %421
      %425 = vset.pattern.permute.xlu0 0
      %426 = vperm.xlu0 %425, %v366
      %v427 = vpop.permute.xlu0 %426
      %430 = vset.pattern.permute.xlu0 0
      %431 = vperm.xlu0 %430, %v367
      %v432 = vpop.permute.xlu0 %431
      %435 = vset.pattern.permute.xlu0 0
      %436 = vperm.xlu0 %435, %v368
      %v437 = vpop.permute.xlu0 %436
      %440 = vset.pattern.permute.xlu0 0
      %441 = vperm.xlu0 %440, %v369
      %v442 = vpop.permute.xlu0 %441
      %445 = vset.pattern.permute.xlu0 0
      %446 = vperm.xlu0 %445, %v370
      %v447 = vpop.permute.xlu0 %446
      %450 = vset.pattern.permute.xlu0 0
      %451 = vperm.xlu0 %450, %v371
      %v452 = vpop.permute.xlu0 %451
      %455 = vset.pattern.permute.xlu0 0
      %456 = vperm.xlu0 %455, %v372
      %v457 = vpop.permute.xlu0 %456
      %460 = vset.pattern.permute.xlu0 0
      %461 = vperm.xlu0 %460, %v373
      %v462 = vpop.permute.xlu0 %461
      %465 = vset.pattern.permute.xlu0 0
      %466 = vperm.xlu0 %465, %v374
      %v467 = vpop.permute.xlu0 %466
      %470 = vset.pattern.permute.xlu0 0
      %471 = vperm.xlu0 %470, %v375
      %v472 = vpop.permute.xlu0 %471
      %475 = vset.pattern.permute.xlu0 0
      %476 = vperm.xlu0 %475, %v376
      %v477 = vpop.permute.xlu0 %476
      %480 = vset.pattern.permute.xlu0 0
      %481 = vperm.xlu0 %480, %v377
      %v482 = vpop.permute.xlu0 %481
      %485 = vset.pattern.permute.xlu0 0
      %486 = vperm.xlu0 %485, %v378
      %v487 = vpop.permute.xlu0 %486
      %490 = vset.pattern.permute.xlu0 0
      %491 = vperm.xlu0 %490, %v379
      %v492 = vpop.permute.xlu0 %491
      %495 = vset.pattern.permute.xlu0 0
      %496 = vperm.xlu0 %495, %v380
      %v497 = vpop.permute.xlu0 %496
      %500 = vset.pattern.permute.xlu0 0
      %501 = vperm.xlu0 %500, %v381
      %v502 = vpop.permute.xlu0 %501
      %505 = vset.pattern.permute.xlu0 0
      %506 = vperm.xlu0 %505, %v382
      %v507 = vpop.permute.xlu0 %506
      %510 = vset.pattern.permute.xlu0 0
      %511 = vperm.xlu0 %510, %v383
      %v512 = vpop.permute.xlu0 %511
      %515 = vset.pattern.permute.xlu0 0
      %516 = vperm.xlu0 %515, %v384
      %v517 = vpop.permute.xlu0 %516
      %520 = vset.pattern.permute.xlu0 0
      %521 = vperm.xlu0 %520, %v385
      %v522 = vpop.permute.xlu0 %521
      %525 = vset.pattern.permute.xlu0 0
      %526 = vperm.xlu0 %525, %v386
      %v527 = vpop.permute.xlu0 %526
      %530 = vset.pattern.permute.xlu0 0
      %531 = vperm.xlu0 %530, %v387
      %v532 = vpop.permute.xlu0 %531
      %535 = vset.pattern.permute.xlu0 0
      %536 = vperm.xlu0 %535, %v388
      %v537 = vpop.permute.xlu0 %536
      %540 = vset.pattern.permute.xlu0 0
      %541 = vperm.xlu0 %540, %v389
      %v542 = vpop.permute.xlu0 %541
      %545 = vset.pattern.permute.xlu0 0
      %546 = vperm.xlu0 %545, %v390
      %v547 = vpop.permute.xlu0 %546
      %550 = vset.pattern.permute.xlu0 0
      %551 = vperm.xlu0 %550, %v391
      %v552 = vpop.permute.xlu0 %551
      %v554 = vlaneseq
      %v555 = vshrl.u32 %v554, 7
      %v556 = vsub.s32 0, %v555
      %v557 = vrot.slane %v393, %v556
      %v558 = vmul.f32 %v397, %v557
      %v559 = vmul.f32 %v402, %v557
      %v560 = vmul.f32 %v407, %v557
      %v561 = vmul.f32 %v412, %v557
      %v562 = vmul.f32 %v417, %v557
      %v563 = vmul.f32 %v422, %v557
      %v564 = vmul.f32 %v427, %v557
      %v565 = vmul.f32 %v432, %v557
      %v566 = vmul.f32 %v437, %v557
      %v567 = vmul.f32 %v442, %v557
      %v568 = vmul.f32 %v447, %v557
      %v569 = vmul.f32 %v452, %v557
      %v570 = vmul.f32 %v457, %v557
      %v571 = vmul.f32 %v462, %v557
      %v572 = vmul.f32 %v467, %v557
      %v573 = vmul.f32 %v472, %v557
      %v574 = vmul.f32 %v477, %v557
      %v575 = vmul.f32 %v482, %v557
      %v576 = vmul.f32 %v487, %v557
      %v577 = vmul.f32 %v492, %v557
      %v578 = vmul.f32 %v497, %v557
      %v579 = vmul.f32 %v502, %v557
      %v580 = vmul.f32 %v507, %v557
      %v581 = vmul.f32 %v512, %v557
      %v582 = vmul.f32 %v517, %v557
      %v583 = vmul.f32 %v522, %v557
      %v584 = vmul.f32 %v527, %v557
      %v585 = vmul.f32 %v532, %v557
      %v586 = vmul.f32 %v537, %v557
      %v587 = vmul.f32 %v542, %v557
      %v588 = vmul.f32 %v547, %v557
      %v589 = vmul.f32 %v552, %v557
      %v590 = vlaneseq
      %v591 = vshrl.u32 %v590, 7
      %v592 = vsub.s32 0, %v591
      %v593 = vrot.slane %v392, %v592
      %v594 = vadd.f32 %v593, %v558
      %v595 = vadd.f32 %v593, %v559
      %v596 = vadd.f32 %v593, %v560
      %v597 = vadd.f32 %v593, %v561
      %v598 = vadd.f32 %v593, %v562
      %v599 = vadd.f32 %v593, %v563
      %v600 = vadd.f32 %v593, %v564
      %v601 = vadd.f32 %v593, %v565
      %v602 = vadd.f32 %v593, %v566
      %v603 = vadd.f32 %v593, %v567
      %v604 = vadd.f32 %v593, %v568
      %v605 = vadd.f32 %v593, %v569
      %v606 = vadd.f32 %v593, %v570
      %v607 = vadd.f32 %v593, %v571
      %v608 = vadd.f32 %v593, %v572
      %v609 = vadd.f32 %v593, %v573
      %v610 = vadd.f32 %v593, %v574
      %v611 = vadd.f32 %v593, %v575
      %v612 = vadd.f32 %v593, %v576
      %v613 = vadd.f32 %v593, %v577
      %v614 = vadd.f32 %v593, %v578
      %v615 = vadd.f32 %v593, %v579
      %v616 = vadd.f32 %v593, %v580
      %v617 = vadd.f32 %v593, %v581
      %v618 = vadd.f32 %v593, %v582
      %v619 = vadd.f32 %v593, %v583
      %v620 = vadd.f32 %v593, %v584
      %v621 = vadd.f32 %v593, %v585
      %v622 = vadd.f32 %v593, %v586
      %v623 = vadd.f32 %v593, %v587
      %v624 = vadd.f32 %v593, %v588
      %v625 = vadd.f32 %v593, %v589
      %v626 = vld [vmem:[%s2 + $0x1] sm:$0x1]
      %627 = vset.pattern.permute.xlu0 1
      %628 = vperm.xlu0 %627, %v360
      %v629 = vpop.permute.xlu0 %628
      %631 = vset.pattern.permute.xlu0 1
      %632 = vperm.xlu0 %631, %v361
      %v633 = vpop.permute.xlu0 %632
      %635 = vset.pattern.permute.xlu0 1
      %636 = vperm.xlu0 %635, %v362
      %v637 = vpop.permute.xlu0 %636
      %639 = vset.pattern.permute.xlu0 1
      %640 = vperm.xlu0 %639, %v363
      %v641 = vpop.permute.xlu0 %640
      %643 = vset.pattern.permute.xlu0 1
      %644 = vperm.xlu0 %643, %v364
      %v645 = vpop.permute.xlu0 %644
      %647 = vset.pattern.permute.xlu0 1
      %648 = vperm.xlu0 %647, %v365
      %v649 = vpop.permute.xlu0 %648
      %651 = vset.pattern.permute.xlu0 1
      %652 = vperm.xlu0 %651, %v366
      %v653 = vpop.permute.xlu0 %652
      %655 = vset.pattern.permute.xlu0 1
      %656 = vperm.xlu0 %655, %v367
      %v657 = vpop.permute.xlu0 %656
      %659 = vset.pattern.permute.xlu0 1
      %660 = vperm.xlu0 %659, %v368
      %v661 = vpop.permute.xlu0 %660
      %663 = vset.pattern.permute.xlu0 1
      %664 = vperm.xlu0 %663, %v369
      %v665 = vpop.permute.xlu0 %664
      %667 = vset.pattern.permute.xlu0 1
      %668 = vperm.xlu0 %667, %v370
      %v669 = vpop.permute.xlu0 %668
      %671 = vset.pattern.permute.xlu0 1
      %672 = vperm.xlu0 %671, %v371
      %v673 = vpop.permute.xlu0 %672
      %675 = vset.pattern.permute.xlu0 1
      %676 = vperm.xlu0 %675, %v372
      %v677 = vpop.permute.xlu0 %676
      %679 = vset.pattern.permute.xlu0 1
      %680 = vperm.xlu0 %679, %v373
      %v681 = vpop.permute.xlu0 %680
      %683 = vset.pattern.permute.xlu0 1
      %684 = vperm.xlu0 %683, %v374
      %v685 = vpop.permute.xlu0 %684
      %687 = vset.pattern.permute.xlu0 1
      %688 = vperm.xlu0 %687, %v375
      %v689 = vpop.permute.xlu0 %688
      %691 = vset.pattern.permute.xlu0 1
      %692 = vperm.xlu0 %691, %v376
      %v693 = vpop.permute.xlu0 %692
      %695 = vset.pattern.permute.xlu0 1
      %696 = vperm.xlu0 %695, %v377
      %v697 = vpop.permute.xlu0 %696
      %699 = vset.pattern.permute.xlu0 1
      %700 = vperm.xlu0 %699, %v378
      %v701 = vpop.permute.xlu0 %700
      %703 = vset.pattern.permute.xlu0 1
      %704 = vperm.xlu0 %703, %v379
      %v705 = vpop.permute.xlu0 %704
      %707 = vset.pattern.permute.xlu0 1
      %708 = vperm.xlu0 %707, %v380
      %v709 = vpop.permute.xlu0 %708
      %711 = vset.pattern.permute.xlu0 1
      %712 = vperm.xlu0 %711, %v381
      %v713 = vpop.permute.xlu0 %712
      %715 = vset.pattern.permute.xlu0 1
      %716 = vperm.xlu0 %715, %v382
      %v717 = vpop.permute.xlu0 %716
      %719 = vset.pattern.permute.xlu0 1
      %720 = vperm.xlu0 %719, %v383
      %v721 = vpop.permute.xlu0 %720
      %723 = vset.pattern.permute.xlu0 1
      %724 = vperm.xlu0 %723, %v384
      %v725 = vpop.permute.xlu0 %724
      %727 = vset.pattern.permute.xlu0 1
      %728 = vperm.xlu0 %727, %v385
      %v729 = vpop.permute.xlu0 %728
      %731 = vset.pattern.permute.xlu0 1
      %732 = vperm.xlu0 %731, %v386
      %v733 = vpop.permute.xlu0 %732
      %735 = vset.pattern.permute.xlu0 1
      %736 = vperm.xlu0 %735, %v387
      %v737 = vpop.permute.xlu0 %736
      %739 = vset.pattern.permute.xlu0 1
      %740 = vperm.xlu0 %739, %v388
      %v741 = vpop.permute.xlu0 %740
      %743 = vset.pattern.permute.xlu0 1
      %744 = vperm.xlu0 %743, %v389
      %v745 = vpop.permute.xlu0 %744
      %747 = vset.pattern.permute.xlu0 1
      %748 = vperm.xlu0 %747, %v390
      %v749 = vpop.permute.xlu0 %748
      %751 = vset.pattern.permute.xlu0 1
      %752 = vperm.xlu0 %751, %v391
      %v753 = vpop.permute.xlu0 %752
      %v755 = vlaneseq
      %v756 = vshrl.u32 %v755, 7
      %v757 = vsub.s32 0, %v756
      %v758 = vrot.slane %v626, %v757
      %v759 = vmul.f32 %v629, %v758
      %v760 = vmul.f32 %v633, %v758
      %v761 = vmul.f32 %v637, %v758
      %v762 = vmul.f32 %v641, %v758
      %v763 = vmul.f32 %v645, %v758
      %v764 = vmul.f32 %v649, %v758
      %v765 = vmul.f32 %v653, %v758
      %v766 = vmul.f32 %v657, %v758
      %v767 = vmul.f32 %v661, %v758
      %v768 = vmul.f32 %v665, %v758
      %v769 = vmul.f32 %v669, %v758
      %v770 = vmul.f32 %v673, %v758
      %v771 = vmul.f32 %v677, %v758
      %v772 = vmul.f32 %v681, %v758
      %v773 = vmul.f32 %v685, %v758
      %v774 = vmul.f32 %v689, %v758
      %v775 = vmul.f32 %v693, %v758
      %v776 = vmul.f32 %v697, %v758
      %v777 = vmul.f32 %v701, %v758
      %v778 = vmul.f32 %v705, %v758
      %v779 = vmul.f32 %v709, %v758
      %v780 = vmul.f32 %v713, %v758
      %v781 = vmul.f32 %v717, %v758
      %v782 = vmul.f32 %v721, %v758
      %v783 = vmul.f32 %v725, %v758
      %v784 = vmul.f32 %v729, %v758
      %v785 = vmul.f32 %v733, %v758
      %v786 = vmul.f32 %v737, %v758
      %v787 = vmul.f32 %v741, %v758
      %v788 = vmul.f32 %v745, %v758
      %v789 = vmul.f32 %v749, %v758
      %v790 = vmul.f32 %v753, %v758
      %v791 = vadd.f32 %v594, %v759
      %v792 = vadd.f32 %v595, %v760
      %v793 = vadd.f32 %v596, %v761
      %v794 = vadd.f32 %v597, %v762
      %v795 = vadd.f32 %v598, %v763
      %v796 = vadd.f32 %v599, %v764
      %v797 = vadd.f32 %v600, %v765
      %v798 = vadd.f32 %v601, %v766
      %v799 = vadd.f32 %v602, %v767
      %v800 = vadd.f32 %v603, %v768
      %v801 = vadd.f32 %v604, %v769
      %v802 = vadd.f32 %v605, %v770
      %v803 = vadd.f32 %v606, %v771
      %v804 = vadd.f32 %v607, %v772
      %v805 = vadd.f32 %v608, %v773
      %v806 = vadd.f32 %v609, %v774
      %v807 = vadd.f32 %v610, %v775
      %v808 = vadd.f32 %v611, %v776
      %v809 = vadd.f32 %v612, %v777
      %v810 = vadd.f32 %v613, %v778
      %v811 = vadd.f32 %v614, %v779
      %v812 = vadd.f32 %v615, %v780
      %v813 = vadd.f32 %v616, %v781
      %v814 = vadd.f32 %v617, %v782
      %v815 = vadd.f32 %v618, %v783
      %v816 = vadd.f32 %v619, %v784
      %v817 = vadd.f32 %v620, %v785
      %v818 = vadd.f32 %v621, %v786
      %v819 = vadd.f32 %v622, %v787
      %v820 = vadd.f32 %v623, %v788
      %v821 = vadd.f32 %v624, %v789
      %v822 = vadd.f32 %v625, %v790
      %v823 = vld [vmem:[%s2 + $0x2] sm:$0x1]
      %824 = vset.pattern.permute.xlu0 2
      %825 = vperm.xlu0 %824, %v360
      %v826 = vpop.permute.xlu0 %825
      %828 = vset.pattern.permute.xlu0 2
      %829 = vperm.xlu0 %828, %v361
      %v830 = vpop.permute.xlu0 %829
      %832 = vset.pattern.permute.xlu0 2
      %833 = vperm.xlu0 %832, %v362
      %v834 = vpop.permute.xlu0 %833
      %836 = vset.pattern.permute.xlu0 2
      %837 = vperm.xlu0 %836, %v363
      %v838 = vpop.permute.xlu0 %837
      %840 = vset.pattern.permute.xlu0 2
      %841 = vperm.xlu0 %840, %v364
      %v842 = vpop.permute.xlu0 %841
      %844 = vset.pattern.permute.xlu0 2
      %845 = vperm.xlu0 %844, %v365
      %v846 = vpop.permute.xlu0 %845
      %848 = vset.pattern.permute.xlu0 2
      %849 = vperm.xlu0 %848, %v366
      %v850 = vpop.permute.xlu0 %849
      %852 = vset.pattern.permute.xlu0 2
      %853 = vperm.xlu0 %852, %v367
      %v854 = vpop.permute.xlu0 %853
      %856 = vset.pattern.permute.xlu0 2
      %857 = vperm.xlu0 %856, %v368
      %v858 = vpop.permute.xlu0 %857
      %860 = vset.pattern.permute.xlu0 2
      %861 = vperm.xlu0 %860, %v369
      %v862 = vpop.permute.xlu0 %861
      %864 = vset.pattern.permute.xlu0 2
      %865 = vperm.xlu0 %864, %v370
      %v866 = vpop.permute.xlu0 %865
      %868 = vset.pattern.permute.xlu0 2
      %869 = vperm.xlu0 %868, %v371
      %v870 = vpop.permute.xlu0 %869
      %872 = vset.pattern.permute.xlu0 2
      %873 = vperm.xlu0 %872, %v372
      %v874 = vpop.permute.xlu0 %873
      %876 = vset.pattern.permute.xlu0 2
      %877 = vperm.xlu0 %876, %v373
      %v878 = vpop.permute.xlu0 %877
      %880 = vset.pattern.permute.xlu0 2
      %881 = vperm.xlu0 %880, %v374
      %v882 = vpop.permute.xlu0 %881
      %884 = vset.pattern.permute.xlu0 2
      %885 = vperm.xlu0 %884, %v375
      %v886 = vpop.permute.xlu0 %885
      %888 = vset.pattern.permute.xlu0 2
      %889 = vperm.xlu0 %888, %v376
      %v890 = vpop.permute.xlu0 %889
      %892 = vset.pattern.permute.xlu0 2
      %893 = vperm.xlu0 %892, %v377
      %v894 = vpop.permute.xlu0 %893
      %896 = vset.pattern.permute.xlu0 2
      %897 = vperm.xlu0 %896, %v378
      %v898 = vpop.permute.xlu0 %897
      %900 = vset.pattern.permute.xlu0 2
      %901 = vperm.xlu0 %900, %v379
      %v902 = vpop.permute.xlu0 %901
      %904 = vset.pattern.permute.xlu0 2
      %905 = vperm.xlu0 %904, %v380
      %v906 = vpop.permute.xlu0 %905
      %908 = vset.pattern.permute.xlu0 2
      %909 = vperm.xlu0 %908, %v381
      %v910 = vpop.permute.xlu0 %909
      %912 = vset.pattern.permute.xlu0 2
      %913 = vperm.xlu0 %912, %v382
      %v914 = vpop.permute.xlu0 %913
      %916 = vset.pattern.permute.xlu0 2
      %917 = vperm.xlu0 %916, %v383
      %v918 = vpop.permute.xlu0 %917
      %920 = vset.pattern.permute.xlu0 2
      %921 = vperm.xlu0 %920, %v384
      %v922 = vpop.permute.xlu0 %921
      %924 = vset.pattern.permute.xlu0 2
      %925 = vperm.xlu0 %924, %v385
      %v926 = vpop.permute.xlu0 %925
      %928 = vset.pattern.permute.xlu0 2
      %929 = vperm.xlu0 %928, %v386
      %v930 = vpop.permute.xlu0 %929
      %932 = vset.pattern.permute.xlu0 2
      %933 = vperm.xlu0 %932, %v387
      %v934 = vpop.permute.xlu0 %933
      %936 = vset.pattern.permute.xlu0 2
      %937 = vperm.xlu0 %936, %v388
      %v938 = vpop.permute.xlu0 %937
      %940 = vset.pattern.permute.xlu0 2
      %941 = vperm.xlu0 %940, %v389
      %v942 = vpop.permute.xlu0 %941
      %944 = vset.pattern.permute.xlu0 2
      %945 = vperm.xlu0 %944, %v390
      %v946 = vpop.permute.xlu0 %945
      %948 = vset.pattern.permute.xlu0 2
      %949 = vperm.xlu0 %948, %v391
      %v950 = vpop.permute.xlu0 %949
      %v952 = vlaneseq
      %v953 = vshrl.u32 %v952, 7
      %v954 = vsub.s32 0, %v953
      %v955 = vrot.slane %v823, %v954
      %v956 = vmul.f32 %v826, %v955
      %v957 = vmul.f32 %v830, %v955
      %v958 = vmul.f32 %v834, %v955
      %v959 = vmul.f32 %v838, %v955
      %v960 = vmul.f32 %v842, %v955
      %v961 = vmul.f32 %v846, %v955
      %v962 = vmul.f32 %v850, %v955
      %v963 = vmul.f32 %v854, %v955
      %v964 = vmul.f32 %v858, %v955
      %v965 = vmul.f32 %v862, %v955
      %v966 = vmul.f32 %v866, %v955
      %v967 = vmul.f32 %v870, %v955
      %v968 = vmul.f32 %v874, %v955
      %v969 = vmul.f32 %v878, %v955
      %v970 = vmul.f32 %v882, %v955
      %v971 = vmul.f32 %v886, %v955
      %v972 = vmul.f32 %v890, %v955
      %v973 = vmul.f32 %v894, %v955
      %v974 = vmul.f32 %v898, %v955
      %v975 = vmul.f32 %v902, %v955
      %v976 = vmul.f32 %v906, %v955
      %v977 = vmul.f32 %v910, %v955
      %v978 = vmul.f32 %v914, %v955
      %v979 = vmul.f32 %v918, %v955
      %v980 = vmul.f32 %v922, %v955
      %v981 = vmul.f32 %v926, %v955
      %v982 = vmul.f32 %v930, %v955
      %v983 = vmul.f32 %v934, %v955
      %v984 = vmul.f32 %v938, %v955
      %v985 = vmul.f32 %v942, %v955
      %v986 = vmul.f32 %v946, %v955
      %v987 = vmul.f32 %v950, %v955
      %v988 = vadd.f32 %v791, %v956
      %v989 = vadd.f32 %v792, %v957
      %v990 = vadd.f32 %v793, %v958
      %v991 = vadd.f32 %v794, %v959
      %v992 = vadd.f32 %v795, %v960
      %v993 = vadd.f32 %v796, %v961
      %v994 = vadd.f32 %v797, %v962
      %v995 = vadd.f32 %v798, %v963
      %v996 = vadd.f32 %v799, %v964
      %v997 = vadd.f32 %v800, %v965
      %v998 = vadd.f32 %v801, %v966
      %v999 = vadd.f32 %v802, %v967
      %v1000 = vadd.f32 %v803, %v968
      %v1001 = vadd.f32 %v804, %v969
      %v1002 = vadd.f32 %v805, %v970
      %v1003 = vadd.f32 %v806, %v971
      %v1004 = vadd.f32 %v807, %v972
      %v1005 = vadd.f32 %v808, %v973
      %v1006 = vadd.f32 %v809, %v974
      %v1007 = vadd.f32 %v810, %v975
      %v1008 = vadd.f32 %v811, %v976
      %v1009 = vadd.f32 %v812, %v977
      %v1010 = vadd.f32 %v813, %v978
      %v1011 = vadd.f32 %v814, %v979
      %v1012 = vadd.f32 %v815, %v980
      %v1013 = vadd.f32 %v816, %v981
      %v1014 = vadd.f32 %v817, %v982
      %v1015 = vadd.f32 %v818, %v983
      %v1016 = vadd.f32 %v819, %v984
      %v1017 = vadd.f32 %v820, %v985
      %v1018 = vadd.f32 %v821, %v986
      %v1019 = vadd.f32 %v822, %v987
      %v1020 = vmax.f32 %v988, 0.0
      %v1021 = vmax.f32 %v989, 0.0
      %v1022 = vmax.f32 %v990, 0.0
      %v1023 = vmax.f32 %v991, 0.0
      %v1024 = vmax.f32 %v992, 0.0
      %v1025 = vmax.f32 %v993, 0.0
      %v1026 = vmax.f32 %v994, 0.0
      %v1027 = vmax.f32 %v995, 0.0
      %v1028 = vmax.f32 %v996, 0.0
      %v1029 = vmax.f32 %v997, 0.0
      %v1030 = vmax.f32 %v998, 0.0
      %v1031 = vmax.f32 %v999, 0.0
      %v1032 = vmax.f32 %v1000, 0.0
      %v1033 = vmax.f32 %v1001, 0.0
      %v1034 = vmax.f32 %v1002, 0.0
      %v1035 = vmax.f32 %v1003, 0.0
      %v1036 = vmax.f32 %v1004, 0.0
      %v1037 = vmax.f32 %v1005, 0.0
      %v1038 = vmax.f32 %v1006, 0.0
      %v1039 = vmax.f32 %v1007, 0.0
      %v1040 = vmax.f32 %v1008, 0.0
      %v1041 = vmax.f32 %v1009, 0.0
      %v1042 = vmax.f32 %v1010, 0.0
      %v1043 = vmax.f32 %v1011, 0.0
      %v1044 = vmax.f32 %v1012, 0.0
      %v1045 = vmax.f32 %v1013, 0.0
      %v1046 = vmax.f32 %v1014, 0.0
      %v1047 = vmax.f32 %v1015, 0.0
      %v1048 = vmax.f32 %v1016, 0.0
      %v1049 = vmax.f32 %v1017, 0.0
      %v1050 = vmax.f32 %v1018, 0.0
      %v1051 = vmax.f32 %v1019, 0.0
      %v1052 = vpack.c.bf16 %v1021, %v1020
      %v1053 = vpack.c.bf16 %v1023, %v1022
      %v1054 = vpack.c.bf16 %v1025, %v1024
      %v1055 = vpack.c.bf16 %v1027, %v1026
      %v1056 = vpack.c.bf16 %v1029, %v1028
      %v1057 = vpack.c.bf16 %v1031, %v1030
      %v1058 = vpack.c.bf16 %v1033, %v1032
      %v1059 = vpack.c.bf16 %v1035, %v1034
      %v1060 = vpack.c.bf16 %v1037, %v1036
      %v1061 = vpack.c.bf16 %v1039, %v1038
      %v1062 = vpack.c.bf16 %v1041, %v1040
      %v1063 = vpack.c.bf16 %v1043, %v1042
      %v1064 = vpack.c.bf16 %v1045, %v1044
      %v1065 = vpack.c.bf16 %v1047, %v1046
      %v1066 = vpack.c.bf16 %v1049, %v1048
      %v1067 = vpack.c.bf16 %v1051, %v1050
      %v1068 = vld [vmem:[%s3] sm:$0xf]
      %v1069 = vld [vmem:[%s3 + $0x4] sm:$0xf]
      %v1070 = vld [vmem:[%s3 + $0x8] sm:$0xf]
      %v1071 = vld [vmem:[%s3 + $0xc] sm:$0xf]
      %v1072 = vld [vmem:[%s3 + $0x10] sm:$0xf]
      %v1073 = vld [vmem:[%s3 + $0x14] sm:$0xf]
      %v1074 = vld [vmem:[%s3 + $0x18] sm:$0xf]
      %v1075 = vld [vmem:[%s3 + $0x1c] sm:$0xf]
      %v1076 = vld [vmem:[%s3 + $0x20] sm:$0xf]
      %v1077 = vld [vmem:[%s3 + $0x24] sm:$0xf]
      %v1078 = vld [vmem:[%s3 + $0x28] sm:$0xf]
      %v1079 = vld [vmem:[%s3 + $0x2c] sm:$0xf]
      %v1080 = vld [vmem:[%s3 + $0x30] sm:$0xf]
      %v1081 = vld [vmem:[%s3 + $0x34] sm:$0xf]
      %v1082 = vld [vmem:[%s3 + $0x38] sm:$0xf]
      %v1083 = vld [vmem:[%s3 + $0x3c] sm:$0xf]
      %v1084 = vld [vmem:[%s6 + $0x1] sm:$0x1]
      %v1085 = vlaneseq
      %v1086 = vshrl.u32 %v1085, 7
      %v1087 = vsub.s32 0, %v1086
      %v1088 = vrot.slane %v1084, %v1087
      %v1105 = vunpack.c.l.b16 %v1068
      %v1106 = vunpack.c.l.b16 %v1069
      %v1107 = vunpack.c.l.b16 %v1070
      %v1108 = vunpack.c.l.b16 %v1071
      %v1109 = vunpack.c.l.b16 %v1072
      %v1110 = vunpack.c.l.b16 %v1073
      %v1111 = vunpack.c.l.b16 %v1074
      %v1112 = vunpack.c.l.b16 %v1075
      %v1113 = vunpack.c.l.b16 %v1076
      %v1114 = vunpack.c.l.b16 %v1077
      %v1115 = vunpack.c.l.b16 %v1078
      %v1116 = vunpack.c.l.b16 %v1079
      %v1117 = vunpack.c.l.b16 %v1080
      %v1118 = vunpack.c.l.b16 %v1081
      %v1119 = vunpack.c.l.b16 %v1082
      %v1120 = vunpack.c.l.b16 %v1083
      %v1121 = vpack.c.b16 %v1106, %v1105
      %v1122 = vpack.c.b16 %v1108, %v1107
      %v1123 = vpack.c.b16 %v1110, %v1109
      %v1124 = vpack.c.b16 %v1112, %v1111
      %v1125 = vpack.c.b16 %v1114, %v1113
      %v1126 = vpack.c.b16 %v1116, %v1115
      %v1127 = vpack.c.b16 %v1118, %v1117
      %v1128 = vpack.c.b16 %v1120, %v1119
      %1137 = vmatprep.subr.bf16.mxu0 0
      %1138 = vmatpush1.bf16.msra.mxu0 %v1121
      %1139 = vmatprep.subr.bf16.mxu0 0
      %1140 = vmatpush1.bf16.msra.mxu0 %v1122
      %1141 = vmatprep.subr.bf16.mxu0 0
      %1142 = vmatpush1.bf16.msra.mxu0 %v1123
      %1143 = vmatprep.subr.bf16.mxu0 0
      %1144 = vmatpush1.bf16.msra.mxu0 %v1124
      %1145 = vmatprep.subr.bf16.mxu0 0
      %1146 = vmatpush1.bf16.msra.mxu0 %v1125
      %1147 = vmatprep.subr.bf16.mxu0 0
      %1148 = vmatpush1.bf16.msra.mxu0 %v1126
      %1149 = vmatprep.subr.bf16.mxu0 0
      %1150 = vmatpush1.bf16.msra.mxu0 %v1127
      %1151 = vmatprep.subr.bf16.mxu0 0
      %1152 = vmatpush1.bf16.msra.mxu0 %v1128
      %1153 = vmatprep.subr.bf16.mxu0 0
      %1154 = vmatpush1.bf16.msra.mxu0 0
      %1155 = vmatprep.subr.bf16.mxu0 0
      %1156 = vmatpush1.bf16.msra.mxu0 0
      %1157 = vmatprep.subr.bf16.mxu0 0
      %1158 = vmatpush1.bf16.msra.mxu0 0
      %1159 = vmatprep.subr.bf16.mxu0 0
      %1160 = vmatpush1.bf16.msra.mxu0 0
      %1161 = vmatprep.subr.bf16.mxu0 0
      %1162 = vmatpush1.bf16.msra.mxu0 0
      %1163 = vmatprep.subr.bf16.mxu0 0
      %1164 = vmatpush1.bf16.msra.mxu0 0
      %1165 = vmatprep.subr.bf16.mxu0 0
      %1166 = vmatpush1.bf16.msra.mxu0 0
      %1167 = vmatprep.subr.bf16.mxu0 0
      %1168 = vmatpush1.bf16.msra.mxu0 0
      %1169 = vmatprep.mubr.bf16.mxu0 0
      %1170 = vmatmul.mubr.bf16.gmra.mrb[0].mxu0 %v1052
      %v1171 = vpop.f32.mrb[0].mxu0
      %v1172 = vadd.f32 %v1088, %v1171
      %v1173 = vpop.f32.mrb[0].mxu0
      %v1174 = vpop.f32.mrb[0].mxu0
      %v1175 = vadd.f32 %v1088, %v1174
      %v1176 = vpop.f32.mrb[0].mxu0
      %1177 = vmatprep.mubr.bf16.mxu0 0
      %1178 = vmatmul.mubr.bf16.gmra.mrb[0].mxu0 %v1053
      %v1179 = vpop.f32.mrb[0].mxu0
      %v1180 = vadd.f32 %v1088, %v1179
      %v1181 = vpop.f32.mrb[0].mxu0
      %v1182 = vpop.f32.mrb[0].mxu0
      %v1183 = vadd.f32 %v1088, %v1182
      %v1184 = vpop.f32.mrb[0].mxu0
      %1185 = vmatprep.mubr.bf16.mxu0 0
      %1186 = vmatmul.mubr.bf16.gmra.mrb[0].mxu0 %v1054
      %v1187 = vpop.f32.mrb[0].mxu0
      %v1188 = vadd.f32 %v1088, %v1187
      %v1189 = vpop.f32.mrb[0].mxu0
      %v1190 = vpop.f32.mrb[0].mxu0
      %v1191 = vadd.f32 %v1088, %v1190
      %v1192 = vpop.f32.mrb[0].mxu0
      %1193 = vmatprep.mubr.bf16.mxu0 0
      %1194 = vmatmul.mubr.bf16.gmra.mrb[0].mxu0 %v1055
      %v1195 = vpop.f32.mrb[0].mxu0
      %v1196 = vadd.f32 %v1088, %v1195
      %v1197 = vpop.f32.mrb[0].mxu0
      %v1198 = vpop.f32.mrb[0].mxu0
      %v1199 = vadd.f32 %v1088, %v1198
      %v1200 = vpop.f32.mrb[0].mxu0
      %1201 = vmatprep.mubr.bf16.mxu0 0
      %1202 = vmatmul.mubr.bf16.gmra.mrb[0].mxu0 %v1056
      %v1203 = vpop.f32.mrb[0].mxu0
      %v1204 = vadd.f32 %v1088, %v1203
      %v1205 = vpop.f32.mrb[0].mxu0
      %v1206 = vpop.f32.mrb[0].mxu0
      %v1207 = vadd.f32 %v1088, %v1206
      %v1208 = vpop.f32.mrb[0].mxu0
      %1209 = vmatprep.mubr.bf16.mxu0 0
      %1210 = vmatmul.mubr.bf16.gmra.mrb[0].mxu0 %v1057
      %v1211 = vpop.f32.mrb[0].mxu0
      %v1212 = vadd.f32 %v1088, %v1211
      %v1213 = vpop.f32.mrb[0].mxu0
      %v1214 = vpop.f32.mrb[0].mxu0
      %v1215 = vadd.f32 %v1088, %v1214
      %v1216 = vpop.f32.mrb[0].mxu0
      %1217 = vmatprep.mubr.bf16.mxu0 0
      %1218 = vmatmul.mubr.bf16.gmra.mrb[0].mxu0 %v1058
      %v1219 = vpop.f32.mrb[0].mxu0
      %v1220 = vadd.f32 %v1088, %v1219
      %v1221 = vpop.f32.mrb[0].mxu0
      %v1222 = vpop.f32.mrb[0].mxu0
      %v1223 = vadd.f32 %v1088, %v1222
      %v1224 = vpop.f32.mrb[0].mxu0
      %1225 = vmatprep.mubr.bf16.mxu0 0
      %1226 = vmatmul.mubr.bf16.gmra.mrb[0].mxu0 %v1059
      %v1227 = vpop.f32.mrb[0].mxu0
      %v1228 = vadd.f32 %v1088, %v1227
      %v1229 = vpop.f32.mrb[0].mxu0
      %v1230 = vpop.f32.mrb[0].mxu0
      %v1231 = vadd.f32 %v1088, %v1230
      %v1232 = vpop.f32.mrb[0].mxu0
      %1233 = vmatprep.mubr.bf16.mxu0 0
      %1234 = vmatmul.mubr.bf16.gmra.mrb[0].mxu0 %v1060
      %v1235 = vpop.f32.mrb[0].mxu0
      %v1236 = vadd.f32 %v1088, %v1235
      %v1237 = vpop.f32.mrb[0].mxu0
      %v1238 = vpop.f32.mrb[0].mxu0
      %v1239 = vadd.f32 %v1088, %v1238
      %v1240 = vpop.f32.mrb[0].mxu0
      %1241 = vmatprep.mubr.bf16.mxu0 0
      %1242 = vmatmul.mubr.bf16.gmra.mrb[0].mxu0 %v1061
      %v1243 = vpop.f32.mrb[0].mxu0
      %v1244 = vadd.f32 %v1088, %v1243
      %v1245 = vpop.f32.mrb[0].mxu0
      %v1246 = vpop.f32.mrb[0].mxu0
      %v1247 = vadd.f32 %v1088, %v1246
      %v1248 = vpop.f32.mrb[0].mxu0
      %1249 = vmatprep.mubr.bf16.mxu0 0
      %1250 = vmatmul.mubr.bf16.gmra.mrb[0].mxu0 %v1062
      %v1251 = vpop.f32.mrb[0].mxu0
      %v1252 = vadd.f32 %v1088, %v1251
      %v1253 = vpop.f32.mrb[0].mxu0
      %v1254 = vpop.f32.mrb[0].mxu0
      %v1255 = vadd.f32 %v1088, %v1254
      %v1256 = vpop.f32.mrb[0].mxu0
      %1257 = vmatprep.mubr.bf16.mxu0 0
      %1258 = vmatmul.mubr.bf16.gmra.mrb[0].mxu0 %v1063
      %v1259 = vpop.f32.mrb[0].mxu0
      %v1260 = vadd.f32 %v1088, %v1259
      %v1261 = vpop.f32.mrb[0].mxu0
      %v1262 = vpop.f32.mrb[0].mxu0
      %v1263 = vadd.f32 %v1088, %v1262
      %v1264 = vpop.f32.mrb[0].mxu0
      %1265 = vmatprep.mubr.bf16.mxu0 0
      %1266 = vmatmul.mubr.bf16.gmra.mrb[0].mxu0 %v1064
      %v1267 = vpop.f32.mrb[0].mxu0
      %v1268 = vadd.f32 %v1088, %v1267
      %v1269 = vpop.f32.mrb[0].mxu0
      %v1270 = vpop.f32.mrb[0].mxu0
      %v1271 = vadd.f32 %v1088, %v1270
      %v1272 = vpop.f32.mrb[0].mxu0
      %1273 = vmatprep.mubr.bf16.mxu0 0
      %1274 = vmatmul.mubr.bf16.gmra.mrb[0].mxu0 %v1065
      %v1275 = vpop.f32.mrb[0].mxu0
      %v1276 = vadd.f32 %v1088, %v1275
      %v1277 = vpop.f32.mrb[0].mxu0
      %v1278 = vpop.f32.mrb[0].mxu0
      %v1279 = vadd.f32 %v1088, %v1278
      %v1280 = vpop.f32.mrb[0].mxu0
      %1281 = vmatprep.mubr.bf16.mxu0 0
      %1282 = vmatmul.mubr.bf16.gmra.mrb[0].mxu0 %v1066
      %v1283 = vpop.f32.mrb[0].mxu0
      %v1284 = vadd.f32 %v1088, %v1283
      %v1285 = vpop.f32.mrb[0].mxu0
      %v1286 = vpop.f32.mrb[0].mxu0
      %v1287 = vadd.f32 %v1088, %v1286
      %v1288 = vpop.f32.mrb[0].mxu0
      %1289 = vmatprep.mubr.bf16.mxu0 0
      %1290 = vmatmul.mubr.bf16.gmra.mrb[0].mxu0 %v1067
      %v1291 = vpop.f32.mrb[0].mxu0
      %v1292 = vadd.f32 %v1088, %v1291
      %v1293 = vpop.f32.mrb[0].mxu0
      %v1294 = vpop.f32.mrb[0].mxu0
      %v1295 = vadd.f32 %v1088, %v1294
      %v1296 = vpop.f32.mrb[0].mxu0
      %1297 = vdwg.mxu0
      %v1298 = vmax.f32 %v1172, 0.0
      %v1299 = vmax.f32 %v1175, 0.0
      %v1300 = vmax.f32 %v1180, 0.0
      %v1301 = vmax.f32 %v1183, 0.0
      %v1302 = vmax.f32 %v1188, 0.0
      %v1303 = vmax.f32 %v1191, 0.0
      %v1304 = vmax.f32 %v1196, 0.0
      %v1305 = vmax.f32 %v1199, 0.0
      %v1306 = vmax.f32 %v1204, 0.0
      %v1307 = vmax.f32 %v1207, 0.0
      %v1308 = vmax.f32 %v1212, 0.0
      %v1309 = vmax.f32 %v1215, 0.0
      %v1310 = vmax.f32 %v1220, 0.0
      %v1311 = vmax.f32 %v1223, 0.0
      %v1312 = vmax.f32 %v1228, 0.0
      %v1313 = vmax.f32 %v1231, 0.0
      %v1314 = vmax.f32 %v1236, 0.0
      %v1315 = vmax.f32 %v1239, 0.0
      %v1316 = vmax.f32 %v1244, 0.0
      %v1317 = vmax.f32 %v1247, 0.0
      %v1318 = vmax.f32 %v1252, 0.0
      %v1319 = vmax.f32 %v1255, 0.0
      %v1320 = vmax.f32 %v1260, 0.0
      %v1321 = vmax.f32 %v1263, 0.0
      %v1322 = vmax.f32 %v1268, 0.0
      %v1323 = vmax.f32 %v1271, 0.0
      %v1324 = vmax.f32 %v1276, 0.0
      %v1325 = vmax.f32 %v1279, 0.0
      %v1326 = vmax.f32 %v1284, 0.0
      %v1327 = vmax.f32 %v1287, 0.0
      %v1328 = vmax.f32 %v1292, 0.0
      %v1329 = vmax.f32 %v1295, 0.0
      %v1330 = vpack.c.bf16 %v1299, %v1298
      %v1331 = vpack.c.bf16 %v1301, %v1300
      %v1332 = vpack.c.bf16 %v1303, %v1302
      %v1333 = vpack.c.bf16 %v1305, %v1304
      %v1334 = vpack.c.bf16 %v1307, %v1306
      %v1335 = vpack.c.bf16 %v1309, %v1308
      %v1336 = vpack.c.bf16 %v1311, %v1310
      %v1337 = vpack.c.bf16 %v1313, %v1312
      %v1338 = vpack.c.bf16 %v1315, %v1314
      %v1339 = vpack.c.bf16 %v1317, %v1316
      %v1340 = vpack.c.bf16 %v1319, %v1318
      %v1341 = vpack.c.bf16 %v1321, %v1320
      %v1342 = vpack.c.bf16 %v1323, %v1322
      %v1343 = vpack.c.bf16 %v1325, %v1324
      %v1344 = vpack.c.bf16 %v1327, %v1326
      %v1345 = vpack.c.bf16 %v1329, %v1328
      %s1346 = scalar_lea.vmem %s3, 64
      %v1347 = vld [vmem:[%s1346] sm:$0xf]
      %v1348 = vld [vmem:[%s1346 + $0x4] sm:$0xf]
      %v1349 = vld [vmem:[%s1346 + $0x8] sm:$0xf]
      %v1350 = vld [vmem:[%s1346 + $0xc] sm:$0xf]
      %v1351 = vld [vmem:[%s1346 + $0x10] sm:$0xf]
      %v1352 = vld [vmem:[%s1346 + $0x14] sm:$0xf]
      %v1353 = vld [vmem:[%s1346 + $0x18] sm:$0xf]
      %v1354 = vld [vmem:[%s1346 + $0x1c] sm:$0xf]
      %v1355 = vld [vmem:[%s1346 + $0x20] sm:$0xf]
      %v1356 = vld [vmem:[%s1346 + $0x24] sm:$0xf]
      %v1357 = vld [vmem:[%s1346 + $0x28] sm:$0xf]
      %v1358 = vld [vmem:[%s1346 + $0x2c] sm:$0xf]
      %v1359 = vld [vmem:[%s1346 + $0x30] sm:$0xf]
      %v1360 = vld [vmem:[%s1346 + $0x34] sm:$0xf]
      %v1361 = vld [vmem:[%s1346 + $0x38] sm:$0xf]
      %v1362 = vld [vmem:[%s1346 + $0x3c] sm:$0xf]
      %v1363 = vld [vmem:[%s6 + $0x2] sm:$0x1]
      %v1364 = vlaneseq
      %v1365 = vshrl.u32 %v1364, 7
      %v1366 = vsub.s32 0, %v1365
      %v1367 = vrot.slane %v1363, %v1366
      %v1384 = vunpack.c.l.b16 %v1347
      %v1385 = vunpack.c.l.b16 %v1348
      %v1386 = vunpack.c.l.b16 %v1349
      %v1387 = vunpack.c.l.b16 %v1350
      %v1388 = vunpack.c.l.b16 %v1351
      %v1389 = vunpack.c.l.b16 %v1352
      %v1390 = vunpack.c.l.b16 %v1353
      %v1391 = vunpack.c.l.b16 %v1354
      %v1392 = vunpack.c.l.b16 %v1355
      %v1393 = vunpack.c.l.b16 %v1356
      %v1394 = vunpack.c.l.b16 %v1357
      %v1395 = vunpack.c.l.b16 %v1358
      %v1396 = vunpack.c.l.b16 %v1359
      %v1397 = vunpack.c.l.b16 %v1360
      %v1398 = vunpack.c.l.b16 %v1361
      %v1399 = vunpack.c.l.b16 %v1362
      %v1400 = vpack.c.b16 %v1385, %v1384
      %v1401 = vpack.c.b16 %v1387, %v1386
      %v1402 = vpack.c.b16 %v1389, %v1388
      %v1403 = vpack.c.b16 %v1391, %v1390
      %v1404 = vpack.c.b16 %v1393, %v1392
      %v1405 = vpack.c.b16 %v1395, %v1394
      %v1406 = vpack.c.b16 %v1397, %v1396
      %v1407 = vpack.c.b16 %v1399, %v1398
      %1416 = vmatprep.subr.bf16.mxu0 0
      %1417 = vmatpush1.bf16.msra.mxu0 %v1400
      %1418 = vmatprep.subr.bf16.mxu0 0
      %1419 = vmatpush1.bf16.msra.mxu0 %v1401
      %1420 = vmatprep.subr.bf16.mxu0 0
      %1421 = vmatpush1.bf16.msra.mxu0 %v1402
      %1422 = vmatprep.subr.bf16.mxu0 0
      %1423 = vmatpush1.bf16.msra.mxu0 %v1403
      %1424 = vmatprep.subr.bf16.mxu0 0
      %1425 = vmatpush1.bf16.msra.mxu0 %v1404
      %1426 = vmatprep.subr.bf16.mxu0 0
      %1427 = vmatpush1.bf16.msra.mxu0 %v1405
      %1428 = vmatprep.subr.bf16.mxu0 0
      %1429 = vmatpush1.bf16.msra.mxu0 %v1406
      %1430 = vmatprep.subr.bf16.mxu0 0
      %1431 = vmatpush1.bf16.msra.mxu0 %v1407
      %1432 = vmatprep.subr.bf16.mxu0 0
      %1433 = vmatpush1.bf16.msra.mxu0 0
      %1434 = vmatprep.subr.bf16.mxu0 0
      %1435 = vmatpush1.bf16.msra.mxu0 0
      %1436 = vmatprep.subr.bf16.mxu0 0
      %1437 = vmatpush1.bf16.msra.mxu0 0
      %1438 = vmatprep.subr.bf16.mxu0 0
      %1439 = vmatpush1.bf16.msra.mxu0 0
      %1440 = vmatprep.subr.bf16.mxu0 0
      %1441 = vmatpush1.bf16.msra.mxu0 0
      %1442 = vmatprep.subr.bf16.mxu0 0
      %1443 = vmatpush1.bf16.msra.mxu0 0
      %1444 = vmatprep.subr.bf16.mxu0 0
      %1445 = vmatpush1.bf16.msra.mxu0 0
      %1446 = vmatprep.subr.bf16.mxu0 0
      %1447 = vmatpush1.bf16.msra.mxu0 0
      %1448 = vmatprep.mubr.bf16.mxu0 0
      %1449 = vmatmul.mubr.bf16.gmra.mrb[0].mxu0 %v1330
      %v1450 = vpop.f32.mrb[0].mxu0
      %v1451 = vadd.f32 %v1367, %v1450
      %v1452 = vpop.f32.mrb[0].mxu0
      %v1453 = vpop.f32.mrb[0].mxu0
      %v1454 = vadd.f32 %v1367, %v1453
      %v1455 = vpop.f32.mrb[0].mxu0
      %1456 = vmatprep.mubr.bf16.mxu0 0
      %1457 = vmatmul.mubr.bf16.gmra.mrb[0].mxu0 %v1331
      %v1458 = vpop.f32.mrb[0].mxu0
      %v1459 = vadd.f32 %v1367, %v1458
      %v1460 = vpop.f32.mrb[0].mxu0
      %v1461 = vpop.f32.mrb[0].mxu0
      %v1462 = vadd.f32 %v1367, %v1461
      %v1463 = vpop.f32.mrb[0].mxu0
      %1464 = vmatprep.mubr.bf16.mxu0 0
      %1465 = vmatmul.mubr.bf16.gmra.mrb[0].mxu0 %v1332
      %v1466 = vpop.f32.mrb[0].mxu0
      %v1467 = vadd.f32 %v1367, %v1466
      %v1468 = vpop.f32.mrb[0].mxu0
      %v1469 = vpop.f32.mrb[0].mxu0
      %v1470 = vadd.f32 %v1367, %v1469
      %v1471 = vpop.f32.mrb[0].mxu0
      %1472 = vmatprep.mubr.bf16.mxu0 0
      %1473 = vmatmul.mubr.bf16.gmra.mrb[0].mxu0 %v1333
      %v1474 = vpop.f32.mrb[0].mxu0
      %v1475 = vadd.f32 %v1367, %v1474
      %v1476 = vpop.f32.mrb[0].mxu0
      %v1477 = vpop.f32.mrb[0].mxu0
      %v1478 = vadd.f32 %v1367, %v1477
      %v1479 = vpop.f32.mrb[0].mxu0
      %1480 = vmatprep.mubr.bf16.mxu0 0
      %1481 = vmatmul.mubr.bf16.gmra.mrb[0].mxu0 %v1334
      %v1482 = vpop.f32.mrb[0].mxu0
      %v1483 = vadd.f32 %v1367, %v1482
      %v1484 = vpop.f32.mrb[0].mxu0
      %v1485 = vpop.f32.mrb[0].mxu0
      %v1486 = vadd.f32 %v1367, %v1485
      %v1487 = vpop.f32.mrb[0].mxu0
      %1488 = vmatprep.mubr.bf16.mxu0 0
      %1489 = vmatmul.mubr.bf16.gmra.mrb[0].mxu0 %v1335
      %v1490 = vpop.f32.mrb[0].mxu0
      %v1491 = vadd.f32 %v1367, %v1490
      %v1492 = vpop.f32.mrb[0].mxu0
      %v1493 = vpop.f32.mrb[0].mxu0
      %v1494 = vadd.f32 %v1367, %v1493
      %v1495 = vpop.f32.mrb[0].mxu0
      %1496 = vmatprep.mubr.bf16.mxu0 0
      %1497 = vmatmul.mubr.bf16.gmra.mrb[0].mxu0 %v1336
      %v1498 = vpop.f32.mrb[0].mxu0
      %v1499 = vadd.f32 %v1367, %v1498
      %v1500 = vpop.f32.mrb[0].mxu0
      %v1501 = vpop.f32.mrb[0].mxu0
      %v1502 = vadd.f32 %v1367, %v1501
      %v1503 = vpop.f32.mrb[0].mxu0
      %1504 = vmatprep.mubr.bf16.mxu0 0
      %1505 = vmatmul.mubr.bf16.gmra.mrb[0].mxu0 %v1337
      %v1506 = vpop.f32.mrb[0].mxu0
      %v1507 = vadd.f32 %v1367, %v1506
      %v1508 = vpop.f32.mrb[0].mxu0
      %v1509 = vpop.f32.mrb[0].mxu0
      %v1510 = vadd.f32 %v1367, %v1509
      %v1511 = vpop.f32.mrb[0].mxu0
      %1512 = vmatprep.mubr.bf16.mxu0 0
      %1513 = vmatmul.mubr.bf16.gmra.mrb[0].mxu0 %v1338
      %v1514 = vpop.f32.mrb[0].mxu0
      %v1515 = vadd.f32 %v1367, %v1514
      %v1516 = vpop.f32.mrb[0].mxu0
      %v1517 = vpop.f32.mrb[0].mxu0
      %v1518 = vadd.f32 %v1367, %v1517
      %v1519 = vpop.f32.mrb[0].mxu0
      %1520 = vmatprep.mubr.bf16.mxu0 0
      %1521 = vmatmul.mubr.bf16.gmra.mrb[0].mxu0 %v1339
      %v1522 = vpop.f32.mrb[0].mxu0
      %v1523 = vadd.f32 %v1367, %v1522
      %v1524 = vpop.f32.mrb[0].mxu0
      %v1525 = vpop.f32.mrb[0].mxu0
      %v1526 = vadd.f32 %v1367, %v1525
      %v1527 = vpop.f32.mrb[0].mxu0
      %1528 = vmatprep.mubr.bf16.mxu0 0
      %1529 = vmatmul.mubr.bf16.gmra.mrb[0].mxu0 %v1340
      %v1530 = vpop.f32.mrb[0].mxu0
      %v1531 = vadd.f32 %v1367, %v1530
      %v1532 = vpop.f32.mrb[0].mxu0
      %v1533 = vpop.f32.mrb[0].mxu0
      %v1534 = vadd.f32 %v1367, %v1533
      %v1535 = vpop.f32.mrb[0].mxu0
      %1536 = vmatprep.mubr.bf16.mxu0 0
      %1537 = vmatmul.mubr.bf16.gmra.mrb[0].mxu0 %v1341
      %v1538 = vpop.f32.mrb[0].mxu0
      %v1539 = vadd.f32 %v1367, %v1538
      %v1540 = vpop.f32.mrb[0].mxu0
      %v1541 = vpop.f32.mrb[0].mxu0
      %v1542 = vadd.f32 %v1367, %v1541
      %v1543 = vpop.f32.mrb[0].mxu0
      %1544 = vmatprep.mubr.bf16.mxu0 0
      %1545 = vmatmul.mubr.bf16.gmra.mrb[0].mxu0 %v1342
      %v1546 = vpop.f32.mrb[0].mxu0
      %v1547 = vadd.f32 %v1367, %v1546
      %v1548 = vpop.f32.mrb[0].mxu0
      %v1549 = vpop.f32.mrb[0].mxu0
      %v1550 = vadd.f32 %v1367, %v1549
      %v1551 = vpop.f32.mrb[0].mxu0
      %1552 = vmatprep.mubr.bf16.mxu0 0
      %1553 = vmatmul.mubr.bf16.gmra.mrb[0].mxu0 %v1343
      %v1554 = vpop.f32.mrb[0].mxu0
      %v1555 = vadd.f32 %v1367, %v1554
      %v1556 = vpop.f32.mrb[0].mxu0
      %v1557 = vpop.f32.mrb[0].mxu0
      %v1558 = vadd.f32 %v1367, %v1557
      %v1559 = vpop.f32.mrb[0].mxu0
      %1560 = vmatprep.mubr.bf16.mxu0 0
      %1561 = vmatmul.mubr.bf16.gmra.mrb[0].mxu0 %v1344
      %v1562 = vpop.f32.mrb[0].mxu0
      %v1563 = vadd.f32 %v1367, %v1562
      %v1564 = vpop.f32.mrb[0].mxu0
      %v1565 = vpop.f32.mrb[0].mxu0
      %v1566 = vadd.f32 %v1367, %v1565
      %v1567 = vpop.f32.mrb[0].mxu0
      %1568 = vmatprep.mubr.bf16.mxu0 0
      %1569 = vmatmul.mubr.bf16.gmra.mrb[0].mxu0 %v1345
      %v1570 = vpop.f32.mrb[0].mxu0
      %v1571 = vadd.f32 %v1367, %v1570
      %v1572 = vpop.f32.mrb[0].mxu0
      %v1573 = vpop.f32.mrb[0].mxu0
      %v1574 = vadd.f32 %v1367, %v1573
      %v1575 = vpop.f32.mrb[0].mxu0
      %1576 = vdwg.mxu0
      %v1577 = vmax.f32 %v1451, 0.0
      %v1578 = vmax.f32 %v1454, 0.0
      %v1579 = vmax.f32 %v1459, 0.0
      %v1580 = vmax.f32 %v1462, 0.0
      %v1581 = vmax.f32 %v1467, 0.0
      %v1582 = vmax.f32 %v1470, 0.0
      %v1583 = vmax.f32 %v1475, 0.0
      %v1584 = vmax.f32 %v1478, 0.0
      %v1585 = vmax.f32 %v1483, 0.0
      %v1586 = vmax.f32 %v1486, 0.0
      %v1587 = vmax.f32 %v1491, 0.0
      %v1588 = vmax.f32 %v1494, 0.0
      %v1589 = vmax.f32 %v1499, 0.0
      %v1590 = vmax.f32 %v1502, 0.0
      %v1591 = vmax.f32 %v1507, 0.0
      %v1592 = vmax.f32 %v1510, 0.0
      %v1593 = vmax.f32 %v1515, 0.0
      %v1594 = vmax.f32 %v1518, 0.0
      %v1595 = vmax.f32 %v1523, 0.0
      %v1596 = vmax.f32 %v1526, 0.0
      %v1597 = vmax.f32 %v1531, 0.0
      %v1598 = vmax.f32 %v1534, 0.0
      %v1599 = vmax.f32 %v1539, 0.0
      %v1600 = vmax.f32 %v1542, 0.0
      %v1601 = vmax.f32 %v1547, 0.0
      %v1602 = vmax.f32 %v1550, 0.0
      %v1603 = vmax.f32 %v1555, 0.0
      %v1604 = vmax.f32 %v1558, 0.0
      %v1605 = vmax.f32 %v1563, 0.0
      %v1606 = vmax.f32 %v1566, 0.0
      %v1607 = vmax.f32 %v1571, 0.0
      %v1608 = vmax.f32 %v1574, 0.0
      %v1609 = vld [vmem:[%s348] sm:$0x1]
      %v1610 = vpack.c.bf16 %v1578, %v1577
      %v1611 = vpack.c.bf16 %v1580, %v1579
      %v1612 = vpack.c.bf16 %v1582, %v1581
      %v1613 = vpack.c.bf16 %v1584, %v1583
      %v1614 = vpack.c.bf16 %v1586, %v1585
      %v1615 = vpack.c.bf16 %v1588, %v1587
      %v1616 = vpack.c.bf16 %v1590, %v1589
      %v1617 = vpack.c.bf16 %v1592, %v1591
      %v1618 = vpack.c.bf16 %v1594, %v1593
      %v1619 = vpack.c.bf16 %v1596, %v1595
      %v1620 = vpack.c.bf16 %v1598, %v1597
      %v1621 = vpack.c.bf16 %v1600, %v1599
      %v1622 = vpack.c.bf16 %v1602, %v1601
      %v1623 = vpack.c.bf16 %v1604, %v1603
      %v1624 = vpack.c.bf16 %v1606, %v1605
      %v1625 = vpack.c.bf16 %v1608, %v1607
      %v1626 = vld [vmem:[%s4] sm:$0xf]
      %v1627 = vld [vmem:[%s4 + $0x4] sm:$0xf]
      %v1628 = vld [vmem:[%s4 + $0x8] sm:$0xf]
      %v1629 = vld [vmem:[%s4 + $0xc] sm:$0xf]
      %v1630 = vld [vmem:[%s4 + $0x10] sm:$0xf]
      %v1631 = vld [vmem:[%s4 + $0x14] sm:$0xf]
      %v1632 = vld [vmem:[%s4 + $0x18] sm:$0xf]
      %v1633 = vld [vmem:[%s4 + $0x1c] sm:$0xf]
      %v1634 = vld [vmem:[%s4 + $0x20] sm:$0xf]
      %v1635 = vld [vmem:[%s4 + $0x24] sm:$0xf]
      %v1636 = vld [vmem:[%s4 + $0x28] sm:$0xf]
      %v1637 = vld [vmem:[%s4 + $0x2c] sm:$0xf]
      %v1638 = vld [vmem:[%s4 + $0x30] sm:$0xf]
      %v1639 = vld [vmem:[%s4 + $0x34] sm:$0xf]
      %v1640 = vld [vmem:[%s4 + $0x38] sm:$0xf]
      %v1641 = vld [vmem:[%s4 + $0x3c] sm:$0xf]
      %v1642 = vpack.c.bf16 %v1609, %v1609
      %s1643 = scalar_lea.vmem %s4, 64
      %v1644 = vld [vmem:[%s1643] sm:$0xf]
      %v1645 = vld [vmem:[%s1643 + $0x4] sm:$0xf]
      %v1646 = vld [vmem:[%s1643 + $0x8] sm:$0xf]
      %v1647 = vld [vmem:[%s1643 + $0xc] sm:$0xf]
      %v1648 = vld [vmem:[%s1643 + $0x10] sm:$0xf]
      %v1649 = vld [vmem:[%s1643 + $0x14] sm:$0xf]
      %v1650 = vld [vmem:[%s1643 + $0x18] sm:$0xf]
      %v1651 = vld [vmem:[%s1643 + $0x1c] sm:$0xf]
      %v1652 = vld [vmem:[%s1643 + $0x20] sm:$0xf]
      %v1653 = vld [vmem:[%s1643 + $0x24] sm:$0xf]
      %v1654 = vld [vmem:[%s1643 + $0x28] sm:$0xf]
      %v1655 = vld [vmem:[%s1643 + $0x2c] sm:$0xf]
      %v1656 = vld [vmem:[%s1643 + $0x30] sm:$0xf]
      %v1657 = vld [vmem:[%s1643 + $0x34] sm:$0xf]
      %v1658 = vld [vmem:[%s1643 + $0x38] sm:$0xf]
      %v1659 = vld [vmem:[%s1643 + $0x3c] sm:$0xf]
      %v1676 = vunpack.c.l.b16 %v1644
      %v1677 = vunpack.c.l.b16 %v1645
      %v1678 = vunpack.c.l.b16 %v1646
      %v1679 = vunpack.c.l.b16 %v1647
      %v1680 = vunpack.c.l.b16 %v1648
      %v1681 = vunpack.c.l.b16 %v1649
      %v1682 = vunpack.c.l.b16 %v1650
      %v1683 = vunpack.c.l.b16 %v1651
      %v1684 = vunpack.c.l.b16 %v1652
      %v1685 = vunpack.c.l.b16 %v1653
      %v1686 = vunpack.c.l.b16 %v1654
      %v1687 = vunpack.c.l.b16 %v1655
      %v1688 = vunpack.c.l.b16 %v1656
      %v1689 = vunpack.c.l.b16 %v1657
      %v1690 = vunpack.c.l.b16 %v1658
      %v1691 = vunpack.c.l.b16 %v1659
      %v1692 = vpack.c.b16 %v1677, %v1676
      %v1693 = vpack.c.b16 %v1679, %v1678
      %v1694 = vpack.c.b16 %v1681, %v1680
      %v1695 = vpack.c.b16 %v1683, %v1682
      %v1696 = vpack.c.b16 %v1685, %v1684
      %v1697 = vpack.c.b16 %v1687, %v1686
      %v1698 = vpack.c.b16 %v1689, %v1688
      %v1699 = vpack.c.b16 %v1691, %v1690
      %1708 = vmatprep.subr.bf16.mxu0 0
      %1709 = vmatpush1.bf16.msra.mxu0 %v1692
      %1710 = vmatprep.subr.bf16.mxu0 0
      %1711 = vmatpush1.bf16.msra.mxu0 %v1693
      %1712 = vmatprep.subr.bf16.mxu0 0
      %1713 = vmatpush1.bf16.msra.mxu0 %v1694
      %1714 = vmatprep.subr.bf16.mxu0 0
      %1715 = vmatpush1.bf16.msra.mxu0 %v1695
      %1716 = vmatprep.subr.bf16.mxu0 0
      %1717 = vmatpush1.bf16.msra.mxu0 %v1696
      %1718 = vmatprep.subr.bf16.mxu0 0
      %1719 = vmatpush1.bf16.msra.mxu0 %v1697
      %1720 = vmatprep.subr.bf16.mxu0 0
      %1721 = vmatpush1.bf16.msra.mxu0 %v1698
      %1722 = vmatprep.subr.bf16.mxu0 0
      %1723 = vmatpush1.bf16.msra.mxu0 %v1699
      %1724 = vmatprep.subr.bf16.mxu0 0
      %1725 = vmatpush1.bf16.msra.mxu0 0
      %1726 = vmatprep.subr.bf16.mxu0 0
      %1727 = vmatpush1.bf16.msra.mxu0 0
      %1728 = vmatprep.subr.bf16.mxu0 0
      %1729 = vmatpush1.bf16.msra.mxu0 0
      %1730 = vmatprep.subr.bf16.mxu0 0
      %1731 = vmatpush1.bf16.msra.mxu0 0
      %1732 = vmatprep.subr.bf16.mxu0 0
      %1733 = vmatpush1.bf16.msra.mxu0 0
      %1734 = vmatprep.subr.bf16.mxu0 0
      %1735 = vmatpush1.bf16.msra.mxu0 0
      %1736 = vmatprep.subr.bf16.mxu0 0
      %1737 = vmatpush1.bf16.msra.mxu0 0
      %1738 = vmatprep.subr.bf16.mxu0 0
      %1739 = vmatpush1.bf16.msra.mxu0 0
      %1740 = vmatprep.mubr.bf16.mxu0 0
      %1741 = vmatmul.mubr.bf16.gmra.mrb[0].mxu0 %v1642
      %v1742 = vpop.f32.mrb[0].mxu0
      %v1743 = vadd.f32 0.0, %v1742
      %v1744 = vpop.f32.mrb[0].mxu0
      %v1745 = vpop.f32.mrb[0].mxu0
      %v1746 = vpop.f32.mrb[0].mxu0
      %1747 = vdwg.mxu0
      %v1748 = vlaneseq
      %v1749 = vshrl.u32 %v1748, 7
      %v1750 = vsub.s32 0, %v1749
      %v1751 = vrot.slane %v1743, %v1750
      %v1768 = vunpack.c.l.b16 %v1626
      %v1769 = vunpack.c.l.b16 %v1627
      %v1770 = vunpack.c.l.b16 %v1628
      %v1771 = vunpack.c.l.b16 %v1629
      %v1772 = vunpack.c.l.b16 %v1630
      %v1773 = vunpack.c.l.b16 %v1631
      %v1774 = vunpack.c.l.b16 %v1632
      %v1775 = vunpack.c.l.b16 %v1633
      %v1776 = vunpack.c.l.b16 %v1634
      %v1777 = vunpack.c.l.b16 %v1635
      %v1778 = vunpack.c.l.b16 %v1636
      %v1779 = vunpack.c.l.b16 %v1637
      %v1780 = vunpack.c.l.b16 %v1638
      %v1781 = vunpack.c.l.b16 %v1639
      %v1782 = vunpack.c.l.b16 %v1640
      %v1783 = vunpack.c.l.b16 %v1641
      %v1784 = vpack.c.b16 %v1769, %v1768
      %v1785 = vpack.c.b16 %v1771, %v1770
      %v1786 = vpack.c.b16 %v1773, %v1772
      %v1787 = vpack.c.b16 %v1775, %v1774
      %v1788 = vpack.c.b16 %v1777, %v1776
      %v1789 = vpack.c.b16 %v1779, %v1778
      %v1790 = vpack.c.b16 %v1781, %v1780
      %v1791 = vpack.c.b16 %v1783, %v1782
      %1800 = vmatprep.subr.bf16.mxu0 0
      %1801 = vmatpush1.bf16.msra.mxu0 %v1784
      %1802 = vmatprep.subr.bf16.mxu0 0
      %1803 = vmatpush1.bf16.msra.mxu0 %v1785
      %1804 = vmatprep.subr.bf16.mxu0 0
      %1805 = vmatpush1.bf16.msra.mxu0 %v1786
      %1806 = vmatprep.subr.bf16.mxu0 0
      %1807 = vmatpush1.bf16.msra.mxu0 %v1787
      %1808 = vmatprep.subr.bf16.mxu0 0
      %1809 = vmatpush1.bf16.msra.mxu0 %v1788
      %1810 = vmatprep.subr.bf16.mxu0 0
      %1811 = vmatpush1.bf16.msra.mxu0 %v1789
      %1812 = vmatprep.subr.bf16.mxu0 0
      %1813 = vmatpush1.bf16.msra.mxu0 %v1790
      %1814 = vmatprep.subr.bf16.mxu0 0
      %1815 = vmatpush1.bf16.msra.mxu0 %v1791
      %1816 = vmatprep.subr.bf16.mxu0 0
      %1817 = vmatpush1.bf16.msra.mxu0 0
      %1818 = vmatprep.subr.bf16.mxu0 0
      %1819 = vmatpush1.bf16.msra.mxu0 0
      %1820 = vmatprep.subr.bf16.mxu0 0
      %1821 = vmatpush1.bf16.msra.mxu0 0
      %1822 = vmatprep.subr.bf16.mxu0 0
      %1823 = vmatpush1.bf16.msra.mxu0 0
      %1824 = vmatprep.subr.bf16.mxu0 0
      %1825 = vmatpush1.bf16.msra.mxu0 0
      %1826 = vmatprep.subr.bf16.mxu0 0
      %1827 = vmatpush1.bf16.msra.mxu0 0
      %1828 = vmatprep.subr.bf16.mxu0 0
      %1829 = vmatpush1.bf16.msra.mxu0 0
      %1830 = vmatprep.subr.bf16.mxu0 0
      %1831 = vmatpush1.bf16.msra.mxu0 0
      %1832 = vmatprep.mubr.bf16.mxu0 0
      %1833 = vmatmul.mubr.bf16.gmra.mrb[0].mxu0 %v1610
      %v1834 = vpop.f32.mrb[0].mxu0
      %v1835 = vadd.f32 %v1751, %v1834
      %v1836 = vpop.f32.mrb[0].mxu0
      %v1837 = vpop.f32.mrb[0].mxu0
      %v1838 = vadd.f32 %v1751, %v1837
      %v1839 = vpop.f32.mrb[0].mxu0
      %1840 = vmatprep.mubr.bf16.mxu0 0
      %1841 = vmatmul.mubr.bf16.gmra.mrb[0].mxu0 %v1611
      %v1842 = vpop.f32.mrb[0].mxu0
      %v1843 = vadd.f32 %v1751, %v1842
      %v1844 = vpop.f32.mrb[0].mxu0
      %v1845 = vpop.f32.mrb[0].mxu0
      %v1846 = vadd.f32 %v1751, %v1845
      %v1847 = vpop.f32.mrb[0].mxu0
      %1848 = vmatprep.mubr.bf16.mxu0 0
      %1849 = vmatmul.mubr.bf16.gmra.mrb[0].mxu0 %v1612
      %v1850 = vpop.f32.mrb[0].mxu0
      %v1851 = vadd.f32 %v1751, %v1850
      %v1852 = vpop.f32.mrb[0].mxu0
      %v1853 = vpop.f32.mrb[0].mxu0
      %v1854 = vadd.f32 %v1751, %v1853
      %v1855 = vpop.f32.mrb[0].mxu0
      %1856 = vmatprep.mubr.bf16.mxu0 0
      %1857 = vmatmul.mubr.bf16.gmra.mrb[0].mxu0 %v1613
      %v1858 = vpop.f32.mrb[0].mxu0
      %v1859 = vadd.f32 %v1751, %v1858
      %v1860 = vpop.f32.mrb[0].mxu0
      %v1861 = vpop.f32.mrb[0].mxu0
      %v1862 = vadd.f32 %v1751, %v1861
      %v1863 = vpop.f32.mrb[0].mxu0
      %1864 = vmatprep.mubr.bf16.mxu0 0
      %1865 = vmatmul.mubr.bf16.gmra.mrb[0].mxu0 %v1614
      %v1866 = vpop.f32.mrb[0].mxu0
      %v1867 = vadd.f32 %v1751, %v1866
      %v1868 = vpop.f32.mrb[0].mxu0
      %v1869 = vpop.f32.mrb[0].mxu0
      %v1870 = vadd.f32 %v1751, %v1869
      %v1871 = vpop.f32.mrb[0].mxu0
      %1872 = vmatprep.mubr.bf16.mxu0 0
      %1873 = vmatmul.mubr.bf16.gmra.mrb[0].mxu0 %v1615
      %v1874 = vpop.f32.mrb[0].mxu0
      %v1875 = vadd.f32 %v1751, %v1874
      %v1876 = vpop.f32.mrb[0].mxu0
      %v1877 = vpop.f32.mrb[0].mxu0
      %v1878 = vadd.f32 %v1751, %v1877
      %v1879 = vpop.f32.mrb[0].mxu0
      %1880 = vmatprep.mubr.bf16.mxu0 0
      %1881 = vmatmul.mubr.bf16.gmra.mrb[0].mxu0 %v1616
      %v1882 = vpop.f32.mrb[0].mxu0
      %v1883 = vadd.f32 %v1751, %v1882
      %v1884 = vpop.f32.mrb[0].mxu0
      %v1885 = vpop.f32.mrb[0].mxu0
      %v1886 = vadd.f32 %v1751, %v1885
      %v1887 = vpop.f32.mrb[0].mxu0
      %1888 = vmatprep.mubr.bf16.mxu0 0
      %1889 = vmatmul.mubr.bf16.gmra.mrb[0].mxu0 %v1617
      %v1890 = vpop.f32.mrb[0].mxu0
      %v1891 = vadd.f32 %v1751, %v1890
      %v1892 = vpop.f32.mrb[0].mxu0
      %v1893 = vpop.f32.mrb[0].mxu0
      %v1894 = vadd.f32 %v1751, %v1893
      %v1895 = vpop.f32.mrb[0].mxu0
      %1896 = vmatprep.mubr.bf16.mxu0 0
      %1897 = vmatmul.mubr.bf16.gmra.mrb[0].mxu0 %v1618
      %v1898 = vpop.f32.mrb[0].mxu0
      %v1899 = vadd.f32 %v1751, %v1898
      %v1900 = vpop.f32.mrb[0].mxu0
      %v1901 = vpop.f32.mrb[0].mxu0
      %v1902 = vadd.f32 %v1751, %v1901
      %v1903 = vpop.f32.mrb[0].mxu0
      %1904 = vmatprep.mubr.bf16.mxu0 0
      %1905 = vmatmul.mubr.bf16.gmra.mrb[0].mxu0 %v1619
      %v1906 = vpop.f32.mrb[0].mxu0
      %v1907 = vadd.f32 %v1751, %v1906
      %v1908 = vpop.f32.mrb[0].mxu0
      %v1909 = vpop.f32.mrb[0].mxu0
      %v1910 = vadd.f32 %v1751, %v1909
      %v1911 = vpop.f32.mrb[0].mxu0
      %1912 = vmatprep.mubr.bf16.mxu0 0
      %1913 = vmatmul.mubr.bf16.gmra.mrb[0].mxu0 %v1620
      %v1914 = vpop.f32.mrb[0].mxu0
      %v1915 = vadd.f32 %v1751, %v1914
      %v1916 = vpop.f32.mrb[0].mxu0
      %v1917 = vpop.f32.mrb[0].mxu0
      %v1918 = vadd.f32 %v1751, %v1917
      %v1919 = vpop.f32.mrb[0].mxu0
      %1920 = vmatprep.mubr.bf16.mxu0 0
      %1921 = vmatmul.mubr.bf16.gmra.mrb[0].mxu0 %v1621
      %v1922 = vpop.f32.mrb[0].mxu0
      %v1923 = vadd.f32 %v1751, %v1922
      %v1924 = vpop.f32.mrb[0].mxu0
      %v1925 = vpop.f32.mrb[0].mxu0
      %v1926 = vadd.f32 %v1751, %v1925
      %v1927 = vpop.f32.mrb[0].mxu0
      %1928 = vmatprep.mubr.bf16.mxu0 0
      %1929 = vmatmul.mubr.bf16.gmra.mrb[0].mxu0 %v1622
      %v1930 = vpop.f32.mrb[0].mxu0
      %v1931 = vadd.f32 %v1751, %v1930
      %v1932 = vpop.f32.mrb[0].mxu0
      %v1933 = vpop.f32.mrb[0].mxu0
      %v1934 = vadd.f32 %v1751, %v1933
      %v1935 = vpop.f32.mrb[0].mxu0
      %1936 = vmatprep.mubr.bf16.mxu0 0
      %1937 = vmatmul.mubr.bf16.gmra.mrb[0].mxu0 %v1623
      %v1938 = vpop.f32.mrb[0].mxu0
      %v1939 = vadd.f32 %v1751, %v1938
      %v1940 = vpop.f32.mrb[0].mxu0
      %v1941 = vpop.f32.mrb[0].mxu0
      %v1942 = vadd.f32 %v1751, %v1941
      %v1943 = vpop.f32.mrb[0].mxu0
      %1944 = vmatprep.mubr.bf16.mxu0 0
      %1945 = vmatmul.mubr.bf16.gmra.mrb[0].mxu0 %v1624
      %v1946 = vpop.f32.mrb[0].mxu0
      %v1947 = vadd.f32 %v1751, %v1946
      %v1948 = vpop.f32.mrb[0].mxu0
      %v1949 = vpop.f32.mrb[0].mxu0
      %v1950 = vadd.f32 %v1751, %v1949
      %v1951 = vpop.f32.mrb[0].mxu0
      %1952 = vmatprep.mubr.bf16.mxu0 0
      %1953 = vmatmul.mubr.bf16.gmra.mrb[0].mxu0 %v1625
      %v1954 = vpop.f32.mrb[0].mxu0
      %v1955 = vadd.f32 %v1751, %v1954
      %v1956 = vpop.f32.mrb[0].mxu0
      %v1957 = vpop.f32.mrb[0].mxu0
      %v1958 = vadd.f32 %v1751, %v1957
      %v1959 = vpop.f32.mrb[0].mxu0
      %1960 = vdwg.mxu0
      %v1961 = vld [vmem:[%s6 + $0x3] sm:$0x1]
      %v1962 = vlaneseq
      %v1963 = vshrl.u32 %v1962, 7
      %v1964 = vsub.s32 0, %v1963
      %v1965 = vrot.slane %v1961, %v1964
      %v1966 = vadd.f32 %v1835, %v1965
      %v1967 = vadd.f32 %v1838, %v1965
      %v1968 = vadd.f32 %v1843, %v1965
      %v1969 = vadd.f32 %v1846, %v1965
      %v1970 = vadd.f32 %v1851, %v1965
      %v1971 = vadd.f32 %v1854, %v1965
      %v1972 = vadd.f32 %v1859, %v1965
      %v1973 = vadd.f32 %v1862, %v1965
      %v1974 = vadd.f32 %v1867, %v1965
      %v1975 = vadd.f32 %v1870, %v1965
      %v1976 = vadd.f32 %v1875, %v1965
      %v1977 = vadd.f32 %v1878, %v1965
      %v1978 = vadd.f32 %v1883, %v1965
      %v1979 = vadd.f32 %v1886, %v1965
      %v1980 = vadd.f32 %v1891, %v1965
      %v1981 = vadd.f32 %v1894, %v1965
      %v1982 = vadd.f32 %v1899, %v1965
      %v1983 = vadd.f32 %v1902, %v1965
      %v1984 = vadd.f32 %v1907, %v1965
      %v1985 = vadd.f32 %v1910, %v1965
      %v1986 = vadd.f32 %v1915, %v1965
      %v1987 = vadd.f32 %v1918, %v1965
      %v1988 = vadd.f32 %v1923, %v1965
      %v1989 = vadd.f32 %v1926, %v1965
      %v1990 = vadd.f32 %v1931, %v1965
      %v1991 = vadd.f32 %v1934, %v1965
      %v1992 = vadd.f32 %v1939, %v1965
      %v1993 = vadd.f32 %v1942, %v1965
      %v1994 = vadd.f32 %v1947, %v1965
      %v1995 = vadd.f32 %v1950, %v1965
      %v1996 = vadd.f32 %v1955, %v1965
      %v1997 = vadd.f32 %v1958, %v1965
      %v1998 = vmax.f32 %v1966, 0.0
      %v1999 = vmax.f32 %v1967, 0.0
      %v2000 = vmax.f32 %v1968, 0.0
      %v2001 = vmax.f32 %v1969, 0.0
      %v2002 = vmax.f32 %v1970, 0.0
      %v2003 = vmax.f32 %v1971, 0.0
      %v2004 = vmax.f32 %v1972, 0.0
      %v2005 = vmax.f32 %v1973, 0.0
      %v2006 = vmax.f32 %v1974, 0.0
      %v2007 = vmax.f32 %v1975, 0.0
      %v2008 = vmax.f32 %v1976, 0.0
      %v2009 = vmax.f32 %v1977, 0.0
      %v2010 = vmax.f32 %v1978, 0.0
      %v2011 = vmax.f32 %v1979, 0.0
      %v2012 = vmax.f32 %v1980, 0.0
      %v2013 = vmax.f32 %v1981, 0.0
      %v2014 = vmax.f32 %v1982, 0.0
      %v2015 = vmax.f32 %v1983, 0.0
      %v2016 = vmax.f32 %v1984, 0.0
      %v2017 = vmax.f32 %v1985, 0.0
      %v2018 = vmax.f32 %v1986, 0.0
      %v2019 = vmax.f32 %v1987, 0.0
      %v2020 = vmax.f32 %v1988, 0.0
      %v2021 = vmax.f32 %v1989, 0.0
      %v2022 = vmax.f32 %v1990, 0.0
      %v2023 = vmax.f32 %v1991, 0.0
      %v2024 = vmax.f32 %v1992, 0.0
      %v2025 = vmax.f32 %v1993, 0.0
      %v2026 = vmax.f32 %v1994, 0.0
      %v2027 = vmax.f32 %v1995, 0.0
      %v2028 = vmax.f32 %v1996, 0.0
      %v2029 = vmax.f32 %v1997, 0.0
      %v2030 = vpack.c.bf16 %v1999, %v1998
      %v2031 = vpack.c.bf16 %v2001, %v2000
      %v2032 = vpack.c.bf16 %v2003, %v2002
      %v2033 = vpack.c.bf16 %v2005, %v2004
      %v2034 = vpack.c.bf16 %v2007, %v2006
      %v2035 = vpack.c.bf16 %v2009, %v2008
      %v2036 = vpack.c.bf16 %v2011, %v2010
      %v2037 = vpack.c.bf16 %v2013, %v2012
      %v2038 = vpack.c.bf16 %v2015, %v2014
      %v2039 = vpack.c.bf16 %v2017, %v2016
      %v2040 = vpack.c.bf16 %v2019, %v2018
      %v2041 = vpack.c.bf16 %v2021, %v2020
      %v2042 = vpack.c.bf16 %v2023, %v2022
      %v2043 = vpack.c.bf16 %v2025, %v2024
      %v2044 = vpack.c.bf16 %v2027, %v2026
      %v2045 = vpack.c.bf16 %v2029, %v2028
      %v2046 = vld [vmem:[%s5] sm:$0xf]
      %v2047 = vld [vmem:[%s5 + $0x4] sm:$0xf]
      %v2048 = vld [vmem:[%s5 + $0x8] sm:$0xf]
      %v2049 = vld [vmem:[%s5 + $0xc] sm:$0xf]
      %v2050 = vld [vmem:[%s5 + $0x10] sm:$0xf]
      %v2051 = vld [vmem:[%s5 + $0x14] sm:$0xf]
      %v2052 = vld [vmem:[%s5 + $0x18] sm:$0xf]
      %v2053 = vld [vmem:[%s5 + $0x1c] sm:$0xf]
      %v2054 = vld [vmem:[%s5 + $0x20] sm:$0xf]
      %v2055 = vld [vmem:[%s5 + $0x24] sm:$0xf]
      %v2056 = vld [vmem:[%s5 + $0x28] sm:$0xf]
      %v2057 = vld [vmem:[%s5 + $0x2c] sm:$0xf]
      %v2058 = vld [vmem:[%s5 + $0x30] sm:$0xf]
      %v2059 = vld [vmem:[%s5 + $0x34] sm:$0xf]
      %v2060 = vld [vmem:[%s5 + $0x38] sm:$0xf]
      %v2061 = vld [vmem:[%s5 + $0x3c] sm:$0xf]
      %v2062 = vld [vmem:[%s7] sm:$0x1]
      %v2064 = vlaneseq
      %v2065 = vshrl.u32 %v2064, 7
      %v2066 = vsub.s32 0, %v2065
      %v2067 = vrot.slane %v2062, %v2066
      %v2085 = vunpack.c.l.b16 %v2046
      %v2086 = vunpack.c.l.b16 %v2047
      %v2087 = vunpack.c.l.b16 %v2048
      %v2088 = vunpack.c.l.b16 %v2049
      %v2089 = vunpack.c.l.b16 %v2050
      %v2090 = vunpack.c.l.b16 %v2051
      %v2091 = vunpack.c.l.b16 %v2052
      %v2092 = vunpack.c.l.b16 %v2053
      %v2093 = vunpack.c.l.b16 %v2054
      %v2094 = vunpack.c.l.b16 %v2055
      %v2095 = vunpack.c.l.b16 %v2056
      %v2096 = vunpack.c.l.b16 %v2057
      %v2097 = vunpack.c.l.b16 %v2058
      %v2098 = vunpack.c.l.b16 %v2059
      %v2099 = vunpack.c.l.b16 %v2060
      %v2100 = vunpack.c.l.b16 %v2061
      %v2101 = vpack.c.b16 %v2086, %v2085
      %v2102 = vpack.c.b16 %v2088, %v2087
      %v2103 = vpack.c.b16 %v2090, %v2089
      %v2104 = vpack.c.b16 %v2092, %v2091
      %v2105 = vpack.c.b16 %v2094, %v2093
      %v2106 = vpack.c.b16 %v2096, %v2095
      %v2107 = vpack.c.b16 %v2098, %v2097
      %v2108 = vpack.c.b16 %v2100, %v2099
      %2117 = vmatprep.subr.bf16.mxu0 0
      %2118 = vmatpush1.bf16.msra.mxu0 %v2101
      %2119 = vmatprep.subr.bf16.mxu0 0
      %2120 = vmatpush1.bf16.msra.mxu0 %v2102
      %2121 = vmatprep.subr.bf16.mxu0 0
      %2122 = vmatpush1.bf16.msra.mxu0 %v2103
      %2123 = vmatprep.subr.bf16.mxu0 0
      %2124 = vmatpush1.bf16.msra.mxu0 %v2104
      %2125 = vmatprep.subr.bf16.mxu0 0
      %2126 = vmatpush1.bf16.msra.mxu0 %v2105
      %2127 = vmatprep.subr.bf16.mxu0 0
      %2128 = vmatpush1.bf16.msra.mxu0 %v2106
      %2129 = vmatprep.subr.bf16.mxu0 0
      %2130 = vmatpush1.bf16.msra.mxu0 %v2107
      %2131 = vmatprep.subr.bf16.mxu0 0
      %2132 = vmatpush1.bf16.msra.mxu0 %v2108
      %2133 = vmatprep.subr.bf16.mxu0 0
      %2134 = vmatpush1.bf16.msra.mxu0 0
      %2135 = vmatprep.subr.bf16.mxu0 0
      %2136 = vmatpush1.bf16.msra.mxu0 0
      %2137 = vmatprep.subr.bf16.mxu0 0
      %2138 = vmatpush1.bf16.msra.mxu0 0
      %2139 = vmatprep.subr.bf16.mxu0 0
      %2140 = vmatpush1.bf16.msra.mxu0 0
      %2141 = vmatprep.subr.bf16.mxu0 0
      %2142 = vmatpush1.bf16.msra.mxu0 0
      %2143 = vmatprep.subr.bf16.mxu0 0
      %2144 = vmatpush1.bf16.msra.mxu0 0
      %2145 = vmatprep.subr.bf16.mxu0 0
      %2146 = vmatpush1.bf16.msra.mxu0 0
      %2147 = vmatprep.subr.bf16.mxu0 0
      %2148 = vmatpush1.bf16.msra.mxu0 0
      %2149 = vmatprep.mubr.bf16.mxu0 0
      %2150 = vmatmul.mubr.bf16.gmra.mrb[0].mxu0 %v2030
      %v2151 = vpop.f32.mrb[0].mxu0
      %v2152 = vadd.f32 %v2067, %v2151
      %v2153 = vpop.f32.mrb[0].mxu0
      %v2154 = vpop.f32.mrb[0].mxu0
      %v2155 = vadd.f32 %v2067, %v2154
      %v2156 = vpop.f32.mrb[0].mxu0
      %2157 = vmatprep.mubr.bf16.mxu0 0
      %2158 = vmatmul.mubr.bf16.gmra.mrb[0].mxu0 %v2031
      %v2159 = vpop.f32.mrb[0].mxu0
      %v2160 = vadd.f32 %v2067, %v2159
      %v2161 = vpop.f32.mrb[0].mxu0
      %v2162 = vpop.f32.mrb[0].mxu0
      %v2163 = vadd.f32 %v2067, %v2162
      %v2164 = vpop.f32.mrb[0].mxu0
      %2165 = vmatprep.mubr.bf16.mxu0 0
      %2166 = vmatmul.mubr.bf16.gmra.mrb[0].mxu0 %v2032
      %v2167 = vpop.f32.mrb[0].mxu0
      %v2168 = vadd.f32 %v2067, %v2167
      %v2169 = vpop.f32.mrb[0].mxu0
      %v2170 = vpop.f32.mrb[0].mxu0
      %v2171 = vadd.f32 %v2067, %v2170
      %v2172 = vpop.f32.mrb[0].mxu0
      %2173 = vmatprep.mubr.bf16.mxu0 0
      %2174 = vmatmul.mubr.bf16.gmra.mrb[0].mxu0 %v2033
      %v2175 = vpop.f32.mrb[0].mxu0
      %v2176 = vadd.f32 %v2067, %v2175
      %v2177 = vpop.f32.mrb[0].mxu0
      %v2178 = vpop.f32.mrb[0].mxu0
      %v2179 = vadd.f32 %v2067, %v2178
      %v2180 = vpop.f32.mrb[0].mxu0
      %2181 = vmatprep.mubr.bf16.mxu0 0
      %2182 = vmatmul.mubr.bf16.gmra.mrb[0].mxu0 %v2034
      %v2183 = vpop.f32.mrb[0].mxu0
      %v2184 = vadd.f32 %v2067, %v2183
      %v2185 = vpop.f32.mrb[0].mxu0
      %v2186 = vpop.f32.mrb[0].mxu0
      %v2187 = vadd.f32 %v2067, %v2186
      %v2188 = vpop.f32.mrb[0].mxu0
      %2189 = vmatprep.mubr.bf16.mxu0 0
      %2190 = vmatmul.mubr.bf16.gmra.mrb[0].mxu0 %v2035
      %v2191 = vpop.f32.mrb[0].mxu0
      %v2192 = vadd.f32 %v2067, %v2191
      %v2193 = vpop.f32.mrb[0].mxu0
      %v2194 = vpop.f32.mrb[0].mxu0
      %v2195 = vadd.f32 %v2067, %v2194
      %v2196 = vpop.f32.mrb[0].mxu0
      %2197 = vmatprep.mubr.bf16.mxu0 0
      %2198 = vmatmul.mubr.bf16.gmra.mrb[0].mxu0 %v2036
      %v2199 = vpop.f32.mrb[0].mxu0
      %v2200 = vadd.f32 %v2067, %v2199
      %v2201 = vpop.f32.mrb[0].mxu0
      %v2202 = vpop.f32.mrb[0].mxu0
      %v2203 = vadd.f32 %v2067, %v2202
      %v2204 = vpop.f32.mrb[0].mxu0
      %2205 = vmatprep.mubr.bf16.mxu0 0
      %2206 = vmatmul.mubr.bf16.gmra.mrb[0].mxu0 %v2037
      %v2207 = vpop.f32.mrb[0].mxu0
      %v2208 = vadd.f32 %v2067, %v2207
      %v2209 = vpop.f32.mrb[0].mxu0
      %v2210 = vpop.f32.mrb[0].mxu0
      %v2211 = vadd.f32 %v2067, %v2210
      %v2212 = vpop.f32.mrb[0].mxu0
      %2213 = vmatprep.mubr.bf16.mxu0 0
      %2214 = vmatmul.mubr.bf16.gmra.mrb[0].mxu0 %v2038
      %v2215 = vpop.f32.mrb[0].mxu0
      %v2216 = vadd.f32 %v2067, %v2215
      %v2217 = vpop.f32.mrb[0].mxu0
      %v2218 = vpop.f32.mrb[0].mxu0
      %v2219 = vadd.f32 %v2067, %v2218
      %v2220 = vpop.f32.mrb[0].mxu0
      %2221 = vmatprep.mubr.bf16.mxu0 0
      %2222 = vmatmul.mubr.bf16.gmra.mrb[0].mxu0 %v2039
      %v2223 = vpop.f32.mrb[0].mxu0
      %v2224 = vadd.f32 %v2067, %v2223
      %v2225 = vpop.f32.mrb[0].mxu0
      %v2226 = vpop.f32.mrb[0].mxu0
      %v2227 = vadd.f32 %v2067, %v2226
      %v2228 = vpop.f32.mrb[0].mxu0
      %2229 = vmatprep.mubr.bf16.mxu0 0
      %2230 = vmatmul.mubr.bf16.gmra.mrb[0].mxu0 %v2040
      %v2231 = vpop.f32.mrb[0].mxu0
      %v2232 = vadd.f32 %v2067, %v2231
      %v2233 = vpop.f32.mrb[0].mxu0
      %v2234 = vpop.f32.mrb[0].mxu0
      %v2235 = vadd.f32 %v2067, %v2234
      %v2236 = vpop.f32.mrb[0].mxu0
      %2237 = vmatprep.mubr.bf16.mxu0 0
      %2238 = vmatmul.mubr.bf16.gmra.mrb[0].mxu0 %v2041
      %v2239 = vpop.f32.mrb[0].mxu0
      %v2240 = vadd.f32 %v2067, %v2239
      %v2241 = vpop.f32.mrb[0].mxu0
      %v2242 = vpop.f32.mrb[0].mxu0
      %v2243 = vadd.f32 %v2067, %v2242
      %v2244 = vpop.f32.mrb[0].mxu0
      %2245 = vmatprep.mubr.bf16.mxu0 0
      %2246 = vmatmul.mubr.bf16.gmra.mrb[0].mxu0 %v2042
      %v2247 = vpop.f32.mrb[0].mxu0
      %v2248 = vadd.f32 %v2067, %v2247
      %v2249 = vpop.f32.mrb[0].mxu0
      %v2250 = vpop.f32.mrb[0].mxu0
      %v2251 = vadd.f32 %v2067, %v2250
      %v2252 = vpop.f32.mrb[0].mxu0
      %2253 = vmatprep.mubr.bf16.mxu0 0
      %2254 = vmatmul.mubr.bf16.gmra.mrb[0].mxu0 %v2043
      %v2255 = vpop.f32.mrb[0].mxu0
      %v2256 = vadd.f32 %v2067, %v2255
      %v2257 = vpop.f32.mrb[0].mxu0
      %v2258 = vpop.f32.mrb[0].mxu0
      %v2259 = vadd.f32 %v2067, %v2258
      %v2260 = vpop.f32.mrb[0].mxu0
      %2261 = vmatprep.mubr.bf16.mxu0 0
      %2262 = vmatmul.mubr.bf16.gmra.mrb[0].mxu0 %v2044
      %v2263 = vpop.f32.mrb[0].mxu0
      %v2264 = vadd.f32 %v2067, %v2263
      %v2265 = vpop.f32.mrb[0].mxu0
      %v2266 = vpop.f32.mrb[0].mxu0
      %v2267 = vadd.f32 %v2067, %v2266
      %v2268 = vpop.f32.mrb[0].mxu0
      %2269 = vmatprep.mubr.bf16.mxu0 0
      %2270 = vmatmul.mubr.bf16.gmra.mrb[0].mxu0 %v2045
      %v2271 = vpop.f32.mrb[0].mxu0
      %v2272 = vadd.f32 %v2067, %v2271
      %v2273 = vpop.f32.mrb[0].mxu0
      %v2274 = vpop.f32.mrb[0].mxu0
      %v2275 = vadd.f32 %v2067, %v2274
      %v2276 = vpop.f32.mrb[0].mxu0
      %2277 = vdwg.mxu0
      %v2278 = vlaneseq
      %v2279 = vand.u32 %v2278, 127
      %vm2280 = vcmp.ge.s32.totalorder %v2279, 21
      %vm2281 = vcmp.lt.s32.totalorder %v2279, 28
      %vm2282 = vmand %vm2280, %vm2281
      %v2283 = vsel %vm2282, %v2152, -1e+30
      %v2284 = vsel %vm2282, %v2155, -1e+30
      %v2285 = vsel %vm2282, %v2160, -1e+30
      %v2286 = vsel %vm2282, %v2163, -1e+30
      %v2287 = vsel %vm2282, %v2168, -1e+30
      %v2288 = vsel %vm2282, %v2171, -1e+30
      %v2289 = vsel %vm2282, %v2176, -1e+30
      %v2290 = vsel %vm2282, %v2179, -1e+30
      %v2291 = vsel %vm2282, %v2184, -1e+30
      %v2292 = vsel %vm2282, %v2187, -1e+30
      %v2293 = vsel %vm2282, %v2192, -1e+30
      %v2294 = vsel %vm2282, %v2195, -1e+30
      %v2295 = vsel %vm2282, %v2200, -1e+30
      %v2296 = vsel %vm2282, %v2203, -1e+30
      %v2297 = vsel %vm2282, %v2208, -1e+30
      %v2298 = vsel %vm2282, %v2211, -1e+30
      %v2299 = vsel %vm2282, %v2216, -1e+30
      %v2300 = vsel %vm2282, %v2219, -1e+30
      %v2301 = vsel %vm2282, %v2224, -1e+30
      %v2302 = vsel %vm2282, %v2227, -1e+30
      %v2303 = vsel %vm2282, %v2232, -1e+30
      %v2304 = vsel %vm2282, %v2235, -1e+30
      %v2305 = vsel %vm2282, %v2240, -1e+30
      %v2306 = vsel %vm2282, %v2243, -1e+30
      %v2307 = vsel %vm2282, %v2248, -1e+30
      %v2308 = vsel %vm2282, %v2251, -1e+30
      %v2309 = vsel %vm2282, %v2256, -1e+30
      %v2310 = vsel %vm2282, %v2259, -1e+30
      %v2311 = vsel %vm2282, %v2264, -1e+30
      %v2312 = vsel %vm2282, %v2267, -1e+30
      %v2313 = vsel %vm2282, %v2272, -1e+30
      %v2314 = vsel %vm2282, %v2275, -1e+30
      %vm2315 = vcmask 261120
      %v2316 = vsel %vm2315, %v2283, -inf
      %2317 = vmax.xlane.f32.xlu0 %v2316
      %v2318 = vpop.xlane.xlu0 %2317
      %v2319 = vsel %vm2315, %v2284, -inf
      %2320 = vmax.xlane.f32.xlu0 %v2319
      %v2321 = vpop.xlane.xlu0 %2320
      %v2322 = vsel %vm2315, %v2285, -inf
      %2323 = vmax.xlane.f32.xlu0 %v2322
      %v2324 = vpop.xlane.xlu0 %2323
      %v2325 = vsel %vm2315, %v2286, -inf
      %2326 = vmax.xlane.f32.xlu0 %v2325
      %v2327 = vpop.xlane.xlu0 %2326
      %v2328 = vsel %vm2315, %v2287, -inf
      %2329 = vmax.xlane.f32.xlu0 %v2328
      %v2330 = vpop.xlane.xlu0 %2329
      %v2331 = vsel %vm2315, %v2288, -inf
      %2332 = vmax.xlane.f32.xlu0 %v2331
      %v2333 = vpop.xlane.xlu0 %2332
      %v2334 = vsel %vm2315, %v2289, -inf
      %2335 = vmax.xlane.f32.xlu0 %v2334
      %v2336 = vpop.xlane.xlu0 %2335
      %v2337 = vsel %vm2315, %v2290, -inf
      %2338 = vmax.xlane.f32.xlu0 %v2337
      %v2339 = vpop.xlane.xlu0 %2338
      %v2340 = vsel %vm2315, %v2291, -inf
      %2341 = vmax.xlane.f32.xlu0 %v2340
      %v2342 = vpop.xlane.xlu0 %2341
      %v2343 = vsel %vm2315, %v2292, -inf
      %2344 = vmax.xlane.f32.xlu0 %v2343
      %v2345 = vpop.xlane.xlu0 %2344
      %v2346 = vsel %vm2315, %v2293, -inf
      %2347 = vmax.xlane.f32.xlu0 %v2346
      %v2348 = vpop.xlane.xlu0 %2347
      %v2349 = vsel %vm2315, %v2294, -inf
      %2350 = vmax.xlane.f32.xlu0 %v2349
      %v2351 = vpop.xlane.xlu0 %2350
      %v2352 = vsel %vm2315, %v2295, -inf
      %2353 = vmax.xlane.f32.xlu0 %v2352
      %v2354 = vpop.xlane.xlu0 %2353
      %v2355 = vsel %vm2315, %v2296, -inf
      %2356 = vmax.xlane.f32.xlu0 %v2355
      %v2357 = vpop.xlane.xlu0 %2356
      %v2358 = vsel %vm2315, %v2297, -inf
      %2359 = vmax.xlane.f32.xlu0 %v2358
      %v2360 = vpop.xlane.xlu0 %2359
      %v2361 = vsel %vm2315, %v2298, -inf
      %2362 = vmax.xlane.f32.xlu0 %v2361
      %v2363 = vpop.xlane.xlu0 %2362
      %v2364 = vsel %vm2315, %v2299, -inf
      %2365 = vmax.xlane.f32.xlu0 %v2364
      %v2366 = vpop.xlane.xlu0 %2365
      %v2367 = vsel %vm2315, %v2300, -inf
      %2368 = vmax.xlane.f32.xlu0 %v2367
      %v2369 = vpop.xlane.xlu0 %2368
      %v2370 = vsel %vm2315, %v2301, -inf
      %2371 = vmax.xlane.f32.xlu0 %v2370
      %v2372 = vpop.xlane.xlu0 %2371
      %v2373 = vsel %vm2315, %v2302, -inf
      %2374 = vmax.xlane.f32.xlu0 %v2373
      %v2375 = vpop.xlane.xlu0 %2374
      %v2376 = vsel %vm2315, %v2303, -inf
      %2377 = vmax.xlane.f32.xlu0 %v2376
      %v2378 = vpop.xlane.xlu0 %2377
      %v2379 = vsel %vm2315, %v2304, -inf
      %2380 = vmax.xlane.f32.xlu0 %v2379
      %v2381 = vpop.xlane.xlu0 %2380
      %v2382 = vsel %vm2315, %v2305, -inf
      %2383 = vmax.xlane.f32.xlu0 %v2382
      %v2384 = vpop.xlane.xlu0 %2383
      %v2385 = vsel %vm2315, %v2306, -inf
      %2386 = vmax.xlane.f32.xlu0 %v2385
      %v2387 = vpop.xlane.xlu0 %2386
      %v2388 = vsel %vm2315, %v2307, -inf
      %2389 = vmax.xlane.f32.xlu0 %v2388
      %v2390 = vpop.xlane.xlu0 %2389
      %v2391 = vsel %vm2315, %v2308, -inf
      %2392 = vmax.xlane.f32.xlu0 %v2391
      %v2393 = vpop.xlane.xlu0 %2392
      %v2394 = vsel %vm2315, %v2309, -inf
      %2395 = vmax.xlane.f32.xlu0 %v2394
      %v2396 = vpop.xlane.xlu0 %2395
      %v2397 = vsel %vm2315, %v2310, -inf
      %2398 = vmax.xlane.f32.xlu0 %v2397
      %v2399 = vpop.xlane.xlu0 %2398
      %v2400 = vsel %vm2315, %v2311, -inf
      %2401 = vmax.xlane.f32.xlu0 %v2400
      %v2402 = vpop.xlane.xlu0 %2401
      %v2403 = vsel %vm2315, %v2312, -inf
      %2404 = vmax.xlane.f32.xlu0 %v2403
      %v2405 = vpop.xlane.xlu0 %2404
      %v2406 = vsel %vm2315, %v2313, -inf
      %2407 = vmax.xlane.f32.xlu0 %v2406
      %v2408 = vpop.xlane.xlu0 %2407
      %v2409 = vsel %vm2315, %v2314, -inf
      %2410 = vmax.xlane.f32.xlu0 %v2409
      %v2411 = vpop.xlane.xlu0 %2410
      %v2412 = vsub.f32 %v2152, %v2318
      %v2413 = vsub.f32 %v2155, %v2321
      %v2414 = vsub.f32 %v2160, %v2324
      %v2415 = vsub.f32 %v2163, %v2327
      %v2416 = vsub.f32 %v2168, %v2330
      %v2417 = vsub.f32 %v2171, %v2333
      %v2418 = vsub.f32 %v2176, %v2336
      %v2419 = vsub.f32 %v2179, %v2339
      %v2420 = vsub.f32 %v2184, %v2342
      %v2421 = vsub.f32 %v2187, %v2345
      %v2422 = vsub.f32 %v2192, %v2348
      %v2423 = vsub.f32 %v2195, %v2351
      %v2424 = vsub.f32 %v2200, %v2354
      %v2425 = vsub.f32 %v2203, %v2357
      %v2426 = vsub.f32 %v2208, %v2360
      %v2427 = vsub.f32 %v2211, %v2363
      %v2428 = vsub.f32 %v2216, %v2366
      %v2429 = vsub.f32 %v2219, %v2369
      %v2430 = vsub.f32 %v2224, %v2372
      %v2431 = vsub.f32 %v2227, %v2375
      %v2432 = vsub.f32 %v2232, %v2378
      %v2433 = vsub.f32 %v2235, %v2381
      %v2434 = vsub.f32 %v2240, %v2384
      %v2435 = vsub.f32 %v2243, %v2387
      %v2436 = vsub.f32 %v2248, %v2390
      %v2437 = vsub.f32 %v2251, %v2393
      %v2438 = vsub.f32 %v2256, %v2396
      %v2439 = vsub.f32 %v2259, %v2399
      %v2440 = vsub.f32 %v2264, %v2402
      %v2441 = vsub.f32 %v2267, %v2405
      %v2442 = vsub.f32 %v2272, %v2408
      %v2443 = vsub.f32 %v2275, %v2411
      %v2444 = vmul.f32 %v2412, 1.442695
      %v2445 = vpow.pop %v2444
      %v2446 = vmul.f32 %v2413, 1.442695
      %v2447 = vpow.pop %v2446
      %v2448 = vmul.f32 %v2414, 1.442695
      %v2449 = vpow.pop %v2448
      %v2450 = vmul.f32 %v2415, 1.442695
      %v2451 = vpow.pop %v2450
      %v2452 = vmul.f32 %v2416, 1.442695
      %v2453 = vpow.pop %v2452
      %v2454 = vmul.f32 %v2417, 1.442695
      %v2455 = vpow.pop %v2454
      %v2456 = vmul.f32 %v2418, 1.442695
      %v2457 = vpow.pop %v2456
      %v2458 = vmul.f32 %v2419, 1.442695
      %v2459 = vpow.pop %v2458
      %v2460 = vmul.f32 %v2420, 1.442695
      %v2461 = vpow.pop %v2460
      %v2462 = vmul.f32 %v2421, 1.442695
      %v2463 = vpow.pop %v2462
      %v2464 = vmul.f32 %v2422, 1.442695
      %v2465 = vpow.pop %v2464
      %v2466 = vmul.f32 %v2423, 1.442695
      %v2467 = vpow.pop %v2466
      %v2468 = vmul.f32 %v2424, 1.442695
      %v2469 = vpow.pop %v2468
      %v2470 = vmul.f32 %v2425, 1.442695
      %v2471 = vpow.pop %v2470
      %v2472 = vmul.f32 %v2426, 1.442695
      %v2473 = vpow.pop %v2472
      %v2474 = vmul.f32 %v2427, 1.442695
      %v2475 = vpow.pop %v2474
      %v2476 = vmul.f32 %v2428, 1.442695
      %v2477 = vpow.pop %v2476
      %v2478 = vmul.f32 %v2429, 1.442695
      %v2479 = vpow.pop %v2478
      %v2480 = vmul.f32 %v2430, 1.442695
      %v2481 = vpow.pop %v2480
      %v2482 = vmul.f32 %v2431, 1.442695
      %v2483 = vpow.pop %v2482
      %v2484 = vmul.f32 %v2432, 1.442695
      %v2485 = vpow.pop %v2484
      %v2486 = vmul.f32 %v2433, 1.442695
      %v2487 = vpow.pop %v2486
      %v2488 = vmul.f32 %v2434, 1.442695
      %v2489 = vpow.pop %v2488
      %v2490 = vmul.f32 %v2435, 1.442695
      %v2491 = vpow.pop %v2490
      %v2492 = vmul.f32 %v2436, 1.442695
      %v2493 = vpow.pop %v2492
      %v2494 = vmul.f32 %v2437, 1.442695
      %v2495 = vpow.pop %v2494
      %v2496 = vmul.f32 %v2438, 1.442695
      %v2497 = vpow.pop %v2496
      %v2498 = vmul.f32 %v2439, 1.442695
      %v2499 = vpow.pop %v2498
      %v2500 = vmul.f32 %v2440, 1.442695
      %v2501 = vpow.pop %v2500
      %v2502 = vmul.f32 %v2441, 1.442695
      %v2503 = vpow.pop %v2502
      %v2504 = vmul.f32 %v2442, 1.442695
      %v2505 = vpow.pop %v2504
      %v2506 = vmul.f32 %v2443, 1.442695
      %v2507 = vpow.pop %v2506
      %v2508 = vsel %vm2282, %v2445, 0.0
      %v2509 = vsel %vm2282, %v2447, 0.0
      %v2510 = vsel %vm2282, %v2449, 0.0
      %v2511 = vsel %vm2282, %v2451, 0.0
      %v2512 = vsel %vm2282, %v2453, 0.0
      %v2513 = vsel %vm2282, %v2455, 0.0
      %v2514 = vsel %vm2282, %v2457, 0.0
      %v2515 = vsel %vm2282, %v2459, 0.0
      %v2516 = vsel %vm2282, %v2461, 0.0
      %v2517 = vsel %vm2282, %v2463, 0.0
      %v2518 = vsel %vm2282, %v2465, 0.0
      %v2519 = vsel %vm2282, %v2467, 0.0
      %v2520 = vsel %vm2282, %v2469, 0.0
      %v2521 = vsel %vm2282, %v2471, 0.0
      %v2522 = vsel %vm2282, %v2473, 0.0
      %v2523 = vsel %vm2282, %v2475, 0.0
      %v2524 = vsel %vm2282, %v2477, 0.0
      %v2525 = vsel %vm2282, %v2479, 0.0
      %v2526 = vsel %vm2282, %v2481, 0.0
      %v2527 = vsel %vm2282, %v2483, 0.0
      %v2528 = vsel %vm2282, %v2485, 0.0
      %v2529 = vsel %vm2282, %v2487, 0.0
      %v2530 = vsel %vm2282, %v2489, 0.0
      %v2531 = vsel %vm2282, %v2491, 0.0
      %v2532 = vsel %vm2282, %v2493, 0.0
      %v2533 = vsel %vm2282, %v2495, 0.0
      %v2534 = vsel %vm2282, %v2497, 0.0
      %v2535 = vsel %vm2282, %v2499, 0.0
      %v2536 = vsel %vm2282, %v2501, 0.0
      %v2537 = vsel %vm2282, %v2503, 0.0
      %v2538 = vsel %vm2282, %v2505, 0.0
      %v2539 = vsel %vm2282, %v2507, 0.0
      %v2540 = vsel %vm2315, %v2508, 0.0
      %2541 = vadd.xlane.f32.xlu0 %v2540
      %v2542 = vpop.xlane.xlu0 %2541
      %v2543 = vsel %vm2315, %v2509, 0.0
      %2544 = vadd.xlane.f32.xlu0 %v2543
      %v2545 = vpop.xlane.xlu0 %2544
      %v2546 = vsel %vm2315, %v2510, 0.0
      %2547 = vadd.xlane.f32.xlu0 %v2546
      %v2548 = vpop.xlane.xlu0 %2547
      %v2549 = vsel %vm2315, %v2511, 0.0
      %2550 = vadd.xlane.f32.xlu0 %v2549
      %v2551 = vpop.xlane.xlu0 %2550
      %v2552 = vsel %vm2315, %v2512, 0.0
      %2553 = vadd.xlane.f32.xlu0 %v2552
      %v2554 = vpop.xlane.xlu0 %2553
      %v2555 = vsel %vm2315, %v2513, 0.0
      %2556 = vadd.xlane.f32.xlu0 %v2555
      %v2557 = vpop.xlane.xlu0 %2556
      %v2558 = vsel %vm2315, %v2514, 0.0
      %2559 = vadd.xlane.f32.xlu0 %v2558
      %v2560 = vpop.xlane.xlu0 %2559
      %v2561 = vsel %vm2315, %v2515, 0.0
      %2562 = vadd.xlane.f32.xlu0 %v2561
      %v2563 = vpop.xlane.xlu0 %2562
      %v2564 = vsel %vm2315, %v2516, 0.0
      %2565 = vadd.xlane.f32.xlu0 %v2564
      %v2566 = vpop.xlane.xlu0 %2565
      %v2567 = vsel %vm2315, %v2517, 0.0
      %2568 = vadd.xlane.f32.xlu0 %v2567
      %v2569 = vpop.xlane.xlu0 %2568
      %v2570 = vsel %vm2315, %v2518, 0.0
      %2571 = vadd.xlane.f32.xlu0 %v2570
      %v2572 = vpop.xlane.xlu0 %2571
      %v2573 = vsel %vm2315, %v2519, 0.0
      %2574 = vadd.xlane.f32.xlu0 %v2573
      %v2575 = vpop.xlane.xlu0 %2574
      %v2576 = vsel %vm2315, %v2520, 0.0
      %2577 = vadd.xlane.f32.xlu0 %v2576
      %v2578 = vpop.xlane.xlu0 %2577
      %v2579 = vsel %vm2315, %v2521, 0.0
      %2580 = vadd.xlane.f32.xlu0 %v2579
      %v2581 = vpop.xlane.xlu0 %2580
      %v2582 = vsel %vm2315, %v2522, 0.0
      %2583 = vadd.xlane.f32.xlu0 %v2582
      %v2584 = vpop.xlane.xlu0 %2583
      %v2585 = vsel %vm2315, %v2523, 0.0
      %2586 = vadd.xlane.f32.xlu0 %v2585
      %v2587 = vpop.xlane.xlu0 %2586
      %v2588 = vsel %vm2315, %v2524, 0.0
      %2589 = vadd.xlane.f32.xlu0 %v2588
      %v2590 = vpop.xlane.xlu0 %2589
      %v2591 = vsel %vm2315, %v2525, 0.0
      %2592 = vadd.xlane.f32.xlu0 %v2591
      %v2593 = vpop.xlane.xlu0 %2592
      %v2594 = vsel %vm2315, %v2526, 0.0
      %2595 = vadd.xlane.f32.xlu0 %v2594
      %v2596 = vpop.xlane.xlu0 %2595
      %v2597 = vsel %vm2315, %v2527, 0.0
      %2598 = vadd.xlane.f32.xlu0 %v2597
      %v2599 = vpop.xlane.xlu0 %2598
      %v2600 = vsel %vm2315, %v2528, 0.0
      %2601 = vadd.xlane.f32.xlu0 %v2600
      %v2602 = vpop.xlane.xlu0 %2601
      %v2603 = vsel %vm2315, %v2529, 0.0
      %2604 = vadd.xlane.f32.xlu0 %v2603
      %v2605 = vpop.xlane.xlu0 %2604
      %v2606 = vsel %vm2315, %v2530, 0.0
      %2607 = vadd.xlane.f32.xlu0 %v2606
      %v2608 = vpop.xlane.xlu0 %2607
      %v2609 = vsel %vm2315, %v2531, 0.0
      %2610 = vadd.xlane.f32.xlu0 %v2609
      %v2611 = vpop.xlane.xlu0 %2610
      %v2612 = vsel %vm2315, %v2532, 0.0
      %2613 = vadd.xlane.f32.xlu0 %v2612
      %v2614 = vpop.xlane.xlu0 %2613
      %v2615 = vsel %vm2315, %v2533, 0.0
      %2616 = vadd.xlane.f32.xlu0 %v2615
      %v2617 = vpop.xlane.xlu0 %2616
      %v2618 = vsel %vm2315, %v2534, 0.0
      %2619 = vadd.xlane.f32.xlu0 %v2618
      %v2620 = vpop.xlane.xlu0 %2619
      %v2621 = vsel %vm2315, %v2535, 0.0
      %2622 = vadd.xlane.f32.xlu0 %v2621
      %v2623 = vpop.xlane.xlu0 %2622
      %v2624 = vsel %vm2315, %v2536, 0.0
      %2625 = vadd.xlane.f32.xlu0 %v2624
      %v2626 = vpop.xlane.xlu0 %2625
      %v2627 = vsel %vm2315, %v2537, 0.0
      %2628 = vadd.xlane.f32.xlu0 %v2627
      %v2629 = vpop.xlane.xlu0 %2628
      %v2630 = vsel %vm2315, %v2538, 0.0
      %2631 = vadd.xlane.f32.xlu0 %v2630
      %v2632 = vpop.xlane.xlu0 %2631
      %v2633 = vsel %vm2315, %v2539, 0.0
      %2634 = vadd.xlane.f32.xlu0 %v2633
      %v2635 = vpop.xlane.xlu0 %2634
      %v2636 = vrcp.pop %v2542
      %v2637 = vmul.f32 %v2508, %v2636
      %v2638 = vrcp.pop %v2545
      %v2639 = vmul.f32 %v2509, %v2638
      %v2640 = vrcp.pop %v2548
      %v2641 = vmul.f32 %v2510, %v2640
      %v2642 = vrcp.pop %v2551
      %v2643 = vmul.f32 %v2511, %v2642
      %v2644 = vrcp.pop %v2554
      %v2645 = vmul.f32 %v2512, %v2644
      %v2646 = vrcp.pop %v2557
      %v2647 = vmul.f32 %v2513, %v2646
      %v2648 = vrcp.pop %v2560
      %v2649 = vmul.f32 %v2514, %v2648
      %v2650 = vrcp.pop %v2563
      %v2651 = vmul.f32 %v2515, %v2650
      %v2652 = vrcp.pop %v2566
      %v2653 = vmul.f32 %v2516, %v2652
      %v2654 = vrcp.pop %v2569
      %v2655 = vmul.f32 %v2517, %v2654
      %v2656 = vrcp.pop %v2572
      %v2657 = vmul.f32 %v2518, %v2656
      %v2658 = vrcp.pop %v2575
      %v2659 = vmul.f32 %v2519, %v2658
      %v2660 = vrcp.pop %v2578
      %v2661 = vmul.f32 %v2520, %v2660
      %v2662 = vrcp.pop %v2581
      %v2663 = vmul.f32 %v2521, %v2662
      %v2664 = vrcp.pop %v2584
      %v2665 = vmul.f32 %v2522, %v2664
      %v2666 = vrcp.pop %v2587
      %v2667 = vmul.f32 %v2523, %v2666
      %v2668 = vrcp.pop %v2590
      %v2669 = vmul.f32 %v2524, %v2668
      %v2670 = vrcp.pop %v2593
      %v2671 = vmul.f32 %v2525, %v2670
      %v2672 = vrcp.pop %v2596
      %v2673 = vmul.f32 %v2526, %v2672
      %v2674 = vrcp.pop %v2599
      %v2675 = vmul.f32 %v2527, %v2674
      %v2676 = vrcp.pop %v2602
      %v2677 = vmul.f32 %v2528, %v2676
      %v2678 = vrcp.pop %v2605
      %v2679 = vmul.f32 %v2529, %v2678
      %v2680 = vrcp.pop %v2608
      %v2681 = vmul.f32 %v2530, %v2680
      %v2682 = vrcp.pop %v2611
      %v2683 = vmul.f32 %v2531, %v2682
      %v2684 = vrcp.pop %v2614
      %v2685 = vmul.f32 %v2532, %v2684
      %v2686 = vrcp.pop %v2617
      %v2687 = vmul.f32 %v2533, %v2686
      %v2688 = vrcp.pop %v2620
      %v2689 = vmul.f32 %v2534, %v2688
      %v2690 = vrcp.pop %v2623
      %v2691 = vmul.f32 %v2535, %v2690
      %v2692 = vrcp.pop %v2626
      %v2693 = vmul.f32 %v2536, %v2692
      %v2694 = vrcp.pop %v2629
      %v2695 = vmul.f32 %v2537, %v2694
      %v2696 = vrcp.pop %v2632
      %v2697 = vmul.f32 %v2538, %v2696
      %v2698 = vrcp.pop %v2635
      %v2699 = vmul.f32 %v2539, %v2698
      %v2700 = vxor.u32 %v2152, 2147483648
      %v2701 = vxor.u32 %v2155, 2147483648
      %v2702 = vxor.u32 %v2160, 2147483648
      %v2703 = vxor.u32 %v2163, 2147483648
      %v2704 = vxor.u32 %v2168, 2147483648
      %v2705 = vxor.u32 %v2171, 2147483648
      %v2706 = vxor.u32 %v2176, 2147483648
      %v2707 = vxor.u32 %v2179, 2147483648
      %v2708 = vxor.u32 %v2184, 2147483648
      %v2709 = vxor.u32 %v2187, 2147483648
      %v2710 = vxor.u32 %v2192, 2147483648
      %v2711 = vxor.u32 %v2195, 2147483648
      %v2712 = vxor.u32 %v2200, 2147483648
      %v2713 = vxor.u32 %v2203, 2147483648
      %v2714 = vxor.u32 %v2208, 2147483648
      %v2715 = vxor.u32 %v2211, 2147483648
      %v2716 = vxor.u32 %v2216, 2147483648
      %v2717 = vxor.u32 %v2219, 2147483648
      %v2718 = vxor.u32 %v2224, 2147483648
      %v2719 = vxor.u32 %v2227, 2147483648
      %v2720 = vxor.u32 %v2232, 2147483648
      %v2721 = vxor.u32 %v2235, 2147483648
      %v2722 = vxor.u32 %v2240, 2147483648
      %v2723 = vxor.u32 %v2243, 2147483648
      %v2724 = vxor.u32 %v2248, 2147483648
      %v2725 = vxor.u32 %v2251, 2147483648
      %v2726 = vxor.u32 %v2256, 2147483648
      %v2727 = vxor.u32 %v2259, 2147483648
      %v2728 = vxor.u32 %v2264, 2147483648
      %v2729 = vxor.u32 %v2267, 2147483648
      %v2730 = vxor.u32 %v2272, 2147483648
      %v2731 = vxor.u32 %v2275, 2147483648
      %v2732 = vmul.f32 %v2700, 1.442695
      %v2733 = vpow.pop %v2732
      %v2734 = vmul.f32 %v2701, 1.442695
      %v2735 = vpow.pop %v2734
      %v2736 = vmul.f32 %v2702, 1.442695
      %v2737 = vpow.pop %v2736
      %v2738 = vmul.f32 %v2703, 1.442695
      %v2739 = vpow.pop %v2738
      %v2740 = vmul.f32 %v2704, 1.442695
      %v2741 = vpow.pop %v2740
      %v2742 = vmul.f32 %v2705, 1.442695
      %v2743 = vpow.pop %v2742
      %v2744 = vmul.f32 %v2706, 1.442695
      %v2745 = vpow.pop %v2744
      %v2746 = vmul.f32 %v2707, 1.442695
      %v2747 = vpow.pop %v2746
      %v2748 = vmul.f32 %v2708, 1.442695
      %v2749 = vpow.pop %v2748
      %v2750 = vmul.f32 %v2709, 1.442695
      %v2751 = vpow.pop %v2750
      %v2752 = vmul.f32 %v2710, 1.442695
      %v2753 = vpow.pop %v2752
      %v2754 = vmul.f32 %v2711, 1.442695
      %v2755 = vpow.pop %v2754
      %v2756 = vmul.f32 %v2712, 1.442695
      %v2757 = vpow.pop %v2756
      %v2758 = vmul.f32 %v2713, 1.442695
      %v2759 = vpow.pop %v2758
      %v2760 = vmul.f32 %v2714, 1.442695
      %v2761 = vpow.pop %v2760
      %v2762 = vmul.f32 %v2715, 1.442695
      %v2763 = vpow.pop %v2762
      %v2764 = vmul.f32 %v2716, 1.442695
      %v2765 = vpow.pop %v2764
      %v2766 = vmul.f32 %v2717, 1.442695
      %v2767 = vpow.pop %v2766
      %v2768 = vmul.f32 %v2718, 1.442695
      %v2769 = vpow.pop %v2768
      %v2770 = vmul.f32 %v2719, 1.442695
      %v2771 = vpow.pop %v2770
      %v2772 = vmul.f32 %v2720, 1.442695
      %v2773 = vpow.pop %v2772
      %v2774 = vmul.f32 %v2721, 1.442695
      %v2775 = vpow.pop %v2774
      %v2776 = vmul.f32 %v2722, 1.442695
      %v2777 = vpow.pop %v2776
      %v2778 = vmul.f32 %v2723, 1.442695
      %v2779 = vpow.pop %v2778
      %v2780 = vmul.f32 %v2724, 1.442695
      %v2781 = vpow.pop %v2780
      %v2782 = vmul.f32 %v2725, 1.442695
      %v2783 = vpow.pop %v2782
      %v2784 = vmul.f32 %v2726, 1.442695
      %v2785 = vpow.pop %v2784
      %v2786 = vmul.f32 %v2727, 1.442695
      %v2787 = vpow.pop %v2786
      %v2788 = vmul.f32 %v2728, 1.442695
      %v2789 = vpow.pop %v2788
      %v2790 = vmul.f32 %v2729, 1.442695
      %v2791 = vpow.pop %v2790
      %v2792 = vmul.f32 %v2730, 1.442695
      %v2793 = vpow.pop %v2792
      %v2794 = vmul.f32 %v2731, 1.442695
      %v2795 = vpow.pop %v2794
      %v2796 = vadd.f32 %v2733, 1.0
      %v2797 = vadd.f32 %v2735, 1.0
      %v2798 = vadd.f32 %v2737, 1.0
      %v2799 = vadd.f32 %v2739, 1.0
      %v2800 = vadd.f32 %v2741, 1.0
      %v2801 = vadd.f32 %v2743, 1.0
      %v2802 = vadd.f32 %v2745, 1.0
      %v2803 = vadd.f32 %v2747, 1.0
      %v2804 = vadd.f32 %v2749, 1.0
      %v2805 = vadd.f32 %v2751, 1.0
      %v2806 = vadd.f32 %v2753, 1.0
      %v2807 = vadd.f32 %v2755, 1.0
      %v2808 = vadd.f32 %v2757, 1.0
      %v2809 = vadd.f32 %v2759, 1.0
      %v2810 = vadd.f32 %v2761, 1.0
      %v2811 = vadd.f32 %v2763, 1.0
      %v2812 = vadd.f32 %v2765, 1.0
      %v2813 = vadd.f32 %v2767, 1.0
      %v2814 = vadd.f32 %v2769, 1.0
      %v2815 = vadd.f32 %v2771, 1.0
      %v2816 = vadd.f32 %v2773, 1.0
      %v2817 = vadd.f32 %v2775, 1.0
      %v2818 = vadd.f32 %v2777, 1.0
      %v2819 = vadd.f32 %v2779, 1.0
      %v2820 = vadd.f32 %v2781, 1.0
      %v2821 = vadd.f32 %v2783, 1.0
      %v2822 = vadd.f32 %v2785, 1.0
      %v2823 = vadd.f32 %v2787, 1.0
      %v2824 = vadd.f32 %v2789, 1.0
      %v2825 = vadd.f32 %v2791, 1.0
      %v2826 = vadd.f32 %v2793, 1.0
      %v2827 = vadd.f32 %v2795, 1.0
      %v2828 = vrcp.pop %v2796
      %v2829 = vmul.f32 1.0, %v2828
      %v2830 = vrcp.pop %v2797
      %v2831 = vmul.f32 1.0, %v2830
      %v2832 = vrcp.pop %v2798
      %v2833 = vmul.f32 1.0, %v2832
      %v2834 = vrcp.pop %v2799
      %v2835 = vmul.f32 1.0, %v2834
      %v2836 = vrcp.pop %v2800
      %v2837 = vmul.f32 1.0, %v2836
      %v2838 = vrcp.pop %v2801
      %v2839 = vmul.f32 1.0, %v2838
      %v2840 = vrcp.pop %v2802
      %v2841 = vmul.f32 1.0, %v2840
      %v2842 = vrcp.pop %v2803
      %v2843 = vmul.f32 1.0, %v2842
      %v2844 = vrcp.pop %v2804
      %v2845 = vmul.f32 1.0, %v2844
      %v2846 = vrcp.pop %v2805
      %v2847 = vmul.f32 1.0, %v2846
      %v2848 = vrcp.pop %v2806
      %v2849 = vmul.f32 1.0, %v2848
      %v2850 = vrcp.pop %v2807
      %v2851 = vmul.f32 1.0, %v2850
      %v2852 = vrcp.pop %v2808
      %v2853 = vmul.f32 1.0, %v2852
      %v2854 = vrcp.pop %v2809
      %v2855 = vmul.f32 1.0, %v2854
      %v2856 = vrcp.pop %v2810
      %v2857 = vmul.f32 1.0, %v2856
      %v2858 = vrcp.pop %v2811
      %v2859 = vmul.f32 1.0, %v2858
      %v2860 = vrcp.pop %v2812
      %v2861 = vmul.f32 1.0, %v2860
      %v2862 = vrcp.pop %v2813
      %v2863 = vmul.f32 1.0, %v2862
      %v2864 = vrcp.pop %v2814
      %v2865 = vmul.f32 1.0, %v2864
      %v2866 = vrcp.pop %v2815
      %v2867 = vmul.f32 1.0, %v2866
      %v2868 = vrcp.pop %v2816
      %v2869 = vmul.f32 1.0, %v2868
      %v2870 = vrcp.pop %v2817
      %v2871 = vmul.f32 1.0, %v2870
      %v2872 = vrcp.pop %v2818
      %v2873 = vmul.f32 1.0, %v2872
      %v2874 = vrcp.pop %v2819
      %v2875 = vmul.f32 1.0, %v2874
      %v2876 = vrcp.pop %v2820
      %v2877 = vmul.f32 1.0, %v2876
      %v2878 = vrcp.pop %v2821
      %v2879 = vmul.f32 1.0, %v2878
      %v2880 = vrcp.pop %v2822
      %v2881 = vmul.f32 1.0, %v2880
      %v2882 = vrcp.pop %v2823
      %v2883 = vmul.f32 1.0, %v2882
      %v2884 = vrcp.pop %v2824
      %v2885 = vmul.f32 1.0, %v2884
      %v2886 = vrcp.pop %v2825
      %v2887 = vmul.f32 1.0, %v2886
      %v2888 = vrcp.pop %v2826
      %v2889 = vmul.f32 1.0, %v2888
      %v2890 = vrcp.pop %v2827
      %v2891 = vmul.f32 1.0, %v2890
      %v2892 = vsel %vm2282, %v2637, %v2829
      %v2893 = vsel %vm2282, %v2639, %v2831
      %v2894 = vsel %vm2282, %v2641, %v2833
      %v2895 = vsel %vm2282, %v2643, %v2835
      %v2896 = vsel %vm2282, %v2645, %v2837
      %v2897 = vsel %vm2282, %v2647, %v2839
      %v2898 = vsel %vm2282, %v2649, %v2841
      %v2899 = vsel %vm2282, %v2651, %v2843
      %v2900 = vsel %vm2282, %v2653, %v2845
      %v2901 = vsel %vm2282, %v2655, %v2847
      %v2902 = vsel %vm2282, %v2657, %v2849
      %v2903 = vsel %vm2282, %v2659, %v2851
      %v2904 = vsel %vm2282, %v2661, %v2853
      %v2905 = vsel %vm2282, %v2663, %v2855
      %v2906 = vsel %vm2282, %v2665, %v2857
      %v2907 = vsel %vm2282, %v2667, %v2859
      %v2908 = vsel %vm2282, %v2669, %v2861
      %v2909 = vsel %vm2282, %v2671, %v2863
      %v2910 = vsel %vm2282, %v2673, %v2865
      %v2911 = vsel %vm2282, %v2675, %v2867
      %v2912 = vsel %vm2282, %v2677, %v2869
      %v2913 = vsel %vm2282, %v2679, %v2871
      %v2914 = vsel %vm2282, %v2681, %v2873
      %v2915 = vsel %vm2282, %v2683, %v2875
      %v2916 = vsel %vm2282, %v2685, %v2877
      %v2917 = vsel %vm2282, %v2687, %v2879
      %v2918 = vsel %vm2282, %v2689, %v2881
      %v2919 = vsel %vm2282, %v2691, %v2883
      %v2920 = vsel %vm2282, %v2693, %v2885
      %v2921 = vsel %vm2282, %v2695, %v2887
      %v2922 = vsel %vm2282, %v2697, %v2889
      %v2923 = vsel %vm2282, %v2699, %v2891
      %2924 = vst.msk [vmem:[%s357] sm:$0xff] %vm2315, %v2892
      %2925 = vst.msk [vmem:[%s357 + $0x8] sm:$0xff] %vm2315, %v2893
      %2926 = vst.msk [vmem:[%s357 + $0x10] sm:$0xff] %vm2315, %v2894
      %2927 = vst.msk [vmem:[%s357 + $0x18] sm:$0xff] %vm2315, %v2895
      %2928 = vst.msk [vmem:[%s357 + $0x20] sm:$0xff] %vm2315, %v2896
      %2929 = vst.msk [vmem:[%s357 + $0x28] sm:$0xff] %vm2315, %v2897
      %2930 = vst.msk [vmem:[%s357 + $0x30] sm:$0xff] %vm2315, %v2898
      %2931 = vst.msk [vmem:[%s357 + $0x38] sm:$0xff] %vm2315, %v2899
      %2932 = vst.msk [vmem:[%s357 + $0x40] sm:$0xff] %vm2315, %v2900
      %2933 = vst.msk [vmem:[%s357 + $0x48] sm:$0xff] %vm2315, %v2901
      %2934 = vst.msk [vmem:[%s357 + $0x50] sm:$0xff] %vm2315, %v2902
      %2935 = vst.msk [vmem:[%s357 + $0x58] sm:$0xff] %vm2315, %v2903
      %2936 = vst.msk [vmem:[%s357 + $0x60] sm:$0xff] %vm2315, %v2904
      %2937 = vst.msk [vmem:[%s357 + $0x68] sm:$0xff] %vm2315, %v2905
      %2938 = vst.msk [vmem:[%s357 + $0x70] sm:$0xff] %vm2315, %v2906
      %2939 = vst.msk [vmem:[%s357 + $0x78] sm:$0xff] %vm2315, %v2907
      %2940 = vst.msk [vmem:[%s357 + $0x80] sm:$0xff] %vm2315, %v2908
      %2941 = vst.msk [vmem:[%s357 + $0x88] sm:$0xff] %vm2315, %v2909
      %2942 = vst.msk [vmem:[%s357 + $0x90] sm:$0xff] %vm2315, %v2910
      %2943 = vst.msk [vmem:[%s357 + $0x98] sm:$0xff] %vm2315, %v2911
      %2944 = vst.msk [vmem:[%s357 + $0xa0] sm:$0xff] %vm2315, %v2912
      %2945 = vst.msk [vmem:[%s357 + $0xa8] sm:$0xff] %vm2315, %v2913
      %2946 = vst.msk [vmem:[%s357 + $0xb0] sm:$0xff] %vm2315, %v2914
      %2947 = vst.msk [vmem:[%s357 + $0xb8] sm:$0xff] %vm2315, %v2915
      %2948 = vst.msk [vmem:[%s357 + $0xc0] sm:$0xff] %vm2315, %v2916
      %2949 = vst.msk [vmem:[%s357 + $0xc8] sm:$0xff] %vm2315, %v2917
      %2950 = vst.msk [vmem:[%s357 + $0xd0] sm:$0xff] %vm2315, %v2918
      %2951 = vst.msk [vmem:[%s357 + $0xd8] sm:$0xff] %vm2315, %v2919
      %2952 = vst.msk [vmem:[%s357 + $0xe0] sm:$0xff] %vm2315, %v2920
      %2953 = vst.msk [vmem:[%s357 + $0xe8] sm:$0xff] %vm2315, %v2921
      %2954 = vst.msk [vmem:[%s357 + $0xf0] sm:$0xff] %vm2315, %v2922
      %2955 = vst.msk [vmem:[%s357 + $0xf8] sm:$0xff] %vm2315, %v2923
      %s2956 = smul.u32 32, %s24
      %p2957 = scmp.lt.s32.totalorder %s23, 1
      %s2958 = scalar_select %p2957, %s23, 1
      %p2959 = scmp.lt.s32.totalorder %s2956, 127
      %s2960 = scalar_select %p2959, %s2956, 127
      %s2961 = smul.addr %s2958, 128
      %s2962 = sadd.s32 %s2960, %s2961
      %s2963 = smul.addr %s2962, 8
      %s2964 = scalar_lea.vmem %s8, %s2963
      // Predicated region
      $region53: #{articulation_estimator.3} parent=51 // pred_check
        %p2965 = pneg %p231
      $region54: #{articulation_estimator.3} parent=51 // pred_check_branch
        %2967 = sbr.rel (%p2965) target = $region56
      $region55: #{articulation_estimator.3} parent=51 // pred_region
        %s2968 = smul.u32 32, %s24
      $region56: #{articulation_estimator.3} parent=51 // pred_fallthru
        _
    $region52: #{articulation_estimator.3} parent=5 // pred_fallthru
      _
    %p2969 = scmp.le.s32.totalorder 2, %s14
    // Predicated region
    $region57: #{articulation_estimator.3} parent=5 // pred_check
      %p2970 = pneg %p2969
    $region58: #{articulation_estimator.3} parent=5 // pred_check_branch
      %2972 = sbr.rel (%p2970) target = $region60
    $region59: #{articulation_estimator.3} parent=5 // pred_region
      %s2973 = ssub.s32 %s14, 2
      // Predicated region
      $region61: #{articulation_estimator.3} parent=59 // pred_check
        %p2974 = pneg %p237
      $region62: #{articulation_estimator.3} parent=59 // pred_check_branch
        %2976 = sbr.rel (%p2974) target = $region64
      $region63: #{articulation_estimator.3} parent=59 // pred_region
        %s2977 = smul.u32 32, %s26
        %p2978 = scmp.lt.s32.totalorder %s25, 1
        %s2979 = scalar_select %p2978, %s25, 1
        %p2980 = scmp.lt.s32.totalorder %s2977, 127
        %s2981 = scalar_select %p2980, %s2977, 127
        %s2982 = smul.addr %s2979, 128
        %s2983 = sadd.s32 %s2981, %s2982
        %s2984 = smul.addr %s2983, 8
        %s2985 = scalar_lea.vmem %s8, %s2984
      $region64: #{articulation_estimator.3} parent=59 // pred_fallthru
        _
    $region60: #{articulation_estimator.3} parent=5 // pred_fallthru
      _
  $region6: #{articulation_estimator.3} parent=0 // loop_footer
    %s18 = sadd.s32 1, %s14
  $region7: #{articulation_estimator.3} parent=0 // loop_footer_branch
    %13 = sbr.rel target = $region3
  $region8: #{articulation_estimator.3} parent=0 // loop_exit
    _

</llo_original>
